<compile_context>
chip_gen: v6e
topology: v6e:2x2x1
jax: 0.10.0
libtpu: 0.0.40
codegen_flags: <defaults>
</compile_context>

<pallas_src>
import math
import jax
import jax.numpy as jnp
from jax.experimental import pallas as pl
from jax.experimental.pallas import tpu as pltpu

# --- hyperparameters (the globals the PyTorch module refers to) -------------
d_model = 32
d_k = 8
d_v = 8
n_heads = 4
d_ff = 64
n_layers = 2

_WEIGHT_ORDER = ("wqkv", "wo", "w1", "w2", "vec")


# ---------------------------------------------------------------------------
# Pallas kernel
# ---------------------------------------------------------------------------
def _layer_norm(x, gamma, beta, eps=1e-5):
    mean = jnp.mean(x, axis=-1, keepdims=True)
    var = jnp.mean((x - mean) ** 2, axis=-1, keepdims=True)
    return (x - mean) * jax.lax.rsqrt(var + eps) * gamma + beta


def make_encoder_kernel(bb, S, D, L, H, dk, dv, dff, return_attn):
    """Fused pos-add + all encoder layers for a block of `bb` batch elements.

    The activation lives as a single [bb*S, D] slab; only the attention
    score/context matmuls use a [bb*H, S, d] head-batched view, built from
    static lane slices + a leading-axis stack (cheap, lowering-safe)."""
    HDK = H * dk
    HDV = H * dv
    N = bb * S

    def kernel(x_ref, pe_ref, wqkv_ref, wo_ref, w1_ref, w2_ref, vec_ref, *out_refs):
        out_ref = out_refs[0]
        attn_ref = out_refs[1] if return_attn else None

        # position-wise slab: [bb*S, D]  (pe is pre-tiled to [bb*S, D] host-side)
        x = x_ref[...].astype(jnp.float32) + pe_ref[...]

        def heads(qkv, base, dh):
            # [bb*S, ...] lane range [base, base+H*dh) -> [bb*H, S, dh]
            cols = [qkv[:, base + h * dh: base + (h + 1) * dh].reshape(bb, S, dh)
                    for h in range(H)]
            return jnp.stack(cols, axis=1).reshape(bb * H, S, dh)

        for l in range(L):                                  # static unroll (L=2)
            vec = vec_ref[l]                                # [8, 128] packed vectors
            bqkv = vec[0:1, :3 * HDK]                       # (1/sqrt(dk) folded in Q part)
            bo = vec[1:2, :D]
            g1, be1 = vec[2:3, :D], vec[3:4, :D]
            b1 = vec[4:5, :dff]
            b2 = vec[5:6, :D]
            g2, be2 = vec[6:7, :D], vec[7:8, :D]

            # ---- fused QKV projection on the slab (bf16 MXU inputs, f32 accum) ----
            qkv = jnp.dot(x.astype(jnp.bfloat16), wqkv_ref[l],
                          preferred_element_type=jnp.float32) + bqkv      # [N, 3*HDK]
            q = heads(qkv, 0, dk)                                         # [bb*H, S, dk]
            k = heads(qkv, HDK, dk)
            v = heads(qkv, 2 * HDK, dv)

            # ---- scaled dot-product attention, batched over (batch, head) ----
            s = jnp.einsum('bqd,bkd->bqk',
                           q.astype(jnp.bfloat16), k.astype(jnp.bfloat16),
                           preferred_element_type=jnp.float32)            # [bb*H, S, S]
            s = s - jnp.max(s, axis=-1, keepdims=True)
            e = jnp.exp(s)
            attn = e / jnp.sum(e, axis=-1, keepdims=True)                 # exact softmax
            if return_attn:
                attn_ref[:, l] = attn.reshape(bb, H, S, S).astype(attn_ref.dtype)

            ctx = jnp.einsum('bqk,bkd->bqd',
                             attn.astype(jnp.bfloat16), v.astype(jnp.bfloat16),
                             preferred_element_type=jnp.float32)          # [bb*H, S, dv]
            # merge heads back to the slab layout: [bb*S, H*dv]
            ctx = ctx.reshape(bb, H, S, dv)
            ctx = jnp.concatenate([ctx[:, h] for h in range(H)], axis=-1)
            ctx = ctx.reshape(N, HDV)

            # single contraction-32 output projection (original, unsplit W_O)
            attn_out = jnp.dot(ctx.astype(jnp.bfloat16), wo_ref[l],
                               preferred_element_type=jnp.float32) + bo   # [N, D]
            y = _layer_norm(attn_out + x, g1, be1)

            # ---- position-wise FFN (Conv1d kernel_size=1 == channel matmul) ----
            h1 = jnp.maximum(
                jnp.dot(y.astype(jnp.bfloat16), w1_ref[l],
                        preferred_element_type=jnp.float32) + b1, 0.0)    # [N, d_ff]
            h2 = jnp.dot(h1.astype(jnp.bfloat16), w2_ref[l],
                         preferred_element_type=jnp.float32) + b2
            x = _layer_norm(h2 + y, g2, be2)

        out_ref[...] = x.astype(out_ref.dtype)

    return kernel


# ---------------------------------------------------------------------------
# Wrapper
# ---------------------------------------------------------------------------
def _pick_batch_block(B, S, D, L, H, return_attn):
    """One grid step per TensorCore, shrunk if the activation blocks would
    overflow a conservative VMEM budget (v7x has only 64 MiB per core)."""
    try:
        kind = jax.devices()[0].device_kind.lower()
    except Exception:
        kind = ""
    n_cores = 2 if ("v7" in kind or "tpu7" in kind) else 1
    divisors = [d for d in range(1, B + 1) if B % d == 0]
    if n_cores > 1 and B > 1:
        target = -(-B // n_cores)                       # ceil(B / n_cores)
        bb = max(d for d in divisors if d <= target)
    else:
        bb = B                                          # single fused grid step

    def block_bytes(b):
        byts = 2 * 2 * b * S * D * 4                    # x in + enc out, double-buffered
        if return_attn:
            byts += 2 * b * L * H * S * S * 4           # attn block (counted at 4 B/elt)
        return byts

    budget = 40 << 20                                   # headroom inside v7x's 64 MiB
    while bb > 1 and block_bytes(bb) > budget:
        bb = max(d for d in divisors if d < bb)
    return bb


def encoder_forward(x, pe, packed, *, batch_block=None, return_attn=False,
                    attn_dtype=jnp.bfloat16):
    B, S, D = x.shape
    L = packed["wqkv"].shape[0]
    H = n_heads
    bb = batch_block if batch_block is not None else _pick_batch_block(
        B, S, D, L, H, return_attn)
    assert B % bb == 0, "batch_block must divide the batch size"
    N = bb * S

    weights = [packed[name] for name in _WEIGHT_ORDER]

    def wspec(w):
        # Full-array block, constant index map -> DMA'd once and held resident in VMEM.
        return pl.BlockSpec(w.shape, lambda g: (0,) * w.ndim)

    # slab I/O: (B, S, D) and (B*S, D) are the same row-major HBM bytes
    x_slab = x.reshape(B * S, D)
    pe_slab = jnp.tile(pe, (bb, 1)) if bb > 1 else pe   # [bb*S, D]

    slab_spec = pl.BlockSpec((N, D), lambda g: (g, 0))
    pe_spec = pl.BlockSpec((N, D), lambda g: (0, 0))

    if return_attn:
        out_shape = (jax.ShapeDtypeStruct((B * S, D), x.dtype),
                     jax.ShapeDtypeStruct((B, L, H, S, S), attn_dtype))
        out_specs = (slab_spec,
                     pl.BlockSpec((bb, L, H, S, S), lambda g: (g, 0, 0, 0, 0)))
    else:
        out_shape = jax.ShapeDtypeStruct((B * S, D), x.dtype)
        out_specs = slab_spec

    # explicit VMEM budget: double-buffered activation blocks + resident weights + margin
    w_bytes = sum(int(w.size) * w.dtype.itemsize for w in weights)
    blk_bytes = 2 * 2 * N * D * 4
    if return_attn:
        blk_bytes += 2 * bb * L * H * S * S * 4
    vmem_limit = int(min(max(4 * (blk_bytes + 2 * w_bytes + N * D * 4), 8 << 20), 48 << 20))

    result = pl.pallas_call(
        make_encoder_kernel(bb, S, D, L, H, d_k, d_v, d_ff, return_attn),
        out_shape=out_shape,
        grid=(B // bb,),
        in_specs=[slab_spec, pe_spec] + [wspec(w) for w in weights],
        out_specs=out_specs,
        compiler_params=pltpu.CompilerParams(
            dimension_semantics=("parallel",),
            vmem_limit_bytes=vmem_limit),
    )(x_slab, pe_slab, *weights)

    if return_attn:
        enc_out, attn_all = result
        enc_out = enc_out.reshape(B, S, D)
        return enc_out, [attn_all[:, l].astype(jnp.float32) for l in range(L)]
    return result.reshape(B, S, D), []


# ---------------------------------------------------------------------------
# Deterministic parameter / positional-encoding setup (plain JAX glue)
# ---------------------------------------------------------------------------
def make_pe(seq_len, d):
    position = jnp.arange(seq_len, dtype=jnp.float32)[:, None]
    div_term = jnp.exp(jnp.arange(0, d, 2, dtype=jnp.float32)
                       * (-math.log(10000.0) / d))
    pe = jnp.zeros((seq_len, d), jnp.float32)
    pe = pe.at[:, 0::2].set(jnp.sin(position * div_term))
    pe = pe.at[:, 1::2].set(jnp.cos(position * div_term))
    return pe


def init_layer_params(key):
    ks = jax.random.split(key, 12)

    def u(k, shape, fan_in):
        s = 1.0 / math.sqrt(fan_in)
        return jax.random.uniform(k, shape, jnp.float32, -s, s)

    return {
        # attention projections (stored as [in, out] so y = x @ W + b)
        "wq": u(ks[0], (d_model, n_heads * d_k), d_model),
        "bq": u(ks[1], (1, n_heads * d_k), d_model),
        "wk": u(ks[2], (d_model, n_heads * d_k), d_model),
        "bk": u(ks[3], (1, n_heads * d_k), d_model),
        "wv": u(ks[4], (d_model, n_heads * d_v), d_model),
        "bv": u(ks[5], (1, n_heads * d_v), d_model),
        "wo": u(ks[6], (n_heads * d_v, d_model), n_heads * d_v),
        "bo": u(ks[7], (1, d_model), n_heads * d_v),
        "g1": jnp.ones((1, d_model), jnp.float32),
        "be1": jnp.zeros((1, d_model), jnp.float32),
        # FFN (Conv1d kernel_size=1)
        "w1": u(ks[8], (d_model, d_ff), d_model),
        "b1": u(ks[9], (1, d_ff), d_model),
        "w2": u(ks[10], (d_ff, d_model), d_ff),
        "b2": u(ks[11], (1, d_model), d_ff),
        "g2": jnp.ones((1, d_model), jnp.float32),
        "be2": jnp.zeros((1, d_model), jnp.float32),
    }


def stack_layer_params(layer_params):
    """Host-side repack:
       - fused QKV weight [D, 3*H*d_k] with 1/sqrt(d_k) folded into the Q columns/bias,
       - bf16 MXU weights,
       - all per-layer bias / LayerNorm vectors packed into one lane-aligned [8,128] slab,
       - all layers stacked along a leading n_layers axis."""
    scale = 1.0 / math.sqrt(d_k)
    HDK = n_heads * d_k
    wqkv_l, wo_l, w1_l, w2_l, vec_l = [], [], [], [], []
    for p in layer_params:
        wqkv = jnp.concatenate([p["wq"] * scale, p["wk"], p["wv"]], axis=1)   # [D, 3*HDK]
        bqkv = jnp.concatenate([p["bq"][0] * scale, p["bk"][0], p["bv"][0]])  # [3*HDK]
        vec = jnp.zeros((8, 128), jnp.float32)
        vec = vec.at[0, :3 * HDK].set(bqkv)
        vec = vec.at[1, :d_model].set(p["bo"][0])
        vec = vec.at[2, :d_model].set(p["g1"][0])
        vec = vec.at[3, :d_model].set(p["be1"][0])
        vec = vec.at[4, :d_ff].set(p["b1"][0])
        vec = vec.at[5, :d_model].set(p["b2"][0])
        vec = vec.at[6, :d_model].set(p["g2"][0])
        vec = vec.at[7, :d_model].set(p["be2"][0])
        wqkv_l.append(wqkv.astype(jnp.bfloat16))
        wo_l.append(p["wo"].astype(jnp.bfloat16))
        w1_l.append(p["w1"].astype(jnp.bfloat16))
        w2_l.append(p["w2"].astype(jnp.bfloat16))
        vec_l.append(vec)
    return {
        "wqkv": jnp.stack(wqkv_l),
        "wo": jnp.stack(wo_l),
        "w1": jnp.stack(w1_l),
        "w2": jnp.stack(w2_l),
        "vec": jnp.stack(vec_l),
    }


# Pure-JAX reference for correctness checking (f32, uses the original unpacked params)
def reference_forward(x, pe, layer_params):
    x = x + pe[None]
    attns = []
    B, S, D = x.shape
    for p in layer_params:
        q = (x @ p["wq"] + p["bq"][0]).reshape(B, S, n_heads, d_k).transpose(0, 2, 1, 3)
        k = (x @ p["wk"] + p["bk"][0]).reshape(B, S, n_heads, d_k).transpose(0, 2, 1, 3)
        v = (x @ p["wv"] + p["bv"][0]).reshape(B, S, n_heads, d_v).transpose(0, 2, 1, 3)
        scores = jnp.einsum("bhqd,bhkd->bhqk", q, k) / math.sqrt(d_k)
        attn = jax.nn.softmax(scores, axis=-1)
        ctx = jnp.einsum("bhqk,bhkd->bhqd", attn, v)
        ctx = ctx.transpose(0, 2, 1, 3).reshape(B, S, n_heads * d_v)
        out = ctx @ p["wo"] + p["bo"][0]
        y = _layer_norm(out + x, p["g1"][0], p["be1"][0])
        h1 = jax.nn.relu(y @ p["w1"] + p["b1"][0])
        h2 = h1 @ p["w2"] + p["b2"][0]
        x = _layer_norm(h2 + y, p["g2"][0], p["be2"][0])
        attns.append(attn)
    return x, attns


if __name__ == "__main__":
    batch, seq = 2, 8
    key = jax.random.PRNGKey(0)
    k_x, *k_layers = jax.random.split(key, 1 + n_layers)

    x = jax.random.normal(k_x, (batch, seq, d_model), jnp.float32)
    pe = make_pe(seq, d_model)
    layer_params = [init_layer_params(k) for k in k_layers]
    stacked = stack_layer_params(layer_params)

    ref_out, ref_attns = reference_forward(x, pe, layer_params)

    # Tolerances are loosened (vs 1e-4) only because the kernel feeds the MXU bf16
    # inputs (per the perf review) and emits bf16 attention weights; any structural /
    # layout bug would produce O(0.1+) errors and still be caught.
    for bb in (None, 1, batch):   # auto policy, per-batch grid, collapsed single step
        enc_out, enc_attns = encoder_forward(x, pe, stacked,
                                             batch_block=bb, return_attn=True)
        enc_out = jax.block_until_ready(enc_out)
        assert jnp.allclose(enc_out, ref_out, atol=5e-2, rtol=5e-2)
        for a, r in zip(enc_attns, ref_attns):
            assert jnp.allclose(a, r, atol=1e-2, rtol=1e-2)

    # Default path: attention-weights output elided entirely (no O(S^2) writeback).
    enc_only, _ = encoder_forward(x, pe, stacked, return_attn=False)
    enc_only = jax.block_until_ready(enc_only)
    assert jnp.allclose(enc_only, ref_out, atol=5e-2, rtol=5e-2)

    print("KERNEL_OK")
</pallas_src>

<mosaic_0001>
module attributes {stable_mosaic.version = 11 : i64} {
  func.func @kernel(%arg0: i32, %arg1: memref<16x32xf32, #tpu.memory_space<vmem>>, %arg2: memref<16x32xf32, #tpu.memory_space<vmem>>, %arg3: memref<2x32x96xbf16, #tpu.memory_space<vmem>>, %arg4: memref<2x32x32xbf16, #tpu.memory_space<vmem>>, %arg5: memref<2x32x64xbf16, #tpu.memory_space<vmem>>, %arg6: memref<2x64x32xbf16, #tpu.memory_space<vmem>>, %arg7: memref<2x8x128xf32, #tpu.memory_space<vmem>>, %arg8: memref<16x32xf32, #tpu.memory_space<vmem>>, %arg9: memref<2x2x4x8x8xbf16, #tpu.memory_space<vmem>>) attributes {dimension_semantics = [#tpu.dimension_semantics<parallel>], iteration_bounds = array<i64: 1>, scalar_prefetch = 0 : i64, scratch_operands = 0 : i64, tpu.core_type = #tpu.core_type<tc>, window_params = [{transform_indices = @transform_0, window_bounds = array<i64: 16, 32>}, {pipeline_mode = #tpu.pipeline_mode<synchronous>, transform_indices = @transform_1, window_bounds = array<i64: 16, 32>}, {pipeline_mode = #tpu.pipeline_mode<synchronous>, transform_indices = @transform_2, window_bounds = array<i64: 2, 32, 96>}, {pipeline_mode = #tpu.pipeline_mode<synchronous>, transform_indices = @transform_3, window_bounds = array<i64: 2, 32, 32>}, {pipeline_mode = #tpu.pipeline_mode<synchronous>, transform_indices = @transform_4, window_bounds = array<i64: 2, 32, 64>}, {pipeline_mode = #tpu.pipeline_mode<synchronous>, transform_indices = @transform_5, window_bounds = array<i64: 2, 64, 32>}, {pipeline_mode = #tpu.pipeline_mode<synchronous>, transform_indices = @transform_6, window_bounds = array<i64: 2, 8, 128>}, {transform_indices = @transform_7, window_bounds = array<i64: 16, 32>}, {transform_indices = @transform_8, window_bounds = array<i64: 2, 2, 4, 8, 8>}]} {
    %c0 = arith.constant 0 : index
    %c0_0 = arith.constant 0 : index
    %0 = vector.load %arg1[%c0, %c0_0] : memref<16x32xf32, #tpu.memory_space<vmem>>, vector<16x32xf32>
    %c0_1 = arith.constant 0 : index
    %c0_2 = arith.constant 0 : index
    %1 = vector.load %arg2[%c0_1, %c0_2] : memref<16x32xf32, #tpu.memory_space<vmem>>, vector<16x32xf32>
    %2 = arith.addf %0, %1 : vector<16x32xf32>
    %c0_3 = arith.constant 0 : index
    %c0_4 = arith.constant 0 : index
    %c0_5 = arith.constant 0 : index
    %3 = vector.load %arg7[%c0_3, %c0_4, %c0_5] : memref<2x8x128xf32, #tpu.memory_space<vmem>>, vector<1x8x128xf32>
    %4 = vector.shape_cast %3 : vector<1x8x128xf32> to vector<8x128xf32>
    %5 = vector.extract_strided_slice %4 {offsets = [0, 0], sizes = [1, 96], strides = [1, 1]} : vector<8x128xf32> to vector<1x96xf32>
    %6 = vector.extract_strided_slice %4 {offsets = [1, 0], sizes = [1, 32], strides = [1, 1]} : vector<8x128xf32> to vector<1x32xf32>
    %7 = vector.extract_strided_slice %4 {offsets = [2, 0], sizes = [1, 32], strides = [1, 1]} : vector<8x128xf32> to vector<1x32xf32>
    %8 = vector.extract_strided_slice %4 {offsets = [3, 0], sizes = [1, 32], strides = [1, 1]} : vector<8x128xf32> to vector<1x32xf32>
    %9 = vector.extract_strided_slice %4 {offsets = [4, 0], sizes = [1, 64], strides = [1, 1]} : vector<8x128xf32> to vector<1x64xf32>
    %10 = vector.extract_strided_slice %4 {offsets = [5, 0], sizes = [1, 32], strides = [1, 1]} : vector<8x128xf32> to vector<1x32xf32>
    %11 = vector.extract_strided_slice %4 {offsets = [6, 0], sizes = [1, 32], strides = [1, 1]} : vector<8x128xf32> to vector<1x32xf32>
    %12 = vector.extract_strided_slice %4 {offsets = [7, 0], sizes = [1, 32], strides = [1, 1]} : vector<8x128xf32> to vector<1x32xf32>
    %13 = arith.truncf %2 : vector<16x32xf32> to vector<16x32xbf16>
    %c0_6 = arith.constant 0 : index
    %c0_7 = arith.constant 0 : index
    %c0_8 = arith.constant 0 : index
    %14 = vector.load %arg3[%c0_6, %c0_7, %c0_8] : memref<2x32x96xbf16, #tpu.memory_space<vmem>>, vector<1x32x96xbf16>
    %15 = vector.shape_cast %14 : vector<1x32x96xbf16> to vector<32x96xbf16>
    %cst = arith.constant dense<0.000000e+00> : vector<16x96xf32>
    %16 = tpu.matmul %13, %15, %cst {dimension_numbers = #tpu.dot_dimension_numbers<[1], [0], [0], [1], [0, 0, 1, 1], [], []>} : vector<16x32xbf16>, vector<32x96xbf16>, vector<16x96xf32> -> vector<16x96xf32>
    %17 = vector.broadcast %5 : vector<1x96xf32> to vector<16x96xf32>
    %18 = arith.addf %16, %17 : vector<16x96xf32>
    %19 = vector.extract_strided_slice %18 {offsets = [0, 0], sizes = [16, 8], strides = [1, 1]} : vector<16x96xf32> to vector<16x8xf32>
    %20 = vector.shape_cast %19 : vector<16x8xf32> to vector<2x8x8xf32>
    %21 = vector.extract_strided_slice %18 {offsets = [0, 8], sizes = [16, 8], strides = [1, 1]} : vector<16x96xf32> to vector<16x8xf32>
    %22 = vector.shape_cast %21 : vector<16x8xf32> to vector<2x8x8xf32>
    %23 = vector.extract_strided_slice %18 {offsets = [0, 16], sizes = [16, 8], strides = [1, 1]} : vector<16x96xf32> to vector<16x8xf32>
    %24 = vector.shape_cast %23 : vector<16x8xf32> to vector<2x8x8xf32>
    %25 = vector.extract_strided_slice %18 {offsets = [0, 24], sizes = [16, 8], strides = [1, 1]} : vector<16x96xf32> to vector<16x8xf32>
    %26 = vector.shape_cast %25 : vector<16x8xf32> to vector<2x8x8xf32>
    %27 = vector.shape_cast %20 : vector<2x8x8xf32> to vector<2x1x8x8xf32>
    %28 = vector.shape_cast %22 : vector<2x8x8xf32> to vector<2x1x8x8xf32>
    %29 = vector.shape_cast %24 : vector<2x8x8xf32> to vector<2x1x8x8xf32>
    %30 = vector.shape_cast %26 : vector<2x8x8xf32> to vector<2x1x8x8xf32>
    %31 = tpu.concatenate %27, %28, %29, %30 in 1 : vector<2x1x8x8xf32>, vector<2x1x8x8xf32>, vector<2x1x8x8xf32>, vector<2x1x8x8xf32> -> vector<2x4x8x8xf32>
    %32 = vector.shape_cast %31 : vector<2x4x8x8xf32> to vector<8x8x8xf32>
    %33 = vector.extract_strided_slice %18 {offsets = [0, 32], sizes = [16, 8], strides = [1, 1]} : vector<16x96xf32> to vector<16x8xf32>
    %34 = vector.shape_cast %33 : vector<16x8xf32> to vector<2x8x8xf32>
    %35 = vector.extract_strided_slice %18 {offsets = [0, 40], sizes = [16, 8], strides = [1, 1]} : vector<16x96xf32> to vector<16x8xf32>
    %36 = vector.shape_cast %35 : vector<16x8xf32> to vector<2x8x8xf32>
    %37 = vector.extract_strided_slice %18 {offsets = [0, 48], sizes = [16, 8], strides = [1, 1]} : vector<16x96xf32> to vector<16x8xf32>
    %38 = vector.shape_cast %37 : vector<16x8xf32> to vector<2x8x8xf32>
    %39 = vector.extract_strided_slice %18 {offsets = [0, 56], sizes = [16, 8], strides = [1, 1]} : vector<16x96xf32> to vector<16x8xf32>
    %40 = vector.shape_cast %39 : vector<16x8xf32> to vector<2x8x8xf32>
    %41 = vector.shape_cast %34 : vector<2x8x8xf32> to vector<2x1x8x8xf32>
    %42 = vector.shape_cast %36 : vector<2x8x8xf32> to vector<2x1x8x8xf32>
    %43 = vector.shape_cast %38 : vector<2x8x8xf32> to vector<2x1x8x8xf32>
    %44 = vector.shape_cast %40 : vector<2x8x8xf32> to vector<2x1x8x8xf32>
    %45 = tpu.concatenate %41, %42, %43, %44 in 1 : vector<2x1x8x8xf32>, vector<2x1x8x8xf32>, vector<2x1x8x8xf32>, vector<2x1x8x8xf32> -> vector<2x4x8x8xf32>
    %46 = vector.shape_cast %45 : vector<2x4x8x8xf32> to vector<8x8x8xf32>
    %47 = vector.extract_strided_slice %18 {offsets = [0, 64], sizes = [16, 8], strides = [1, 1]} : vector<16x96xf32> to vector<16x8xf32>
    %48 = vector.shape_cast %47 : vector<16x8xf32> to vector<2x8x8xf32>
    %49 = vector.extract_strided_slice %18 {offsets = [0, 72], sizes = [16, 8], strides = [1, 1]} : vector<16x96xf32> to vector<16x8xf32>
    %50 = vector.shape_cast %49 : vector<16x8xf32> to vector<2x8x8xf32>
    %51 = vector.extract_strided_slice %18 {offsets = [0, 80], sizes = [16, 8], strides = [1, 1]} : vector<16x96xf32> to vector<16x8xf32>
    %52 = vector.shape_cast %51 : vector<16x8xf32> to vector<2x8x8xf32>
    %53 = vector.extract_strided_slice %18 {offsets = [0, 88], sizes = [16, 8], strides = [1, 1]} : vector<16x96xf32> to vector<16x8xf32>
    %54 = vector.shape_cast %53 : vector<16x8xf32> to vector<2x8x8xf32>
    %55 = vector.shape_cast %48 : vector<2x8x8xf32> to vector<2x1x8x8xf32>
    %56 = vector.shape_cast %50 : vector<2x8x8xf32> to vector<2x1x8x8xf32>
    %57 = vector.shape_cast %52 : vector<2x8x8xf32> to vector<2x1x8x8xf32>
    %58 = vector.shape_cast %54 : vector<2x8x8xf32> to vector<2x1x8x8xf32>
    %59 = tpu.concatenate %55, %56, %57, %58 in 1 : vector<2x1x8x8xf32>, vector<2x1x8x8xf32>, vector<2x1x8x8xf32>, vector<2x1x8x8xf32> -> vector<2x4x8x8xf32>
    %60 = vector.shape_cast %59 : vector<2x4x8x8xf32> to vector<8x8x8xf32>
    %61 = arith.truncf %32 : vector<8x8x8xf32> to vector<8x8x8xbf16>
    %62 = arith.truncf %46 : vector<8x8x8xf32> to vector<8x8x8xbf16>
    "tpu.trace_start"() <{level = 10 : i32, message = "bqd,bkd->bqk"}> : () -> ()
    %cst_9 = arith.constant dense<0.000000e+00> : vector<8x8x8xf32>
    %63 = tpu.matmul %61, %62, %cst_9 {dimension_numbers = #tpu.dot_dimension_numbers<[2], [2], [1], [1], [0, 0, 0, 1, 1, 1], [0], [0]>} : vector<8x8x8xbf16>, vector<8x8x8xbf16>, vector<8x8x8xf32> -> vector<8x8x8xf32>
    "tpu.trace_stop"() : () -> ()
    %cst_10 = arith.constant dense<0xFF800000> : vector<8x8xf32>
    %64 = vector.multi_reduction <maximumf>, %63, %cst_10 [2] : vector<8x8x8xf32> to vector<8x8xf32>
    %65 = vector.shape_cast %64 : vector<8x8xf32> to vector<8x8x1xf32>
    %66 = vector.broadcast %65 : vector<8x8x1xf32> to vector<8x8x8xf32>
    %67 = arith.subf %63, %66 : vector<8x8x8xf32>
    %68 = math.exp %67 : vector<8x8x8xf32>
    %cst_11 = arith.constant dense<0.000000e+00> : vector<8x8xf32>
    %69 = vector.multi_reduction <add>, %68, %cst_11 [2] : vector<8x8x8xf32> to vector<8x8xf32>
    %70 = vector.shape_cast %69 : vector<8x8xf32> to vector<8x8x1xf32>
    %71 = vector.broadcast %70 : vector<8x8x1xf32> to vector<8x8x8xf32>
    %72 = arith.divf %68, %71 : vector<8x8x8xf32>
    %73 = vector.shape_cast %72 : vector<8x8x8xf32> to vector<2x4x8x8xf32>
    %74 = arith.truncf %73 : vector<2x4x8x8xf32> to vector<2x4x8x8xbf16>
    %c0_12 = arith.constant 0 : index
    %c0_13 = arith.constant 0 : index
    %c0_14 = arith.constant 0 : index
    %c0_15 = arith.constant 0 : index
    %c0_16 = arith.constant 0 : index
    %75 = vector.load %arg9[%c0_12, %c0_13, %c0_14, %c0_15, %c0_16] : memref<2x2x4x8x8xbf16, #tpu.memory_space<vmem>>, vector<2x1x4x8x8xbf16>
    %76 = vector.shape_cast %75 : vector<2x1x4x8x8xbf16> to vector<2x4x8x8xbf16>
    %77 = vector.shape_cast %74 : vector<2x4x8x8xbf16> to vector<2x1x4x8x8xbf16>
    tpu.vector_store %arg9[%c0_12, %c0_13, %c0_14, %c0_15, %c0_16], %77 {strides = array<i32>} : memref<2x2x4x8x8xbf16, #tpu.memory_space<vmem>>, vector<2x1x4x8x8xbf16>,
    %78 = arith.truncf %72 : vector<8x8x8xf32> to vector<8x8x8xbf16>
    %79 = arith.truncf %60 : vector<8x8x8xf32> to vector<8x8x8xbf16>
    "tpu.trace_start"() <{level = 10 : i32, message = "bqk,bkd->bqd"}> : () -> ()
    %cst_17 = arith.constant dense<0.000000e+00> : vector<8x8x8xf32>
    %80 = tpu.matmul %78, %79, %cst_17 {dimension_numbers = #tpu.dot_dimension_numbers<[2], [1], [1], [2], [0, 0, 0, 1, 1, 2], [0], [0]>} : vector<8x8x8xbf16>, vector<8x8x8xbf16>, vector<8x8x8xf32> -> vector<8x8x8xf32>
    "tpu.trace_stop"() : () -> ()
    %81 = vector.shape_cast %80 : vector<8x8x8xf32> to vector<2x4x8x8xf32>
    %82 = vector.extract_strided_slice %81 {offsets = [0, 0, 0, 0], sizes = [2, 1, 8, 8], strides = [1, 1, 1, 1]} : vector<2x4x8x8xf32> to vector<2x1x8x8xf32>
    %83 = vector.shape_cast %82 : vector<2x1x8x8xf32> to vector<2x8x8xf32>
    %84 = vector.extract_strided_slice %81 {offsets = [0, 1, 0, 0], sizes = [2, 1, 8, 8], strides = [1, 1, 1, 1]} : vector<2x4x8x8xf32> to vector<2x1x8x8xf32>
    %85 = vector.shape_cast %84 : vector<2x1x8x8xf32> to vector<2x8x8xf32>
    %86 = vector.extract_strided_slice %81 {offsets = [0, 2, 0, 0], sizes = [2, 1, 8, 8], strides = [1, 1, 1, 1]} : vector<2x4x8x8xf32> to vector<2x1x8x8xf32>
    %87 = vector.shape_cast %86 : vector<2x1x8x8xf32> to vector<2x8x8xf32>
    %88 = vector.extract_strided_slice %81 {offsets = [0, 3, 0, 0], sizes = [2, 1, 8, 8], strides = [1, 1, 1, 1]} : vector<2x4x8x8xf32> to vector<2x1x8x8xf32>
    %89 = vector.shape_cast %88 : vector<2x1x8x8xf32> to vector<2x8x8xf32>
    %90 = tpu.concatenate %83, %85, %87, %89 in 2 : vector<2x8x8xf32>, vector<2x8x8xf32>, vector<2x8x8xf32>, vector<2x8x8xf32> -> vector<2x8x32xf32>
    %91 = vector.shape_cast %90 : vector<2x8x32xf32> to vector<16x32xf32>
    %92 = arith.truncf %91 : vector<16x32xf32> to vector<16x32xbf16>
    %c0_18 = arith.constant 0 : index
    %c0_19 = arith.constant 0 : index
    %c0_20 = arith.constant 0 : index
    %93 = vector.load %arg4[%c0_18, %c0_19, %c0_20] : memref<2x32x32xbf16, #tpu.memory_space<vmem>>, vector<1x32x32xbf16>
    %94 = vector.shape_cast %93 : vector<1x32x32xbf16> to vector<32x32xbf16>
    %cst_21 = arith.constant dense<0.000000e+00> : vector<16x32xf32>
    %95 = tpu.matmul %92, %94, %cst_21 {dimension_numbers = #tpu.dot_dimension_numbers<[1], [0], [0], [1], [0, 0, 1, 1], [], []>} : vector<16x32xbf16>, vector<32x32xbf16>, vector<16x32xf32> -> vector<16x32xf32>
    %96 = vector.broadcast %6 : vector<1x32xf32> to vector<16x32xf32>
    %97 = arith.addf %95, %96 : vector<16x32xf32>
    %98 = arith.addf %97, %2 : vector<16x32xf32>
    %cst_22 = arith.constant dense<0.000000e+00> : vector<16xf32>
    %99 = vector.multi_reduction <add>, %98, %cst_22 [1] : vector<16x32xf32> to vector<16xf32>
    %100 = vector.shape_cast %99 : vector<16xf32> to vector<16x1xf32>
    %cst_23 = arith.constant 3.200000e+01 : f32
    %101 = vector.broadcast %cst_23 : f32 to vector<16x1xf32>
    %102 = arith.divf %100, %101 : vector<16x1xf32>
    %103 = vector.broadcast %102 : vector<16x1xf32> to vector<16x32xf32>
    %104 = arith.subf %98, %103 : vector<16x32xf32>
    %105 = arith.mulf %104, %104 : vector<16x32xf32>
    %cst_24 = arith.constant dense<0.000000e+00> : vector<16xf32>
    %106 = vector.multi_reduction <add>, %105, %cst_24 [1] : vector<16x32xf32> to vector<16xf32>
    %107 = vector.shape_cast %106 : vector<16xf32> to vector<16x1xf32>
    %cst_25 = arith.constant 3.200000e+01 : f32
    %108 = vector.broadcast %cst_25 : f32 to vector<16x1xf32>
    %109 = arith.divf %107, %108 : vector<16x1xf32>
    %110 = vector.broadcast %102 : vector<16x1xf32> to vector<16x32xf32>
    %111 = arith.subf %98, %110 : vector<16x32xf32>
    %cst_26 = arith.constant 9.99999974E-6 : f32
    %112 = vector.broadcast %cst_26 : f32 to vector<16x1xf32>
    %113 = arith.addf %109, %112 : vector<16x1xf32>
    %114 = math.rsqrt %113 : vector<16x1xf32>
    %115 = vector.broadcast %114 : vector<16x1xf32> to vector<16x32xf32>
    %116 = arith.mulf %111, %115 : vector<16x32xf32>
    %117 = vector.broadcast %7 : vector<1x32xf32> to vector<16x32xf32>
    %118 = arith.mulf %116, %117 : vector<16x32xf32>
    %119 = vector.broadcast %8 : vector<1x32xf32> to vector<16x32xf32>
    %120 = arith.addf %118, %119 : vector<16x32xf32>
    %121 = arith.truncf %120 : vector<16x32xf32> to vector<16x32xbf16>
    %c0_27 = arith.constant 0 : index
    %c0_28 = arith.constant 0 : index
    %c0_29 = arith.constant 0 : index
    %122 = vector.load %arg5[%c0_27, %c0_28, %c0_29] : memref<2x32x64xbf16, #tpu.memory_space<vmem>>, vector<1x32x64xbf16>
    %123 = vector.shape_cast %122 : vector<1x32x64xbf16> to vector<32x64xbf16>
    %cst_30 = arith.constant dense<0.000000e+00> : vector<16x64xf32>
    %124 = tpu.matmul %121, %123, %cst_30 {dimension_numbers = #tpu.dot_dimension_numbers<[1], [0], [0], [1], [0, 0, 1, 1], [], []>} : vector<16x32xbf16>, vector<32x64xbf16>, vector<16x64xf32> -> vector<16x64xf32>
    %125 = vector.broadcast %9 : vector<1x64xf32> to vector<16x64xf32>
    %126 = arith.addf %124, %125 : vector<16x64xf32>
    %cst_31 = arith.constant 0.000000e+00 : f32
    %127 = vector.broadcast %cst_31 : f32 to vector<16x64xf32>
    %128 = arith.maximumf %126, %127 : vector<16x64xf32>
    %129 = arith.truncf %128 : vector<16x64xf32> to vector<16x64xbf16>
    %c0_32 = arith.constant 0 : index
    %c0_33 = arith.constant 0 : index
    %c0_34 = arith.constant 0 : index
    %130 = vector.load %arg6[%c0_32, %c0_33, %c0_34] : memref<2x64x32xbf16, #tpu.memory_space<vmem>>, vector<1x64x32xbf16>
    %131 = vector.shape_cast %130 : vector<1x64x32xbf16> to vector<64x32xbf16>
    %cst_35 = arith.constant dense<0.000000e+00> : vector<16x32xf32>
    %132 = tpu.matmul %129, %131, %cst_35 {dimension_numbers = #tpu.dot_dimension_numbers<[1], [0], [0], [1], [0, 0, 1, 1], [], []>} : vector<16x64xbf16>, vector<64x32xbf16>, vector<16x32xf32> -> vector<16x32xf32>
    %133 = vector.broadcast %10 : vector<1x32xf32> to vector<16x32xf32>
    %134 = arith.addf %132, %133 : vector<16x32xf32>
    %135 = arith.addf %134, %120 : vector<16x32xf32>
    %cst_36 = arith.constant dense<0.000000e+00> : vector<16xf32>
    %136 = vector.multi_reduction <add>, %135, %cst_36 [1] : vector<16x32xf32> to vector<16xf32>
    %137 = vector.shape_cast %136 : vector<16xf32> to vector<16x1xf32>
    %cst_37 = arith.constant 3.200000e+01 : f32
    %138 = vector.broadcast %cst_37 : f32 to vector<16x1xf32>
    %139 = arith.divf %137, %138 : vector<16x1xf32>
    %140 = vector.broadcast %139 : vector<16x1xf32> to vector<16x32xf32>
    %141 = arith.subf %135, %140 : vector<16x32xf32>
    %142 = arith.mulf %141, %141 : vector<16x32xf32>
    %cst_38 = arith.constant dense<0.000000e+00> : vector<16xf32>
    %143 = vector.multi_reduction <add>, %142, %cst_38 [1] : vector<16x32xf32> to vector<16xf32>
    %144 = vector.shape_cast %143 : vector<16xf32> to vector<16x1xf32>
    %cst_39 = arith.constant 3.200000e+01 : f32
    %145 = vector.broadcast %cst_39 : f32 to vector<16x1xf32>
    %146 = arith.divf %144, %145 : vector<16x1xf32>
    %147 = vector.broadcast %139 : vector<16x1xf32> to vector<16x32xf32>
    %148 = arith.subf %135, %147 : vector<16x32xf32>
    %cst_40 = arith.constant 9.99999974E-6 : f32
    %149 = vector.broadcast %cst_40 : f32 to vector<16x1xf32>
    %150 = arith.addf %146, %149 : vector<16x1xf32>
    %151 = math.rsqrt %150 : vector<16x1xf32>
    %152 = vector.broadcast %151 : vector<16x1xf32> to vector<16x32xf32>
    %153 = arith.mulf %148, %152 : vector<16x32xf32>
    %154 = vector.broadcast %11 : vector<1x32xf32> to vector<16x32xf32>
    %155 = arith.mulf %153, %154 : vector<16x32xf32>
    %156 = vector.broadcast %12 : vector<1x32xf32> to vector<16x32xf32>
    %157 = arith.addf %155, %156 : vector<16x32xf32>
    %c1 = arith.constant 1 : index
    %c0_41 = arith.constant 0 : index
    %c0_42 = arith.constant 0 : index
    %158 = vector.load %arg7[%c1, %c0_41, %c0_42] : memref<2x8x128xf32, #tpu.memory_space<vmem>>, vector<1x8x128xf32>
    %159 = vector.shape_cast %158 : vector<1x8x128xf32> to vector<8x128xf32>
    %160 = vector.extract_strided_slice %159 {offsets = [0, 0], sizes = [1, 96], strides = [1, 1]} : vector<8x128xf32> to vector<1x96xf32>
    %161 = vector.extract_strided_slice %159 {offsets = [1, 0], sizes = [1, 32], strides = [1, 1]} : vector<8x128xf32> to vector<1x32xf32>
    %162 = vector.extract_strided_slice %159 {offsets = [2, 0], sizes = [1, 32], strides = [1, 1]} : vector<8x128xf32> to vector<1x32xf32>
    %163 = vector.extract_strided_slice %159 {offsets = [3, 0], sizes = [1, 32], strides = [1, 1]} : vector<8x128xf32> to vector<1x32xf32>
    %164 = vector.extract_strided_slice %159 {offsets = [4, 0], sizes = [1, 64], strides = [1, 1]} : vector<8x128xf32> to vector<1x64xf32>
    %165 = vector.extract_strided_slice %159 {offsets = [5, 0], sizes = [1, 32], strides = [1, 1]} : vector<8x128xf32> to vector<1x32xf32>
    %166 = vector.extract_strided_slice %159 {offsets = [6, 0], sizes = [1, 32], strides = [1, 1]} : vector<8x128xf32> to vector<1x32xf32>
    %167 = vector.extract_strided_slice %159 {offsets = [7, 0], sizes = [1, 32], strides = [1, 1]} : vector<8x128xf32> to vector<1x32xf32>
    %168 = arith.truncf %157 : vector<16x32xf32> to vector<16x32xbf16>
    %c1_43 = arith.constant 1 : index
    %c0_44 = arith.constant 0 : index
    %c0_45 = arith.constant 0 : index
    %169 = vector.load %arg3[%c1_43, %c0_44, %c0_45] : memref<2x32x96xbf16, #tpu.memory_space<vmem>>, vector<1x32x96xbf16>
    %170 = vector.shape_cast %169 : vector<1x32x96xbf16> to vector<32x96xbf16>
    %cst_46 = arith.constant dense<0.000000e+00> : vector<16x96xf32>
    %171 = tpu.matmul %168, %170, %cst_46 {dimension_numbers = #tpu.dot_dimension_numbers<[1], [0], [0], [1], [0, 0, 1, 1], [], []>} : vector<16x32xbf16>, vector<32x96xbf16>, vector<16x96xf32> -> vector<16x96xf32>
    %172 = vector.broadcast %160 : vector<1x96xf32> to vector<16x96xf32>
    %173 = arith.addf %171, %172 : vector<16x96xf32>
    %174 = vector.extract_strided_slice %173 {offsets = [0, 0], sizes = [16, 8], strides = [1, 1]} : vector<16x96xf32> to vector<16x8xf32>
    %175 = vector.shape_cast %174 : vector<16x8xf32> to vector<2x8x8xf32>
    %176 = vector.extract_strided_slice %173 {offsets = [0, 8], sizes = [16, 8], strides = [1, 1]} : vector<16x96xf32> to vector<16x8xf32>
    %177 = vector.shape_cast %176 : vector<16x8xf32> to vector<2x8x8xf32>
    %178 = vector.extract_strided_slice %173 {offsets = [0, 16], sizes = [16, 8], strides = [1, 1]} : vector<16x96xf32> to vector<16x8xf32>
    %179 = vector.shape_cast %178 : vector<16x8xf32> to vector<2x8x8xf32>
    %180 = vector.extract_strided_slice %173 {offsets = [0, 24], sizes = [16, 8], strides = [1, 1]} : vector<16x96xf32> to vector<16x8xf32>
    %181 = vector.shape_cast %180 : vector<16x8xf32> to vector<2x8x8xf32>
    %182 = vector.shape_cast %175 : vector<2x8x8xf32> to vector<2x1x8x8xf32>
    %183 = vector.shape_cast %177 : vector<2x8x8xf32> to vector<2x1x8x8xf32>
    %184 = vector.shape_cast %179 : vector<2x8x8xf32> to vector<2x1x8x8xf32>
    %185 = vector.shape_cast %181 : vector<2x8x8xf32> to vector<2x1x8x8xf32>
    %186 = tpu.concatenate %182, %183, %184, %185 in 1 : vector<2x1x8x8xf32>, vector<2x1x8x8xf32>, vector<2x1x8x8xf32>, vector<2x1x8x8xf32> -> vector<2x4x8x8xf32>
    %187 = vector.shape_cast %186 : vector<2x4x8x8xf32> to vector<8x8x8xf32>
    %188 = vector.extract_strided_slice %173 {offsets = [0, 32], sizes = [16, 8], strides = [1, 1]} : vector<16x96xf32> to vector<16x8xf32>
    %189 = vector.shape_cast %188 : vector<16x8xf32> to vector<2x8x8xf32>
    %190 = vector.extract_strided_slice %173 {offsets = [0, 40], sizes = [16, 8], strides = [1, 1]} : vector<16x96xf32> to vector<16x8xf32>
    %191 = vector.shape_cast %190 : vector<16x8xf32> to vector<2x8x8xf32>
    %192 = vector.extract_strided_slice %173 {offsets = [0, 48], sizes = [16, 8], strides = [1, 1]} : vector<16x96xf32> to vector<16x8xf32>
    %193 = vector.shape_cast %192 : vector<16x8xf32> to vector<2x8x8xf32>
    %194 = vector.extract_strided_slice %173 {offsets = [0, 56], sizes = [16, 8], strides = [1, 1]} : vector<16x96xf32> to vector<16x8xf32>
    %195 = vector.shape_cast %194 : vector<16x8xf32> to vector<2x8x8xf32>
    %196 = vector.shape_cast %189 : vector<2x8x8xf32> to vector<2x1x8x8xf32>
    %197 = vector.shape_cast %191 : vector<2x8x8xf32> to vector<2x1x8x8xf32>
    %198 = vector.shape_cast %193 : vector<2x8x8xf32> to vector<2x1x8x8xf32>
    %199 = vector.shape_cast %195 : vector<2x8x8xf32> to vector<2x1x8x8xf32>
    %200 = tpu.concatenate %196, %197, %198, %199 in 1 : vector<2x1x8x8xf32>, vector<2x1x8x8xf32>, vector<2x1x8x8xf32>, vector<2x1x8x8xf32> -> vector<2x4x8x8xf32>
    %201 = vector.shape_cast %200 : vector<2x4x8x8xf32> to vector<8x8x8xf32>
    %202 = vector.extract_strided_slice %173 {offsets = [0, 64], sizes = [16, 8], strides = [1, 1]} : vector<16x96xf32> to vector<16x8xf32>
    %203 = vector.shape_cast %202 : vector<16x8xf32> to vector<2x8x8xf32>
    %204 = vector.extract_strided_slice %173 {offsets = [0, 72], sizes = [16, 8], strides = [1, 1]} : vector<16x96xf32> to vector<16x8xf32>
    %205 = vector.shape_cast %204 : vector<16x8xf32> to vector<2x8x8xf32>
    %206 = vector.extract_strided_slice %173 {offsets = [0, 80], sizes = [16, 8], strides = [1, 1]} : vector<16x96xf32> to vector<16x8xf32>
    %207 = vector.shape_cast %206 : vector<16x8xf32> to vector<2x8x8xf32>
    %208 = vector.extract_strided_slice %173 {offsets = [0, 88], sizes = [16, 8], strides = [1, 1]} : vector<16x96xf32> to vector<16x8xf32>
    %209 = vector.shape_cast %208 : vector<16x8xf32> to vector<2x8x8xf32>
    %210 = vector.shape_cast %203 : vector<2x8x8xf32> to vector<2x1x8x8xf32>
    %211 = vector.shape_cast %205 : vector<2x8x8xf32> to vector<2x1x8x8xf32>
    %212 = vector.shape_cast %207 : vector<2x8x8xf32> to vector<2x1x8x8xf32>
    %213 = vector.shape_cast %209 : vector<2x8x8xf32> to vector<2x1x8x8xf32>
    %214 = tpu.concatenate %210, %211, %212, %213 in 1 : vector<2x1x8x8xf32>, vector<2x1x8x8xf32>, vector<2x1x8x8xf32>, vector<2x1x8x8xf32> -> vector<2x4x8x8xf32>
    %215 = vector.shape_cast %214 : vector<2x4x8x8xf32> to vector<8x8x8xf32>
    %216 = arith.truncf %187 : vector<8x8x8xf32> to vector<8x8x8xbf16>
    %217 = arith.truncf %201 : vector<8x8x8xf32> to vector<8x8x8xbf16>
    "tpu.trace_start"() <{level = 10 : i32, message = "bqd,bkd->bqk"}> : () -> ()
    %cst_47 = arith.constant dense<0.000000e+00> : vector<8x8x8xf32>
    %218 = tpu.matmul %216, %217, %cst_47 {dimension_numbers = #tpu.dot_dimension_numbers<[2], [2], [1], [1], [0, 0, 0, 1, 1, 1], [0], [0]>} : vector<8x8x8xbf16>, vector<8x8x8xbf16>, vector<8x8x8xf32> -> vector<8x8x8xf32>
    "tpu.trace_stop"() : () -> ()
    %cst_48 = arith.constant dense<0xFF800000> : vector<8x8xf32>
    %219 = vector.multi_reduction <maximumf>, %218, %cst_48 [2] : vector<8x8x8xf32> to vector<8x8xf32>
    %220 = vector.shape_cast %219 : vector<8x8xf32> to vector<8x8x1xf32>
    %221 = vector.broadcast %220 : vector<8x8x1xf32> to vector<8x8x8xf32>
    %222 = arith.subf %218, %221 : vector<8x8x8xf32>
    %223 = math.exp %222 : vector<8x8x8xf32>
    %cst_49 = arith.constant dense<0.000000e+00> : vector<8x8xf32>
    %224 = vector.multi_reduction <add>, %223, %cst_49 [2] : vector<8x8x8xf32> to vector<8x8xf32>
    %225 = vector.shape_cast %224 : vector<8x8xf32> to vector<8x8x1xf32>
    %226 = vector.broadcast %225 : vector<8x8x1xf32> to vector<8x8x8xf32>
    %227 = arith.divf %223, %226 : vector<8x8x8xf32>
    %228 = vector.shape_cast %227 : vector<8x8x8xf32> to vector<2x4x8x8xf32>
    %229 = arith.truncf %228 : vector<2x4x8x8xf32> to vector<2x4x8x8xbf16>
    %c0_50 = arith.constant 0 : index
    %c1_51 = arith.constant 1 : index
    %c0_52 = arith.constant 0 : index
    %c0_53 = arith.constant 0 : index
    %c0_54 = arith.constant 0 : index
    %230 = vector.load %arg9[%c0_50, %c1_51, %c0_52, %c0_53, %c0_54] : memref<2x2x4x8x8xbf16, #tpu.memory_space<vmem>>, vector<2x1x4x8x8xbf16>
    %231 = vector.shape_cast %230 : vector<2x1x4x8x8xbf16> to vector<2x4x8x8xbf16>
    %232 = vector.shape_cast %229 : vector<2x4x8x8xbf16> to vector<2x1x4x8x8xbf16>
    tpu.vector_store %arg9[%c0_50, %c1_51, %c0_52, %c0_53, %c0_54], %232 {strides = array<i32>} : memref<2x2x4x8x8xbf16, #tpu.memory_space<vmem>>, vector<2x1x4x8x8xbf16>,
    %233 = arith.truncf %227 : vector<8x8x8xf32> to vector<8x8x8xbf16>
    %234 = arith.truncf %215 : vector<8x8x8xf32> to vector<8x8x8xbf16>
    "tpu.trace_start"() <{level = 10 : i32, message = "bqk,bkd->bqd"}> : () -> ()
    %cst_55 = arith.constant dense<0.000000e+00> : vector<8x8x8xf32>
    %235 = tpu.matmul %233, %234, %cst_55 {dimension_numbers = #tpu.dot_dimension_numbers<[2], [1], [1], [2], [0, 0, 0, 1, 1, 2], [0], [0]>} : vector<8x8x8xbf16>, vector<8x8x8xbf16>, vector<8x8x8xf32> -> vector<8x8x8xf32>
    "tpu.trace_stop"() : () -> ()
    %236 = vector.shape_cast %235 : vector<8x8x8xf32> to vector<2x4x8x8xf32>
    %237 = vector.extract_strided_slice %236 {offsets = [0, 0, 0, 0], sizes = [2, 1, 8, 8], strides = [1, 1, 1, 1]} : vector<2x4x8x8xf32> to vector<2x1x8x8xf32>
    %238 = vector.shape_cast %237 : vector<2x1x8x8xf32> to vector<2x8x8xf32>
    %239 = vector.extract_strided_slice %236 {offsets = [0, 1, 0, 0], sizes = [2, 1, 8, 8], strides = [1, 1, 1, 1]} : vector<2x4x8x8xf32> to vector<2x1x8x8xf32>
    %240 = vector.shape_cast %239 : vector<2x1x8x8xf32> to vector<2x8x8xf32>
    %241 = vector.extract_strided_slice %236 {offsets = [0, 2, 0, 0], sizes = [2, 1, 8, 8], strides = [1, 1, 1, 1]} : vector<2x4x8x8xf32> to vector<2x1x8x8xf32>
    %242 = vector.shape_cast %241 : vector<2x1x8x8xf32> to vector<2x8x8xf32>
    %243 = vector.extract_strided_slice %236 {offsets = [0, 3, 0, 0], sizes = [2, 1, 8, 8], strides = [1, 1, 1, 1]} : vector<2x4x8x8xf32> to vector<2x1x8x8xf32>
    %244 = vector.shape_cast %243 : vector<2x1x8x8xf32> to vector<2x8x8xf32>
    %245 = tpu.concatenate %238, %240, %242, %244 in 2 : vector<2x8x8xf32>, vector<2x8x8xf32>, vector<2x8x8xf32>, vector<2x8x8xf32> -> vector<2x8x32xf32>
    %246 = vector.shape_cast %245 : vector<2x8x32xf32> to vector<16x32xf32>
    %247 = arith.truncf %246 : vector<16x32xf32> to vector<16x32xbf16>
    %c1_56 = arith.constant 1 : index
    %c0_57 = arith.constant 0 : index
    %c0_58 = arith.constant 0 : index
    %248 = vector.load %arg4[%c1_56, %c0_57, %c0_58] : memref<2x32x32xbf16, #tpu.memory_space<vmem>>, vector<1x32x32xbf16>
    %249 = vector.shape_cast %248 : vector<1x32x32xbf16> to vector<32x32xbf16>
    %cst_59 = arith.constant dense<0.000000e+00> : vector<16x32xf32>
    %250 = tpu.matmul %247, %249, %cst_59 {dimension_numbers = #tpu.dot_dimension_numbers<[1], [0], [0], [1], [0, 0, 1, 1], [], []>} : vector<16x32xbf16>, vector<32x32xbf16>, vector<16x32xf32> -> vector<16x32xf32>
    %251 = vector.broadcast %161 : vector<1x32xf32> to vector<16x32xf32>
    %252 = arith.addf %250, %251 : vector<16x32xf32>
    %253 = arith.addf %252, %157 : vector<16x32xf32>
    %cst_60 = arith.constant dense<0.000000e+00> : vector<16xf32>
    %254 = vector.multi_reduction <add>, %253, %cst_60 [1] : vector<16x32xf32> to vector<16xf32>
    %255 = vector.shape_cast %254 : vector<16xf32> to vector<16x1xf32>
    %cst_61 = arith.constant 3.200000e+01 : f32
    %256 = vector.broadcast %cst_61 : f32 to vector<16x1xf32>
    %257 = arith.divf %255, %256 : vector<16x1xf32>
    %258 = vector.broadcast %257 : vector<16x1xf32> to vector<16x32xf32>
    %259 = arith.subf %253, %258 : vector<16x32xf32>
    %260 = arith.mulf %259, %259 : vector<16x32xf32>
    %cst_62 = arith.constant dense<0.000000e+00> : vector<16xf32>
    %261 = vector.multi_reduction <add>, %260, %cst_62 [1] : vector<16x32xf32> to vector<16xf32>
    %262 = vector.shape_cast %261 : vector<16xf32> to vector<16x1xf32>
    %cst_63 = arith.constant 3.200000e+01 : f32
    %263 = vector.broadcast %cst_63 : f32 to vector<16x1xf32>
    %264 = arith.divf %262, %263 : vector<16x1xf32>
    %265 = vector.broadcast %257 : vector<16x1xf32> to vector<16x32xf32>
    %266 = arith.subf %253, %265 : vector<16x32xf32>
    %cst_64 = arith.constant 9.99999974E-6 : f32
    %267 = vector.broadcast %cst_64 : f32 to vector<16x1xf32>
    %268 = arith.addf %264, %267 : vector<16x1xf32>
    %269 = math.rsqrt %268 : vector<16x1xf32>
    %270 = vector.broadcast %269 : vector<16x1xf32> to vector<16x32xf32>
    %271 = arith.mulf %266, %270 : vector<16x32xf32>
    %272 = vector.broadcast %162 : vector<1x32xf32> to vector<16x32xf32>
    %273 = arith.mulf %271, %272 : vector<16x32xf32>
    %274 = vector.broadcast %163 : vector<1x32xf32> to vector<16x32xf32>
    %275 = arith.addf %273, %274 : vector<16x32xf32>
    %276 = arith.truncf %275 : vector<16x32xf32> to vector<16x32xbf16>
    %c1_65 = arith.constant 1 : index
    %c0_66 = arith.constant 0 : index
    %c0_67 = arith.constant 0 : index
    %277 = vector.load %arg5[%c1_65, %c0_66, %c0_67] : memref<2x32x64xbf16, #tpu.memory_space<vmem>>, vector<1x32x64xbf16>
    %278 = vector.shape_cast %277 : vector<1x32x64xbf16> to vector<32x64xbf16>
    %cst_68 = arith.constant dense<0.000000e+00> : vector<16x64xf32>
    %279 = tpu.matmul %276, %278, %cst_68 {dimension_numbers = #tpu.dot_dimension_numbers<[1], [0], [0], [1], [0, 0, 1, 1], [], []>} : vector<16x32xbf16>, vector<32x64xbf16>, vector<16x64xf32> -> vector<16x64xf32>
    %280 = vector.broadcast %164 : vector<1x64xf32> to vector<16x64xf32>
    %281 = arith.addf %279, %280 : vector<16x64xf32>
    %cst_69 = arith.constant 0.000000e+00 : f32
    %282 = vector.broadcast %cst_69 : f32 to vector<16x64xf32>
    %283 = arith.maximumf %281, %282 : vector<16x64xf32>
    %284 = arith.truncf %283 : vector<16x64xf32> to vector<16x64xbf16>
    %c1_70 = arith.constant 1 : index
    %c0_71 = arith.constant 0 : index
    %c0_72 = arith.constant 0 : index
    %285 = vector.load %arg6[%c1_70, %c0_71, %c0_72] : memref<2x64x32xbf16, #tpu.memory_space<vmem>>, vector<1x64x32xbf16>
    %286 = vector.shape_cast %285 : vector<1x64x32xbf16> to vector<64x32xbf16>
    %cst_73 = arith.constant dense<0.000000e+00> : vector<16x32xf32>
    %287 = tpu.matmul %284, %286, %cst_73 {dimension_numbers = #tpu.dot_dimension_numbers<[1], [0], [0], [1], [0, 0, 1, 1], [], []>} : vector<16x64xbf16>, vector<64x32xbf16>, vector<16x32xf32> -> vector<16x32xf32>
    %288 = vector.broadcast %165 : vector<1x32xf32> to vector<16x32xf32>
    %289 = arith.addf %287, %288 : vector<16x32xf32>
    %290 = arith.addf %289, %275 : vector<16x32xf32>
    %cst_74 = arith.constant dense<0.000000e+00> : vector<16xf32>
    %291 = vector.multi_reduction <add>, %290, %cst_74 [1] : vector<16x32xf32> to vector<16xf32>
    %292 = vector.shape_cast %291 : vector<16xf32> to vector<16x1xf32>
    %cst_75 = arith.constant 3.200000e+01 : f32
    %293 = vector.broadcast %cst_75 : f32 to vector<16x1xf32>
    %294 = arith.divf %292, %293 : vector<16x1xf32>
    %295 = vector.broadcast %294 : vector<16x1xf32> to vector<16x32xf32>
    %296 = arith.subf %290, %295 : vector<16x32xf32>
    %297 = arith.mulf %296, %296 : vector<16x32xf32>
    %cst_76 = arith.constant dense<0.000000e+00> : vector<16xf32>
    %298 = vector.multi_reduction <add>, %297, %cst_76 [1] : vector<16x32xf32> to vector<16xf32>
    %299 = vector.shape_cast %298 : vector<16xf32> to vector<16x1xf32>
    %cst_77 = arith.constant 3.200000e+01 : f32
    %300 = vector.broadcast %cst_77 : f32 to vector<16x1xf32>
    %301 = arith.divf %299, %300 : vector<16x1xf32>
    %302 = vector.broadcast %294 : vector<16x1xf32> to vector<16x32xf32>
    %303 = arith.subf %290, %302 : vector<16x32xf32>
    %cst_78 = arith.constant 9.99999974E-6 : f32
    %304 = vector.broadcast %cst_78 : f32 to vector<16x1xf32>
    %305 = arith.addf %301, %304 : vector<16x1xf32>
    %306 = math.rsqrt %305 : vector<16x1xf32>
    %307 = vector.broadcast %306 : vector<16x1xf32> to vector<16x32xf32>
    %308 = arith.mulf %303, %307 : vector<16x32xf32>
    %309 = vector.broadcast %166 : vector<1x32xf32> to vector<16x32xf32>
    %310 = arith.mulf %308, %309 : vector<16x32xf32>
    %311 = vector.broadcast %167 : vector<1x32xf32> to vector<16x32xf32>
    %312 = arith.addf %310, %311 : vector<16x32xf32>
    %c0_79 = arith.constant 0 : index
    %c0_80 = arith.constant 0 : index
    %313 = vector.load %arg8[%c0_79, %c0_80] : memref<16x32xf32, #tpu.memory_space<vmem>>, vector<16x32xf32>
    tpu.vector_store %arg8[%c0_79, %c0_80], %312 {strides = array<i32>} : memref<16x32xf32, #tpu.memory_space<vmem>>, vector<16x32xf32>,
    return
  }
  func.func @transform_0(%arg0: i32) -> (i32, i32) {
    %c0_i32 = arith.constant 0 : i32
    %c0_i32_0 = arith.constant 0 : i32
    return %arg0, %c0_i32 : i32, i32
  }
  func.func @transform_1(%arg0: i32) -> (i32, i32) {
    %c0_i32 = arith.constant 0 : i32
    %c0_i32_0 = arith.constant 0 : i32
    %c0_i32_1 = arith.constant 0 : i32
    return %c0_i32, %c0_i32_0 : i32, i32
  }
  func.func @transform_2(%arg0: i32) -> (i32, i32, i32) {
    %c0_i32 = arith.constant 0 : i32
    %c0_i32_0 = arith.constant 0 : i32
    %c0_i32_1 = arith.constant 0 : i32
    %c0_i32_2 = arith.constant 0 : i32
    return %c0_i32, %c0_i32_0, %c0_i32_1 : i32, i32, i32
  }
  func.func @transform_3(%arg0: i32) -> (i32, i32, i32) {
    %c0_i32 = arith.constant 0 : i32
    %c0_i32_0 = arith.constant 0 : i32
    %c0_i32_1 = arith.constant 0 : i32
    %c0_i32_2 = arith.constant 0 : i32
    return %c0_i32, %c0_i32_0, %c0_i32_1 : i32, i32, i32
  }
  func.func @transform_4(%arg0: i32) -> (i32, i32, i32) {
    %c0_i32 = arith.constant 0 : i32
    %c0_i32_0 = arith.constant 0 : i32
    %c0_i32_1 = arith.constant 0 : i32
    %c0_i32_2 = arith.constant 0 : i32
    return %c0_i32, %c0_i32_0, %c0_i32_1 : i32, i32, i32
  }
  func.func @transform_5(%arg0: i32) -> (i32, i32, i32) {
    %c0_i32 = arith.constant 0 : i32
    %c0_i32_0 = arith.constant 0 : i32
    %c0_i32_1 = arith.constant 0 : i32
    %c0_i32_2 = arith.constant 0 : i32
    return %c0_i32, %c0_i32_0, %c0_i32_1 : i32, i32, i32
  }
  func.func @transform_6(%arg0: i32) -> (i32, i32, i32) {
    %c0_i32 = arith.constant 0 : i32
    %c0_i32_0 = arith.constant 0 : i32
    %c0_i32_1 = arith.constant 0 : i32
    %c0_i32_2 = arith.constant 0 : i32
    return %c0_i32, %c0_i32_0, %c0_i32_1 : i32, i32, i32
  }
  func.func @transform_7(%arg0: i32) -> (i32, i32) {
    %c0_i32 = arith.constant 0 : i32
    %c0_i32_0 = arith.constant 0 : i32
    return %arg0, %c0_i32 : i32, i32
  }
  func.func @transform_8(%arg0: i32) -> (i32, i32, i32, i32, i32) {
    %c0_i32 = arith.constant 0 : i32
    %c0_i32_0 = arith.constant 0 : i32
    %c0_i32_1 = arith.constant 0 : i32
    %c0_i32_2 = arith.constant 0 : i32
    %c0_i32_3 = arith.constant 0 : i32
    return %arg0, %c0_i32, %c0_i32_0, %c0_i32_1, %c0_i32_2 : i32, i32, i32, i32, i32
  }
}

</mosaic_0001>

<llo_original>
// kernel: tpu_custom_call.1
$region0: #{tpu_custom_call.1}
  #allocation0 [shape = 'u32[]', space=smem, size = 0x4, offset = 0x4, fixed_abs, tag = 'smem constant byte address 0x4 - core index']
  #allocation1 [shape = 'u32[144,128]{1,0:T(1,128)}', space=vmem, size = 0x12000, scoped, tag = 'internal scratch']
  %s0 = inlined_call_operand.hbm [shape: f32[16,32], index: 0, kind: input, shape index: {}]
  %s1 = inlined_call_operand.hbm [shape: f32[16,32], index: 1, kind: input, shape index: {}]
  %s2 = inlined_call_operand.vmem [shape: bf16[2,32,96], index: 2, kind: input, shape index: {}]
  %s3 = inlined_call_operand.vmem [shape: bf16[2,32,32], index: 3, kind: input, shape index: {}]
  %s4 = inlined_call_operand.vmem [shape: bf16[2,32,64], index: 4, kind: input, shape index: {}]
  %s5 = inlined_call_operand.vmem [shape: bf16[2,64,32], index: 5, kind: input, shape index: {}]
  %s6 = inlined_call_operand.hbm [shape: f32[2,8,128], index: 6, kind: input, shape index: {}]
  %s7 = inlined_call_operand.hbm [shape: f32[16,32], index: 7, kind: output, shape index: {0}]
  %s8 = inlined_call_operand.hbm [shape: bf16[2,2,4,8,8], index: 8, kind: output, shape index: {1}]
  %9 = xla_tuple %s7, %s8
  %s10 = sld [smem:[#allocation0]]
  $region58: #{tpu_custom_call.1} parent=0
    _
  %s12 = ssub.s32 1, %s10
  %s13 = scalar_select 0, %s12, %s10
  $region1: #{tpu_custom_call.1} parent=0
    #allocation2 [shape = 'u8[8192]{0}', space=vmem, size = 0x2000, scoped, tag = 'input window, operand 0, single buffered']
    #allocation3 [shape = 's32[1]{0}', space=sflag, size = 0x4, scoped, tag = 'scoped memory for tpu_custom_call.1']
    #allocation4 [shape = 's32[1]{0}', space=sflag, size = 0x4, scoped, tag = 'scoped memory for tpu_custom_call.1']
    #allocation5 [shape = 'u8[8192]{0}', space=vmem, size = 0x2000, scoped, tag = 'input window, operand 1, single buffered']
    #allocation6 [shape = 's32[1]{0}', space=sflag, size = 0x4, scoped, tag = 'scoped memory for tpu_custom_call.1']
    #allocation7 [shape = 'u8[8192]{0}', space=vmem, size = 0x2000, scoped, tag = 'input window, operand 6, single buffered']
    #allocation8 [shape = 'u8[8192]{0}', space=vmem, size = 0x2000, scoped, tag = 'output window, operand 0, single buffered']
    #allocation9 [shape = 'u8[32768]{0}', space=vmem, size = 0x8000, scoped, tag = 'output window, operand 1, single buffered']
    #allocation10 [shape = 's32[1]{0}', space=sflag, size = 0x4, scoped, tag = 'scoped memory for tpu_custom_call.1']
    %14 = vsyncpa [#allocation3], 0
    %15 = vsyncpa [#allocation6], 0
    %16 = vsyncpa [#allocation4], 0
    %17 = vsyncpa [#allocation10], 0
    // Predicated region
    $region2: #{tpu_custom_call.1} parent=1 // pred_check
      _
    $region3: #{tpu_custom_call.1} parent=1 // pred_check_branch
      %19 = sbr.rel (0) target = $region5
    $region4: #{tpu_custom_call.1} parent=1 // pred_region
      %s21 = ssub.s32 256, 256
      %22 = vsyncadd [#allocation3], %s21
      %s23 = sshll.u32 [#allocation2], 4
      %s24 = int_to_ptr.vmem [resolvable:$true] %s23
      %29 = dma.hbm_to_vmem [thread:$0]  %s0, 256, %s24, [#allocation3], 128, 128, 8
    $region5: #{tpu_custom_call.1} parent=1 // pred_fallthru
      _
    // Predicated region
    $region6: #{tpu_custom_call.1} parent=1 // pred_check
      _
    $region7: #{tpu_custom_call.1} parent=1 // pred_check_branch
      %31 = sbr.rel (0) target = $region9
    $region8: #{tpu_custom_call.1} parent=1 // pred_region
      %s33 = ssub.s32 256, 256
      %34 = vsyncadd [#allocation6], %s33
      %s35 = sshll.u32 [#allocation5], 4
      %s36 = int_to_ptr.vmem [resolvable:$true] %s35
      %41 = dma.hbm_to_vmem [thread:$0]  %s1, 256, %s36, [#allocation6], 128, 128, 8
    $region9: #{tpu_custom_call.1} parent=1 // pred_fallthru
      _
    // Predicated region
    $region10: #{tpu_custom_call.1} parent=1 // pred_check
      _
    $region11: #{tpu_custom_call.1} parent=1 // pred_check_branch
      %43 = sbr.rel (0) target = $region13
    $region12: #{tpu_custom_call.1} parent=1 // pred_region
      _
    $region13: #{tpu_custom_call.1} parent=1 // pred_fallthru
      _
    // Predicated region
    $region14: #{tpu_custom_call.1} parent=1 // pred_check
      _
    $region15: #{tpu_custom_call.1} parent=1 // pred_check_branch
      %45 = sbr.rel (0) target = $region17
    $region16: #{tpu_custom_call.1} parent=1 // pred_region
      _
    $region17: #{tpu_custom_call.1} parent=1 // pred_fallthru
      _
    // Predicated region
    $region18: #{tpu_custom_call.1} parent=1 // pred_check
      _
    $region19: #{tpu_custom_call.1} parent=1 // pred_check_branch
      %47 = sbr.rel (0) target = $region21
    $region20: #{tpu_custom_call.1} parent=1 // pred_region
      _
    $region21: #{tpu_custom_call.1} parent=1 // pred_fallthru
      _
    // Predicated region
    $region22: #{tpu_custom_call.1} parent=1 // pred_check
      _
    $region23: #{tpu_custom_call.1} parent=1 // pred_check_branch
      %49 = sbr.rel (0) target = $region25
    $region24: #{tpu_custom_call.1} parent=1 // pred_region
      _
    $region25: #{tpu_custom_call.1} parent=1 // pred_fallthru
      _
    // Predicated region
    $region26: #{tpu_custom_call.1} parent=1 // pred_check
      _
    $region27: #{tpu_custom_call.1} parent=1 // pred_check_branch
      %51 = sbr.rel (0) target = $region29
    $region28: #{tpu_custom_call.1} parent=1 // pred_region
      %s53 = ssub.s32 256, 256
      %54 = vsyncadd [#allocation6], %s53
      %s55 = sshll.u32 [#allocation7], 4
      %s56 = int_to_ptr.vmem [resolvable:$true] %s55
      %61 = dma.hbm_to_vmem [thread:$0]  %s6, 256, %s56, [#allocation6], 128, 128, 8
    $region29: #{tpu_custom_call.1} parent=1 // pred_fallthru
      _
    // Predicated region
    $region30: #{tpu_custom_call.1} parent=1 // pred_check
      _
    $region31: #{tpu_custom_call.1} parent=1 // pred_check_branch
      %63 = sbr.rel (0) target = $region33
    $region32: #{tpu_custom_call.1} parent=1 // pred_region
      %64 = dma.done [#allocation3], 256
    $region33: #{tpu_custom_call.1} parent=1 // pred_fallthru
      _
    // Predicated region
    $region34: #{tpu_custom_call.1} parent=1 // pred_check
      _
    $region35: #{tpu_custom_call.1} parent=1 // pred_check_branch
      %66 = sbr.rel (0) target = $region37
    $region36: #{tpu_custom_call.1} parent=1 // pred_region
      %67 = dma.done [#allocation6], 256
    $region37: #{tpu_custom_call.1} parent=1 // pred_fallthru
      _
    // Predicated region
    $region38: #{tpu_custom_call.1} parent=1 // pred_check
      _
    $region39: #{tpu_custom_call.1} parent=1 // pred_check_branch
      %69 = sbr.rel (0) target = $region41
    $region40: #{tpu_custom_call.1} parent=1 // pred_region
      %70 = dma.done [#allocation6], 256
    $region41: #{tpu_custom_call.1} parent=1 // pred_fallthru
      _
    %v72 = vld [vmem:[#allocation2] sm:$0xff]
    %v73 = vld [vmem:[#allocation2 + $0x8] sm:$0xff]
    %v74 = vld [vmem:[#allocation5] sm:$0xff]
    %v75 = vld [vmem:[#allocation5 + $0x8] sm:$0xff]
    %v76 = vadd.f32 %v72, %v74
    %v77 = vadd.f32 %v73, %v75
    %v78 = vld [vmem:[#allocation7] sm:$0xff]
    %v79 = vpack.c.bf16 %v77, %v76
    %v80 = vld [vmem:[%s2] sm:$0xf]
    %v81 = vld [vmem:[%s2 + $0x4] sm:$0xf]
    %v82 = vld [vmem:[%s2 + $0x8] sm:$0xf]
    %v83 = vld [vmem:[%s2 + $0xc] sm:$0xf]
    %v84 = vlaneseq
    %v85 = vshrl.u32 %v84, 7
    %v86 = vsub.s32 0, %v85
    %v87 = vrot.slane %v78, %v86
    %v92 = vunpack.c.l.b16 %v80
    %v93 = vunpack.c.l.b16 %v81
    %v94 = vunpack.c.l.b16 %v82
    %v95 = vunpack.c.l.b16 %v83
    %v96 = vpack.c.b16 %v93, %v92
    %v97 = vpack.c.b16 %v95, %v94
    %vm100 = vcmask 261120
    %v102 = vsel %vm100, %v79, 0
    %104 = vmatprep.subr.bf16.mxu0 0
    %105 = vmatpush1.bf16.msra.mxu0 0
    %106 = vmatprep.subr.bf16.mxu0 0
    %107 = vmatpush1.bf16.msra.mxu0 0
    %108 = vmatprep.subr.bf16.mxu0 0
    %109 = vmatpush1.bf16.msra.mxu0 0
    %110 = vmatprep.subr.bf16.mxu0 0
    %111 = vmatpush1.bf16.msra.mxu0 0
    %112 = vmatprep.subr.bf16.mxu0 0
    %113 = vmatpush1.bf16.msra.mxu0 0
    %114 = vmatprep.subr.bf16.mxu0 0
    %115 = vmatpush1.bf16.msra.mxu0 0
    %116 = vmatprep.subr.bf16.mxu0 0
    %117 = vmatpush1.bf16.msra.mxu0 %v97
    %118 = vmatprep.subr.bf16.mxu0 0
    %119 = vmatpush1.bf16.msra.mxu0 %v96
    %120 = vmatprep.subr.bf16.mxu0 0
    %121 = vmatpush2.bf16.msra.mxu0 0
    %122 = vmatprep.subr.bf16.mxu0 0
    %123 = vmatpush2.bf16.msra.mxu0 0
    %124 = vmatprep.subr.bf16.mxu0 0
    %125 = vmatpush2.bf16.msra.mxu0 0
    %126 = vmatprep.subr.bf16.mxu0 0
    %127 = vmatpush2.bf16.msra.mxu0 0
    %128 = vmatprep.subr.bf16.mxu0 0
    %129 = vmatpush2.bf16.msra.mxu0 0
    %130 = vmatprep.subr.bf16.mxu0 0
    %131 = vmatpush2.bf16.msra.mxu0 0
    %132 = vmatprep.subr.bf16.mxu0 0
    %133 = vmatpush2.bf16.msra.mxu0 0
    %134 = vmatprep.subr.bf16.mxu0 0
    %135 = vmatpush2.bf16.msra.mxu0 0
    %136 = vmatprep.mubr.bf16.mxu0 0
    %137 = vmatmul.mubr.bf16.gmra.mxu0 %v102
    %v138 = vpop.f32.mrf.mxu0
    %v139 = vadd.f32 %v87, %v138
    %v140 = vpop.f32.mrf.mxu0
    %v141 = vpop.f32.mrf.mxu0
    %v142 = vadd.f32 %v87, %v141
    %v143 = vpop.f32.mrf.mxu0
    %144 = vdwg.mxu0
    %147 = vrot.lane.b32.xlu0 %v139, 120
    %v148 = vpop.permute.xlu0 %147
    %149 = vrot.lane.b32.xlu0 %v142, 120
    %v150 = vpop.permute.xlu0 %149
    %153 = vrot.lane.b32.xlu0 %v139, 112
    %v154 = vpop.permute.xlu0 %153
    %155 = vrot.lane.b32.xlu0 %v142, 112
    %v156 = vpop.permute.xlu0 %155
    %159 = vrot.lane.b32.xlu0 %v139, 104
    %v160 = vpop.permute.xlu0 %159
    %161 = vrot.lane.b32.xlu0 %v142, 104
    %v162 = vpop.permute.xlu0 %161
    %v165 = vpack.c.bf16 %v139, %v139
    %v166 = vpack.c.bf16 %v148, %v148
    %v167 = vpack.c.bf16 %v154, %v154
    %v168 = vpack.c.bf16 %v160, %v160
    %v169 = vpack.c.bf16 %v142, %v142
    %v170 = vpack.c.bf16 %v150, %v150
    %v171 = vpack.c.bf16 %v156, %v156
    %v172 = vpack.c.bf16 %v162, %v162
    %174 = vrot.lane.b32.xlu0 %v165, 96
    %v175 = vpop.permute.xlu0 %174
    %vm176 = vcmask 64512
    %v178 = vsel %vm176, %v165, 0
    %v181 = vsel %vm176, %v175, 0
    %183 = vmatprep.subr.bf16.mxu0 0
    %184 = vmatpush1.bf16.xpose.msra.mxu0 0
    %185 = vmatprep.subr.bf16.mxu0 0
    %186 = vmatpush1.bf16.xpose.msra.mxu0 0
    %187 = vmatprep.subr.bf16.mxu0 0
    %188 = vmatpush1.bf16.xpose.msra.mxu0 0
    %189 = vmatprep.subr.bf16.mxu0 0
    %190 = vmatpush1.bf16.xpose.msra.mxu0 0
    %191 = vmatprep.subr.bf16.mxu0 0
    %192 = vmatpush1.bf16.xpose.msra.mxu0 0
    %193 = vmatprep.subr.bf16.mxu0 0
    %194 = vmatpush1.bf16.xpose.msra.mxu0 0
    %195 = vmatprep.subr.bf16.mxu0 0
    %196 = vmatpush1.bf16.xpose.msra.mxu0 0
    %197 = vmatprep.subr.bf16.mxu0 0
    %198 = vmatpush1.bf16.xpose.msra.mxu0 %v181
    %199 = vmatprep.subr.bf16.mxu0 0
    %200 = vmatpush2.bf16.xpose.msra.mxu0 0
    %201 = vmatprep.subr.bf16.mxu0 0
    %202 = vmatpush2.bf16.xpose.msra.mxu0 0
    %203 = vmatprep.subr.bf16.mxu0 0
    %204 = vmatpush2.bf16.xpose.msra.mxu0 0
    %205 = vmatprep.subr.bf16.mxu0 0
    %206 = vmatpush2.bf16.xpose.msra.mxu0 0
    %207 = vmatprep.subr.bf16.mxu0 0
    %208 = vmatpush2.bf16.xpose.msra.mxu0 0
    %209 = vmatprep.subr.bf16.mxu0 0
    %210 = vmatpush2.bf16.xpose.msra.mxu0 0
    %211 = vmatprep.subr.bf16.mxu0 0
    %212 = vmatpush2.bf16.xpose.msra.mxu0 0
    %213 = vmatprep.subr.bf16.mxu0 0
    %214 = vmatpush2.bf16.xpose.msra.mxu0 0
    %215 = vmatprep.mubr.bf16.mxu0 0
    %216 = vmatmul.mubr.bf16.gmra.mxu0 %v178
    %v217 = vpop.f32.mrf.mxu0
    %v218 = vadd.f32 0.0, %v217
    %v219 = vpop.f32.mrf.mxu0
    %v220 = vpop.f32.mrf.mxu0
    %v221 = vpop.f32.mrf.mxu0
    %222 = vdwg.mxu0
    %224 = vrot.lane.b32.xlu0 %v166, 96
    %v225 = vpop.permute.xlu0 %224
    %v227 = vsel %vm176, %v166, 0
    %v230 = vsel %vm176, %v225, 0
    %232 = vmatprep.subr.bf16.mxu0 0
    %233 = vmatpush1.bf16.xpose.msra.mxu0 0
    %234 = vmatprep.subr.bf16.mxu0 0
    %235 = vmatpush1.bf16.xpose.msra.mxu0 0
    %236 = vmatprep.subr.bf16.mxu0 0
    %237 = vmatpush1.bf16.xpose.msra.mxu0 0
    %238 = vmatprep.subr.bf16.mxu0 0
    %239 = vmatpush1.bf16.xpose.msra.mxu0 0
    %240 = vmatprep.subr.bf16.mxu0 0
    %241 = vmatpush1.bf16.xpose.msra.mxu0 0
    %242 = vmatprep.subr.bf16.mxu0 0
    %243 = vmatpush1.bf16.xpose.msra.mxu0 0
    %244 = vmatprep.subr.bf16.mxu0 0
    %245 = vmatpush1.bf16.xpose.msra.mxu0 0
    %246 = vmatprep.subr.bf16.mxu0 0
    %247 = vmatpush1.bf16.xpose.msra.mxu0 %v230
    %248 = vmatprep.subr.bf16.mxu0 0
    %249 = vmatpush2.bf16.xpose.msra.mxu0 0
    %250 = vmatprep.subr.bf16.mxu0 0
    %251 = vmatpush2.bf16.xpose.msra.mxu0 0
    %252 = vmatprep.subr.bf16.mxu0 0
    %253 = vmatpush2.bf16.xpose.msra.mxu0 0
    %254 = vmatprep.subr.bf16.mxu0 0
    %255 = vmatpush2.bf16.xpose.msra.mxu0 0
    %256 = vmatprep.subr.bf16.mxu0 0
    %257 = vmatpush2.bf16.xpose.msra.mxu0 0
    %258 = vmatprep.subr.bf16.mxu0 0
    %259 = vmatpush2.bf16.xpose.msra.mxu0 0
    %260 = vmatprep.subr.bf16.mxu0 0
    %261 = vmatpush2.bf16.xpose.msra.mxu0 0
    %262 = vmatprep.subr.bf16.mxu0 0
    %263 = vmatpush2.bf16.xpose.msra.mxu0 0
    %264 = vmatprep.mubr.bf16.mxu0 0
    %265 = vmatmul.mubr.bf16.gmra.mxu0 %v227
    %v266 = vpop.f32.mrf.mxu0
    %v267 = vadd.f32 0.0, %v266
    %v268 = vpop.f32.mrf.mxu0
    %v269 = vpop.f32.mrf.mxu0
    %v270 = vpop.f32.mrf.mxu0
    %271 = vdwg.mxu0
    %273 = vrot.lane.b32.xlu0 %v167, 96
    %v274 = vpop.permute.xlu0 %273
    %v276 = vsel %vm176, %v167, 0
    %v279 = vsel %vm176, %v274, 0
    %281 = vmatprep.subr.bf16.mxu0 0
    %282 = vmatpush1.bf16.xpose.msra.mxu0 0
    %283 = vmatprep.subr.bf16.mxu0 0
    %284 = vmatpush1.bf16.xpose.msra.mxu0 0
    %285 = vmatprep.subr.bf16.mxu0 0
    %286 = vmatpush1.bf16.xpose.msra.mxu0 0
    %287 = vmatprep.subr.bf16.mxu0 0
    %288 = vmatpush1.bf16.xpose.msra.mxu0 0
    %289 = vmatprep.subr.bf16.mxu0 0
    %290 = vmatpush1.bf16.xpose.msra.mxu0 0
    %291 = vmatprep.subr.bf16.mxu0 0
    %292 = vmatpush1.bf16.xpose.msra.mxu0 0
    %293 = vmatprep.subr.bf16.mxu0 0
    %294 = vmatpush1.bf16.xpose.msra.mxu0 0
    %295 = vmatprep.subr.bf16.mxu0 0
    %296 = vmatpush1.bf16.xpose.msra.mxu0 %v279
    %297 = vmatprep.subr.bf16.mxu0 0
    %298 = vmatpush2.bf16.xpose.msra.mxu0 0
    %299 = vmatprep.subr.bf16.mxu0 0
    %300 = vmatpush2.bf16.xpose.msra.mxu0 0
    %301 = vmatprep.subr.bf16.mxu0 0
    %302 = vmatpush2.bf16.xpose.msra.mxu0 0
    %303 = vmatprep.subr.bf16.mxu0 0
    %304 = vmatpush2.bf16.xpose.msra.mxu0 0
    %305 = vmatprep.subr.bf16.mxu0 0
    %306 = vmatpush2.bf16.xpose.msra.mxu0 0
    %307 = vmatprep.subr.bf16.mxu0 0
    %308 = vmatpush2.bf16.xpose.msra.mxu0 0
    %309 = vmatprep.subr.bf16.mxu0 0
    %310 = vmatpush2.bf16.xpose.msra.mxu0 0
    %311 = vmatprep.subr.bf16.mxu0 0
    %312 = vmatpush2.bf16.xpose.msra.mxu0 0
    %313 = vmatprep.mubr.bf16.mxu0 0
    %314 = vmatmul.mubr.bf16.gmra.mxu0 %v276
    %v315 = vpop.f32.mrf.mxu0
    %v316 = vadd.f32 0.0, %v315
    %v317 = vpop.f32.mrf.mxu0
    %v318 = vpop.f32.mrf.mxu0
    %v319 = vpop.f32.mrf.mxu0
    %320 = vdwg.mxu0
    %322 = vrot.lane.b32.xlu0 %v168, 96
    %v323 = vpop.permute.xlu0 %322
    %v325 = vsel %vm176, %v168, 0
    %v328 = vsel %vm176, %v323, 0
    %330 = vmatprep.subr.bf16.mxu0 0
    %331 = vmatpush1.bf16.xpose.msra.mxu0 0
    %332 = vmatprep.subr.bf16.mxu0 0
    %333 = vmatpush1.bf16.xpose.msra.mxu0 0
    %334 = vmatprep.subr.bf16.mxu0 0
    %335 = vmatpush1.bf16.xpose.msra.mxu0 0
    %336 = vmatprep.subr.bf16.mxu0 0
    %337 = vmatpush1.bf16.xpose.msra.mxu0 0
    %338 = vmatprep.subr.bf16.mxu0 0
    %339 = vmatpush1.bf16.xpose.msra.mxu0 0
    %340 = vmatprep.subr.bf16.mxu0 0
    %341 = vmatpush1.bf16.xpose.msra.mxu0 0
    %342 = vmatprep.subr.bf16.mxu0 0
    %343 = vmatpush1.bf16.xpose.msra.mxu0 0
    %344 = vmatprep.subr.bf16.mxu0 0
    %345 = vmatpush1.bf16.xpose.msra.mxu0 %v328
    %346 = vmatprep.subr.bf16.mxu0 0
    %347 = vmatpush2.bf16.xpose.msra.mxu0 0
    %348 = vmatprep.subr.bf16.mxu0 0
    %349 = vmatpush2.bf16.xpose.msra.mxu0 0
    %350 = vmatprep.subr.bf16.mxu0 0
    %351 = vmatpush2.bf16.xpose.msra.mxu0 0
    %352 = vmatprep.subr.bf16.mxu0 0
    %353 = vmatpush2.bf16.xpose.msra.mxu0 0
    %354 = vmatprep.subr.bf16.mxu0 0
    %355 = vmatpush2.bf16.xpose.msra.mxu0 0
    %356 = vmatprep.subr.bf16.mxu0 0
    %357 = vmatpush2.bf16.xpose.msra.mxu0 0
    %358 = vmatprep.subr.bf16.mxu0 0
    %359 = vmatpush2.bf16.xpose.msra.mxu0 0
    %360 = vmatprep.subr.bf16.mxu0 0
    %361 = vmatpush2.bf16.xpose.msra.mxu0 0
    %362 = vmatprep.mubr.bf16.mxu0 0
    %363 = vmatmul.mubr.bf16.gmra.mxu0 %v325
    %v364 = vpop.f32.mrf.mxu0
    %v365 = vadd.f32 0.0, %v364
    %v366 = vpop.f32.mrf.mxu0
    %v367 = vpop.f32.mrf.mxu0
    %v368 = vpop.f32.mrf.mxu0
    %369 = vdwg.mxu0
    %371 = vrot.lane.b32.xlu0 %v169, 96
    %v372 = vpop.permute.xlu0 %371
    %v374 = vsel %vm176, %v169, 0
    %v377 = vsel %vm176, %v372, 0
    %379 = vmatprep.subr.bf16.mxu0 0
    %380 = vmatpush1.bf16.xpose.msra.mxu0 0
    %381 = vmatprep.subr.bf16.mxu0 0
    %382 = vmatpush1.bf16.xpose.msra.mxu0 0
    %383 = vmatprep.subr.bf16.mxu0 0
    %384 = vmatpush1.bf16.xpose.msra.mxu0 0
    %385 = vmatprep.subr.bf16.mxu0 0
    %386 = vmatpush1.bf16.xpose.msra.mxu0 0
    %387 = vmatprep.subr.bf16.mxu0 0
    %388 = vmatpush1.bf16.xpose.msra.mxu0 0
    %389 = vmatprep.subr.bf16.mxu0 0
    %390 = vmatpush1.bf16.xpose.msra.mxu0 0
    %391 = vmatprep.subr.bf16.mxu0 0
    %392 = vmatpush1.bf16.xpose.msra.mxu0 0
    %393 = vmatprep.subr.bf16.mxu0 0
    %394 = vmatpush1.bf16.xpose.msra.mxu0 %v377
    %395 = vmatprep.subr.bf16.mxu0 0
    %396 = vmatpush2.bf16.xpose.msra.mxu0 0
    %397 = vmatprep.subr.bf16.mxu0 0
    %398 = vmatpush2.bf16.xpose.msra.mxu0 0
    %399 = vmatprep.subr.bf16.mxu0 0
    %400 = vmatpush2.bf16.xpose.msra.mxu0 0
    %401 = vmatprep.subr.bf16.mxu0 0
    %402 = vmatpush2.bf16.xpose.msra.mxu0 0
    %403 = vmatprep.subr.bf16.mxu0 0
    %404 = vmatpush2.bf16.xpose.msra.mxu0 0
    %405 = vmatprep.subr.bf16.mxu0 0
    %406 = vmatpush2.bf16.xpose.msra.mxu0 0
    %407 = vmatprep.subr.bf16.mxu0 0
    %408 = vmatpush2.bf16.xpose.msra.mxu0 0
    %409 = vmatprep.subr.bf16.mxu0 0
    %410 = vmatpush2.bf16.xpose.msra.mxu0 0
    %411 = vmatprep.mubr.bf16.mxu0 0
    %412 = vmatmul.mubr.bf16.gmra.mxu0 %v374
    %v413 = vpop.f32.mrf.mxu0
    %v414 = vadd.f32 0.0, %v413
    %v415 = vpop.f32.mrf.mxu0
    %v416 = vpop.f32.mrf.mxu0
    %v417 = vpop.f32.mrf.mxu0
    %418 = vdwg.mxu0
    %420 = vrot.lane.b32.xlu0 %v170, 96
    %v421 = vpop.permute.xlu0 %420
    %v423 = vsel %vm176, %v170, 0
    %v426 = vsel %vm176, %v421, 0
    %428 = vmatprep.subr.bf16.mxu0 0
    %429 = vmatpush1.bf16.xpose.msra.mxu0 0
    %430 = vmatprep.subr.bf16.mxu0 0
    %431 = vmatpush1.bf16.xpose.msra.mxu0 0
    %432 = vmatprep.subr.bf16.mxu0 0
    %433 = vmatpush1.bf16.xpose.msra.mxu0 0
    %434 = vmatprep.subr.bf16.mxu0 0
    %435 = vmatpush1.bf16.xpose.msra.mxu0 0
    %436 = vmatprep.subr.bf16.mxu0 0
    %437 = vmatpush1.bf16.xpose.msra.mxu0 0
    %438 = vmatprep.subr.bf16.mxu0 0
    %439 = vmatpush1.bf16.xpose.msra.mxu0 0
    %440 = vmatprep.subr.bf16.mxu0 0
    %441 = vmatpush1.bf16.xpose.msra.mxu0 0
    %442 = vmatprep.subr.bf16.mxu0 0
    %443 = vmatpush1.bf16.xpose.msra.mxu0 %v426
    %444 = vmatprep.subr.bf16.mxu0 0
    %445 = vmatpush2.bf16.xpose.msra.mxu0 0
    %446 = vmatprep.subr.bf16.mxu0 0
    %447 = vmatpush2.bf16.xpose.msra.mxu0 0
    %448 = vmatprep.subr.bf16.mxu0 0
    %449 = vmatpush2.bf16.xpose.msra.mxu0 0
    %450 = vmatprep.subr.bf16.mxu0 0
    %451 = vmatpush2.bf16.xpose.msra.mxu0 0
    %452 = vmatprep.subr.bf16.mxu0 0
    %453 = vmatpush2.bf16.xpose.msra.mxu0 0
    %454 = vmatprep.subr.bf16.mxu0 0
    %455 = vmatpush2.bf16.xpose.msra.mxu0 0
    %456 = vmatprep.subr.bf16.mxu0 0
    %457 = vmatpush2.bf16.xpose.msra.mxu0 0
    %458 = vmatprep.subr.bf16.mxu0 0
    %459 = vmatpush2.bf16.xpose.msra.mxu0 0
    %460 = vmatprep.mubr.bf16.mxu0 0
    %461 = vmatmul.mubr.bf16.gmra.mxu0 %v423
    %v462 = vpop.f32.mrf.mxu0
    %v463 = vadd.f32 0.0, %v462
    %v464 = vpop.f32.mrf.mxu0
    %v465 = vpop.f32.mrf.mxu0
    %v466 = vpop.f32.mrf.mxu0
    %467 = vdwg.mxu0
    %469 = vrot.lane.b32.xlu0 %v171, 96
    %v470 = vpop.permute.xlu0 %469
    %v472 = vsel %vm176, %v171, 0
    %v475 = vsel %vm176, %v470, 0
    %477 = vmatprep.subr.bf16.mxu0 0
    %478 = vmatpush1.bf16.xpose.msra.mxu0 0
    %479 = vmatprep.subr.bf16.mxu0 0
    %480 = vmatpush1.bf16.xpose.msra.mxu0 0
    %481 = vmatprep.subr.bf16.mxu0 0
    %482 = vmatpush1.bf16.xpose.msra.mxu0 0
    %483 = vmatprep.subr.bf16.mxu0 0
    %484 = vmatpush1.bf16.xpose.msra.mxu0 0
    %485 = vmatprep.subr.bf16.mxu0 0
    %486 = vmatpush1.bf16.xpose.msra.mxu0 0
    %487 = vmatprep.subr.bf16.mxu0 0
    %488 = vmatpush1.bf16.xpose.msra.mxu0 0
    %489 = vmatprep.subr.bf16.mxu0 0
    %490 = vmatpush1.bf16.xpose.msra.mxu0 0
    %491 = vmatprep.subr.bf16.mxu0 0
    %492 = vmatpush1.bf16.xpose.msra.mxu0 %v475
    %493 = vmatprep.subr.bf16.mxu0 0
    %494 = vmatpush2.bf16.xpose.msra.mxu0 0
    %495 = vmatprep.subr.bf16.mxu0 0
    %496 = vmatpush2.bf16.xpose.msra.mxu0 0
    %497 = vmatprep.subr.bf16.mxu0 0
    %498 = vmatpush2.bf16.xpose.msra.mxu0 0
    %499 = vmatprep.subr.bf16.mxu0 0
    %500 = vmatpush2.bf16.xpose.msra.mxu0 0
    %501 = vmatprep.subr.bf16.mxu0 0
    %502 = vmatpush2.bf16.xpose.msra.mxu0 0
    %503 = vmatprep.subr.bf16.mxu0 0
    %504 = vmatpush2.bf16.xpose.msra.mxu0 0
    %505 = vmatprep.subr.bf16.mxu0 0
    %506 = vmatpush2.bf16.xpose.msra.mxu0 0
    %507 = vmatprep.subr.bf16.mxu0 0
    %508 = vmatpush2.bf16.xpose.msra.mxu0 0
    %509 = vmatprep.mubr.bf16.mxu0 0
    %510 = vmatmul.mubr.bf16.gmra.mxu0 %v472
    %v511 = vpop.f32.mrf.mxu0
    %v512 = vadd.f32 0.0, %v511
    %v513 = vpop.f32.mrf.mxu0
    %v514 = vpop.f32.mrf.mxu0
    %v515 = vpop.f32.mrf.mxu0
    %516 = vdwg.mxu0
    %518 = vrot.lane.b32.xlu0 %v172, 96
    %v519 = vpop.permute.xlu0 %518
    %v521 = vsel %vm176, %v172, 0
    %v524 = vsel %vm176, %v519, 0
    %526 = vmatprep.subr.bf16.mxu0 0
    %527 = vmatpush1.bf16.xpose.msra.mxu0 0
    %528 = vmatprep.subr.bf16.mxu0 0
    %529 = vmatpush1.bf16.xpose.msra.mxu0 0
    %530 = vmatprep.subr.bf16.mxu0 0
    %531 = vmatpush1.bf16.xpose.msra.mxu0 0
    %532 = vmatprep.subr.bf16.mxu0 0
    %533 = vmatpush1.bf16.xpose.msra.mxu0 0
    %534 = vmatprep.subr.bf16.mxu0 0
    %535 = vmatpush1.bf16.xpose.msra.mxu0 0
    %536 = vmatprep.subr.bf16.mxu0 0
    %537 = vmatpush1.bf16.xpose.msra.mxu0 0
    %538 = vmatprep.subr.bf16.mxu0 0
    %539 = vmatpush1.bf16.xpose.msra.mxu0 0
    %540 = vmatprep.subr.bf16.mxu0 0
    %541 = vmatpush1.bf16.xpose.msra.mxu0 %v524
    %542 = vmatprep.subr.bf16.mxu0 0
    %543 = vmatpush2.bf16.xpose.msra.mxu0 0
    %544 = vmatprep.subr.bf16.mxu0 0
    %545 = vmatpush2.bf16.xpose.msra.mxu0 0
    %546 = vmatprep.subr.bf16.mxu0 0
    %547 = vmatpush2.bf16.xpose.msra.mxu0 0
    %548 = vmatprep.subr.bf16.mxu0 0
    %549 = vmatpush2.bf16.xpose.msra.mxu0 0
    %550 = vmatprep.subr.bf16.mxu0 0
    %551 = vmatpush2.bf16.xpose.msra.mxu0 0
    %552 = vmatprep.subr.bf16.mxu0 0
    %553 = vmatpush2.bf16.xpose.msra.mxu0 0
    %554 = vmatprep.subr.bf16.mxu0 0
    %555 = vmatpush2.bf16.xpose.msra.mxu0 0
    %556 = vmatprep.subr.bf16.mxu0 0
    %557 = vmatpush2.bf16.xpose.msra.mxu0 0
    %558 = vmatprep.mubr.bf16.mxu0 0
    %559 = vmatmul.mubr.bf16.gmra.mxu0 %v521
    %v560 = vpop.f32.mrf.mxu0
    %v561 = vadd.f32 0.0, %v560
    %v562 = vpop.f32.mrf.mxu0
    %v563 = vpop.f32.mrf.mxu0
    %v564 = vpop.f32.mrf.mxu0
    %565 = vdwg.mxu0
    %v566 = vsel %vm176, %v218, -inf
    %567 = vmax.xlane.f32.xlu0 %v566
    %v568 = vpop.xlane.xlu0 %567
    %v569 = vsel %vm176, %v267, -inf
    %570 = vmax.xlane.f32.xlu0 %v569
    %v571 = vpop.xlane.xlu0 %570
    %v572 = vsel %vm176, %v316, -inf
    %573 = vmax.xlane.f32.xlu0 %v572
    %v574 = vpop.xlane.xlu0 %573
    %v575 = vsel %vm176, %v365, -inf
    %576 = vmax.xlane.f32.xlu0 %v575
    %v577 = vpop.xlane.xlu0 %576
    %v578 = vsel %vm176, %v414, -inf
    %579 = vmax.xlane.f32.xlu0 %v578
    %v580 = vpop.xlane.xlu0 %579
    %v581 = vsel %vm176, %v463, -inf
    %582 = vmax.xlane.f32.xlu0 %v581
    %v583 = vpop.xlane.xlu0 %582
    %v584 = vsel %vm176, %v512, -inf
    %585 = vmax.xlane.f32.xlu0 %v584
    %v586 = vpop.xlane.xlu0 %585
    %v587 = vsel %vm176, %v561, -inf
    %588 = vmax.xlane.f32.xlu0 %v587
    %v589 = vpop.xlane.xlu0 %588
    %v590 = vsub.f32 %v218, %v568
    %v591 = vsub.f32 %v267, %v571
    %v592 = vsub.f32 %v316, %v574
    %v593 = vsub.f32 %v365, %v577
    %v594 = vsub.f32 %v414, %v580
    %v595 = vsub.f32 %v463, %v583
    %v596 = vsub.f32 %v512, %v586
    %v597 = vsub.f32 %v561, %v589
    %v598 = vmul.f32 %v590, 1.442695
    %v599 = vpow.pop %v598
    %v600 = vmul.f32 %v591, 1.442695
    %v601 = vpow.pop %v600
    %v602 = vmul.f32 %v592, 1.442695
    %v603 = vpow.pop %v602
    %v604 = vmul.f32 %v593, 1.442695
    %v605 = vpow.pop %v604
    %v606 = vmul.f32 %v594, 1.442695
    %v607 = vpow.pop %v606
    %v608 = vmul.f32 %v595, 1.442695
    %v609 = vpow.pop %v608
    %v610 = vmul.f32 %v596, 1.442695
    %v611 = vpow.pop %v610
    %v612 = vmul.f32 %v597, 1.442695
    %v613 = vpow.pop %v612
    %v614 = vsel %vm176, %v599, 0.0
    %615 = vadd.xlane.f32.xlu0 %v614
    %v616 = vpop.xlane.xlu0 %615
    %v617 = vsel %vm176, %v601, 0.0
    %618 = vadd.xlane.f32.xlu0 %v617
    %v619 = vpop.xlane.xlu0 %618
    %v620 = vsel %vm176, %v603, 0.0
    %621 = vadd.xlane.f32.xlu0 %v620
    %v622 = vpop.xlane.xlu0 %621
    %v623 = vsel %vm176, %v605, 0.0
    %624 = vadd.xlane.f32.xlu0 %v623
    %v625 = vpop.xlane.xlu0 %624
    %v626 = vsel %vm176, %v607, 0.0
    %627 = vadd.xlane.f32.xlu0 %v626
    %v628 = vpop.xlane.xlu0 %627
    %v629 = vsel %vm176, %v609, 0.0
    %630 = vadd.xlane.f32.xlu0 %v629
    %v631 = vpop.xlane.xlu0 %630
    %v632 = vsel %vm176, %v611, 0.0
    %633 = vadd.xlane.f32.xlu0 %v632
    %v634 = vpop.xlane.xlu0 %633
    %v635 = vsel %vm176, %v613, 0.0
    %636 = vadd.xlane.f32.xlu0 %v635
    %v637 = vpop.xlane.xlu0 %636
    %v638 = vrcp.pop %v616
    %v639 = vmul.f32 %v599, %v638
    %v640 = vrcp.pop %v619
    %v641 = vmul.f32 %v601, %v640
    %v642 = vrcp.pop %v622
    %v643 = vmul.f32 %v603, %v642
    %v644 = vrcp.pop %v625
    %v645 = vmul.f32 %v605, %v644
    %v646 = vrcp.pop %v628
    %v647 = vmul.f32 %v607, %v646
    %v648 = vrcp.pop %v631
    %v649 = vmul.f32 %v609, %v648
    %v650 = vrcp.pop %v634
    %v651 = vmul.f32 %v611, %v650
    %v652 = vrcp.pop %v637
    %v653 = vmul.f32 %v613, %v652
    %v654 = vpack.c.bf16 %v639, %v639
    %v655 = vpack.c.bf16 %v641, %v641
    %v656 = vpack.c.bf16 %v643, %v643
    %v657 = vpack.c.bf16 %v645, %v645
    %v658 = vpack.c.bf16 %v647, %v647
    %v659 = vpack.c.bf16 %v649, %v649
    %v660 = vpack.c.bf16 %v651, %v651
    %v661 = vpack.c.bf16 %v653, %v653
    %vm662 = vcmask 60416
    %663 = vst.msk [vmem:[#allocation9] sm:$0xf] %vm662, %v654
    %664 = vst.msk [vmem:[#allocation9 + $0x4] sm:$0xf] %vm662, %v655
    %665 = vst.msk [vmem:[#allocation9 + $0x8] sm:$0xf] %vm662, %v656
    %666 = vst.msk [vmem:[#allocation9 + $0xc] sm:$0xf] %vm662, %v657
    %667 = vst.msk [vmem:[#allocation9 + $0x20] sm:$0xf] %vm662, %v658
    %668 = vst.msk [vmem:[#allocation9 + $0x24] sm:$0xf] %vm662, %v659
    %669 = vst.msk [vmem:[#allocation9 + $0x28] sm:$0xf] %vm662, %v660
    %670 = vst.msk [vmem:[#allocation9 + $0x2c] sm:$0xf] %vm662, %v661
    %671 = vrot.lane.b32.xlu0 %v165, 64
    %v672 = vpop.permute.xlu0 %671
    %v674 = vsel %vm176, %v654, 0
    %vm676 = vcmask 1043456
    %v678 = vsel %vm676, %v672, 0
    %680 = vmatprep.subr.bf16.mxu0 0
    %681 = vmatpush1.bf16.msra.mxu0 0
    %682 = vmatprep.subr.bf16.mxu0 0
    %683 = vmatpush1.bf16.msra.mxu0 0
    %684 = vmatprep.subr.bf16.mxu0 0
    %685 = vmatpush1.bf16.msra.mxu0 0
    %686 = vmatprep.subr.bf16.mxu0 0
    %687 = vmatpush1.bf16.msra.mxu0 0
    %688 = vmatprep.subr.bf16.mxu0 0
    %689 = vmatpush1.bf16.msra.mxu0 0
    %690 = vmatprep.subr.bf16.mxu0 0
    %691 = vmatpush1.bf16.msra.mxu0 0
    %692 = vmatprep.subr.bf16.mxu0 0
    %693 = vmatpush1.bf16.msra.mxu0 0
    %694 = vmatprep.subr.bf16.mxu0 0
    %695 = vmatpush1.bf16.msra.mxu0 %v678
    %696 = vmatprep.subr.bf16.mxu0 0
    %697 = vmatpush2.bf16.msra.mxu0 0
    %698 = vmatprep.subr.bf16.mxu0 0
    %699 = vmatpush2.bf16.msra.mxu0 0
    %700 = vmatprep.subr.bf16.mxu0 0
    %701 = vmatpush2.bf16.msra.mxu0 0
    %702 = vmatprep.subr.bf16.mxu0 0
    %703 = vmatpush2.bf16.msra.mxu0 0
    %704 = vmatprep.subr.bf16.mxu0 0
    %705 = vmatpush2.bf16.msra.mxu0 0
    %706 = vmatprep.subr.bf16.mxu0 0
    %707 = vmatpush2.bf16.msra.mxu0 0
    %708 = vmatprep.subr.bf16.mxu0 0
    %709 = vmatpush2.bf16.msra.mxu0 0
    %710 = vmatprep.subr.bf16.mxu0 0
    %711 = vmatpush2.bf16.msra.mxu0 0
    %712 = vmatprep.mubr.bf16.mxu0 0
    %713 = vmatmul.mubr.bf16.gmra.mxu0 %v674
    %v714 = vpop.f32.mrf.mxu0
    %v715 = vadd.f32 0.0, %v714
    %v716 = vpop.f32.mrf.mxu0
    %v717 = vpop.f32.mrf.mxu0
    %v718 = vpop.f32.mrf.mxu0
    %719 = vdwg.mxu0
    %720 = vrot.lane.b32.xlu0 %v166, 64
    %v721 = vpop.permute.xlu0 %720
    %v723 = vsel %vm176, %v655, 0
    %v726 = vsel %vm676, %v721, 0
    %728 = vmatprep.subr.bf16.mxu0 0
    %729 = vmatpush1.bf16.msra.mxu0 0
    %730 = vmatprep.subr.bf16.mxu0 0
    %731 = vmatpush1.bf16.msra.mxu0 0
    %732 = vmatprep.subr.bf16.mxu0 0
    %733 = vmatpush1.bf16.msra.mxu0 0
    %734 = vmatprep.subr.bf16.mxu0 0
    %735 = vmatpush1.bf16.msra.mxu0 0
    %736 = vmatprep.subr.bf16.mxu0 0
    %737 = vmatpush1.bf16.msra.mxu0 0
    %738 = vmatprep.subr.bf16.mxu0 0
    %739 = vmatpush1.bf16.msra.mxu0 0
    %740 = vmatprep.subr.bf16.mxu0 0
    %741 = vmatpush1.bf16.msra.mxu0 0
    %742 = vmatprep.subr.bf16.mxu0 0
    %743 = vmatpush1.bf16.msra.mxu0 %v726
    %744 = vmatprep.subr.bf16.mxu0 0
    %745 = vmatpush2.bf16.msra.mxu0 0
    %746 = vmatprep.subr.bf16.mxu0 0
    %747 = vmatpush2.bf16.msra.mxu0 0
    %748 = vmatprep.subr.bf16.mxu0 0
    %749 = vmatpush2.bf16.msra.mxu0 0
    %750 = vmatprep.subr.bf16.mxu0 0
    %751 = vmatpush2.bf16.msra.mxu0 0
    %752 = vmatprep.subr.bf16.mxu0 0
    %753 = vmatpush2.bf16.msra.mxu0 0
    %754 = vmatprep.subr.bf16.mxu0 0
    %755 = vmatpush2.bf16.msra.mxu0 0
    %756 = vmatprep.subr.bf16.mxu0 0
    %757 = vmatpush2.bf16.msra.mxu0 0
    %758 = vmatprep.subr.bf16.mxu0 0
    %759 = vmatpush2.bf16.msra.mxu0 0
    %760 = vmatprep.mubr.bf16.mxu0 0
    %761 = vmatmul.mubr.bf16.gmra.mxu0 %v723
    %v762 = vpop.f32.mrf.mxu0
    %v763 = vadd.f32 0.0, %v762
    %v764 = vpop.f32.mrf.mxu0
    %v765 = vpop.f32.mrf.mxu0
    %v766 = vpop.f32.mrf.mxu0
    %767 = vdwg.mxu0
    %768 = vrot.lane.b32.xlu0 %v167, 64
    %v769 = vpop.permute.xlu0 %768
    %v771 = vsel %vm176, %v656, 0
    %v774 = vsel %vm676, %v769, 0
    %776 = vmatprep.subr.bf16.mxu0 0
    %777 = vmatpush1.bf16.msra.mxu0 0
    %778 = vmatprep.subr.bf16.mxu0 0
    %779 = vmatpush1.bf16.msra.mxu0 0
    %780 = vmatprep.subr.bf16.mxu0 0
    %781 = vmatpush1.bf16.msra.mxu0 0
    %782 = vmatprep.subr.bf16.mxu0 0
    %783 = vmatpush1.bf16.msra.mxu0 0
    %784 = vmatprep.subr.bf16.mxu0 0
    %785 = vmatpush1.bf16.msra.mxu0 0
    %786 = vmatprep.subr.bf16.mxu0 0
    %787 = vmatpush1.bf16.msra.mxu0 0
    %788 = vmatprep.subr.bf16.mxu0 0
    %789 = vmatpush1.bf16.msra.mxu0 0
    %790 = vmatprep.subr.bf16.mxu0 0
    %791 = vmatpush1.bf16.msra.mxu0 %v774
    %792 = vmatprep.subr.bf16.mxu0 0
    %793 = vmatpush2.bf16.msra.mxu0 0
    %794 = vmatprep.subr.bf16.mxu0 0
    %795 = vmatpush2.bf16.msra.mxu0 0
    %796 = vmatprep.subr.bf16.mxu0 0
    %797 = vmatpush2.bf16.msra.mxu0 0
    %798 = vmatprep.subr.bf16.mxu0 0
    %799 = vmatpush2.bf16.msra.mxu0 0
    %800 = vmatprep.subr.bf16.mxu0 0
    %801 = vmatpush2.bf16.msra.mxu0 0
    %802 = vmatprep.subr.bf16.mxu0 0
    %803 = vmatpush2.bf16.msra.mxu0 0
    %804 = vmatprep.subr.bf16.mxu0 0
    %805 = vmatpush2.bf16.msra.mxu0 0
    %806 = vmatprep.subr.bf16.mxu0 0
    %807 = vmatpush2.bf16.msra.mxu0 0
    %808 = vmatprep.mubr.bf16.mxu0 0
    %809 = vmatmul.mubr.bf16.gmra.mxu0 %v771
    %v810 = vpop.f32.mrf.mxu0
    %v811 = vadd.f32 0.0, %v810
    %v812 = vpop.f32.mrf.mxu0
    %v813 = vpop.f32.mrf.mxu0
    %v814 = vpop.f32.mrf.mxu0
    %815 = vdwg.mxu0
    %816 = vrot.lane.b32.xlu0 %v168, 64
    %v817 = vpop.permute.xlu0 %816
    %v819 = vsel %vm176, %v657, 0
    %v822 = vsel %vm676, %v817, 0
    %824 = vmatprep.subr.bf16.mxu0 0
    %825 = vmatpush1.bf16.msra.mxu0 0
    %826 = vmatprep.subr.bf16.mxu0 0
    %827 = vmatpush1.bf16.msra.mxu0 0
    %828 = vmatprep.subr.bf16.mxu0 0
    %829 = vmatpush1.bf16.msra.mxu0 0
    %830 = vmatprep.subr.bf16.mxu0 0
    %831 = vmatpush1.bf16.msra.mxu0 0
    %832 = vmatprep.subr.bf16.mxu0 0
    %833 = vmatpush1.bf16.msra.mxu0 0
    %834 = vmatprep.subr.bf16.mxu0 0
    %835 = vmatpush1.bf16.msra.mxu0 0
    %836 = vmatprep.subr.bf16.mxu0 0
    %837 = vmatpush1.bf16.msra.mxu0 0
    %838 = vmatprep.subr.bf16.mxu0 0
    %839 = vmatpush1.bf16.msra.mxu0 %v822
    %840 = vmatprep.subr.bf16.mxu0 0
    %841 = vmatpush2.bf16.msra.mxu0 0
    %842 = vmatprep.subr.bf16.mxu0 0
    %843 = vmatpush2.bf16.msra.mxu0 0
    %844 = vmatprep.subr.bf16.mxu0 0
    %845 = vmatpush2.bf16.msra.mxu0 0
    %846 = vmatprep.subr.bf16.mxu0 0
    %847 = vmatpush2.bf16.msra.mxu0 0
    %848 = vmatprep.subr.bf16.mxu0 0
    %849 = vmatpush2.bf16.msra.mxu0 0
    %850 = vmatprep.subr.bf16.mxu0 0
    %851 = vmatpush2.bf16.msra.mxu0 0
    %852 = vmatprep.subr.bf16.mxu0 0
    %853 = vmatpush2.bf16.msra.mxu0 0
    %854 = vmatprep.subr.bf16.mxu0 0
    %855 = vmatpush2.bf16.msra.mxu0 0
    %856 = vmatprep.mubr.bf16.mxu0 0
    %857 = vmatmul.mubr.bf16.gmra.mxu0 %v819
    %v858 = vpop.f32.mrf.mxu0
    %v859 = vadd.f32 0.0, %v858
    %v860 = vpop.f32.mrf.mxu0
    %v861 = vpop.f32.mrf.mxu0
    %v862 = vpop.f32.mrf.mxu0
    %863 = vdwg.mxu0
    %864 = vrot.lane.b32.xlu0 %v169, 64
    %v865 = vpop.permute.xlu0 %864
    %v867 = vsel %vm176, %v658, 0
    %v870 = vsel %vm676, %v865, 0
    %872 = vmatprep.subr.bf16.mxu0 0
    %873 = vmatpush1.bf16.msra.mxu0 0
    %874 = vmatprep.subr.bf16.mxu0 0
    %875 = vmatpush1.bf16.msra.mxu0 0
    %876 = vmatprep.subr.bf16.mxu0 0
    %877 = vmatpush1.bf16.msra.mxu0 0
    %878 = vmatprep.subr.bf16.mxu0 0
    %879 = vmatpush1.bf16.msra.mxu0 0
    %880 = vmatprep.subr.bf16.mxu0 0
    %881 = vmatpush1.bf16.msra.mxu0 0
    %882 = vmatprep.subr.bf16.mxu0 0
    %883 = vmatpush1.bf16.msra.mxu0 0
    %884 = vmatprep.subr.bf16.mxu0 0
    %885 = vmatpush1.bf16.msra.mxu0 0
    %886 = vmatprep.subr.bf16.mxu0 0
    %887 = vmatpush1.bf16.msra.mxu0 %v870
    %888 = vmatprep.subr.bf16.mxu0 0
    %889 = vmatpush2.bf16.msra.mxu0 0
    %890 = vmatprep.subr.bf16.mxu0 0
    %891 = vmatpush2.bf16.msra.mxu0 0
    %892 = vmatprep.subr.bf16.mxu0 0
    %893 = vmatpush2.bf16.msra.mxu0 0
    %894 = vmatprep.subr.bf16.mxu0 0
    %895 = vmatpush2.bf16.msra.mxu0 0
    %896 = vmatprep.subr.bf16.mxu0 0
    %897 = vmatpush2.bf16.msra.mxu0 0
    %898 = vmatprep.subr.bf16.mxu0 0
    %899 = vmatpush2.bf16.msra.mxu0 0
    %900 = vmatprep.subr.bf16.mxu0 0
    %901 = vmatpush2.bf16.msra.mxu0 0
    %902 = vmatprep.subr.bf16.mxu0 0
    %903 = vmatpush2.bf16.msra.mxu0 0
    %904 = vmatprep.mubr.bf16.mxu0 0
    %905 = vmatmul.mubr.bf16.gmra.mxu0 %v867
    %v906 = vpop.f32.mrf.mxu0
    %v907 = vadd.f32 0.0, %v906
    %v908 = vpop.f32.mrf.mxu0
    %v909 = vpop.f32.mrf.mxu0
    %v910 = vpop.f32.mrf.mxu0
    %911 = vdwg.mxu0
    %912 = vrot.lane.b32.xlu0 %v170, 64
    %v913 = vpop.permute.xlu0 %912
    %v915 = vsel %vm176, %v659, 0
    %v918 = vsel %vm676, %v913, 0
    %920 = vmatprep.subr.bf16.mxu0 0
    %921 = vmatpush1.bf16.msra.mxu0 0
    %922 = vmatprep.subr.bf16.mxu0 0
    %923 = vmatpush1.bf16.msra.mxu0 0
    %924 = vmatprep.subr.bf16.mxu0 0
    %925 = vmatpush1.bf16.msra.mxu0 0
    %926 = vmatprep.subr.bf16.mxu0 0
    %927 = vmatpush1.bf16.msra.mxu0 0
    %928 = vmatprep.subr.bf16.mxu0 0
    %929 = vmatpush1.bf16.msra.mxu0 0
    %930 = vmatprep.subr.bf16.mxu0 0
    %931 = vmatpush1.bf16.msra.mxu0 0
    %932 = vmatprep.subr.bf16.mxu0 0
    %933 = vmatpush1.bf16.msra.mxu0 0
    %934 = vmatprep.subr.bf16.mxu0 0
    %935 = vmatpush1.bf16.msra.mxu0 %v918
    %936 = vmatprep.subr.bf16.mxu0 0
    %937 = vmatpush2.bf16.msra.mxu0 0
    %938 = vmatprep.subr.bf16.mxu0 0
    %939 = vmatpush2.bf16.msra.mxu0 0
    %940 = vmatprep.subr.bf16.mxu0 0
    %941 = vmatpush2.bf16.msra.mxu0 0
    %942 = vmatprep.subr.bf16.mxu0 0
    %943 = vmatpush2.bf16.msra.mxu0 0
    %944 = vmatprep.subr.bf16.mxu0 0
    %945 = vmatpush2.bf16.msra.mxu0 0
    %946 = vmatprep.subr.bf16.mxu0 0
    %947 = vmatpush2.bf16.msra.mxu0 0
    %948 = vmatprep.subr.bf16.mxu0 0
    %949 = vmatpush2.bf16.msra.mxu0 0
    %950 = vmatprep.subr.bf16.mxu0 0
    %951 = vmatpush2.bf16.msra.mxu0 0
    %952 = vmatprep.mubr.bf16.mxu0 0
    %953 = vmatmul.mubr.bf16.gmra.mxu0 %v915
    %v954 = vpop.f32.mrf.mxu0
    %v955 = vadd.f32 0.0, %v954
    %v956 = vpop.f32.mrf.mxu0
    %v957 = vpop.f32.mrf.mxu0
    %v958 = vpop.f32.mrf.mxu0
    %959 = vdwg.mxu0
    %960 = vrot.lane.b32.xlu0 %v171, 64
    %v961 = vpop.permute.xlu0 %960
    %v963 = vsel %vm176, %v660, 0
    %v966 = vsel %vm676, %v961, 0
    %968 = vmatprep.subr.bf16.mxu0 0
    %969 = vmatpush1.bf16.msra.mxu0 0
    %970 = vmatprep.subr.bf16.mxu0 0
    %971 = vmatpush1.bf16.msra.mxu0 0
    %972 = vmatprep.subr.bf16.mxu0 0
    %973 = vmatpush1.bf16.msra.mxu0 0
    %974 = vmatprep.subr.bf16.mxu0 0
    %975 = vmatpush1.bf16.msra.mxu0 0
    %976 = vmatprep.subr.bf16.mxu0 0
    %977 = vmatpush1.bf16.msra.mxu0 0
    %978 = vmatprep.subr.bf16.mxu0 0
    %979 = vmatpush1.bf16.msra.mxu0 0
    %980 = vmatprep.subr.bf16.mxu0 0
    %981 = vmatpush1.bf16.msra.mxu0 0
    %982 = vmatprep.subr.bf16.mxu0 0
    %983 = vmatpush1.bf16.msra.mxu0 %v966
    %984 = vmatprep.subr.bf16.mxu0 0
    %985 = vmatpush2.bf16.msra.mxu0 0
    %986 = vmatprep.subr.bf16.mxu0 0
    %987 = vmatpush2.bf16.msra.mxu0 0
    %988 = vmatprep.subr.bf16.mxu0 0
    %989 = vmatpush2.bf16.msra.mxu0 0
    %990 = vmatprep.subr.bf16.mxu0 0
    %991 = vmatpush2.bf16.msra.mxu0 0
    %992 = vmatprep.subr.bf16.mxu0 0
    %993 = vmatpush2.bf16.msra.mxu0 0
    %994 = vmatprep.subr.bf16.mxu0 0
    %995 = vmatpush2.bf16.msra.mxu0 0
    %996 = vmatprep.subr.bf16.mxu0 0
    %997 = vmatpush2.bf16.msra.mxu0 0
    %998 = vmatprep.subr.bf16.mxu0 0
    %999 = vmatpush2.bf16.msra.mxu0 0
    %1000 = vmatprep.mubr.bf16.mxu0 0
    %1001 = vmatmul.mubr.bf16.gmra.mxu0 %v963
    %v1002 = vpop.f32.mrf.mxu0
    %v1003 = vadd.f32 0.0, %v1002
    %v1004 = vpop.f32.mrf.mxu0
    %v1005 = vpop.f32.mrf.mxu0
    %v1006 = vpop.f32.mrf.mxu0
    %1007 = vdwg.mxu0
    %1008 = vrot.lane.b32.xlu0 %v172, 64
    %v1009 = vpop.permute.xlu0 %1008
    %v1011 = vsel %vm176, %v661, 0
    %v1014 = vsel %vm676, %v1009, 0
    %1016 = vmatprep.subr.bf16.mxu0 0
    %1017 = vmatpush1.bf16.msra.mxu0 0
    %1018 = vmatprep.subr.bf16.mxu0 0
    %1019 = vmatpush1.bf16.msra.mxu0 0
    %1020 = vmatprep.subr.bf16.mxu0 0
    %1021 = vmatpush1.bf16.msra.mxu0 0
    %1022 = vmatprep.subr.bf16.mxu0 0
    %1023 = vmatpush1.bf16.msra.mxu0 0
    %1024 = vmatprep.subr.bf16.mxu0 0
    %1025 = vmatpush1.bf16.msra.mxu0 0
    %1026 = vmatprep.subr.bf16.mxu0 0
    %1027 = vmatpush1.bf16.msra.mxu0 0
    %1028 = vmatprep.subr.bf16.mxu0 0
    %1029 = vmatpush1.bf16.msra.mxu0 0
    %1030 = vmatprep.subr.bf16.mxu0 0
    %1031 = vmatpush1.bf16.msra.mxu0 %v1014
    %1032 = vmatprep.subr.bf16.mxu0 0
    %1033 = vmatpush2.bf16.msra.mxu0 0
    %1034 = vmatprep.subr.bf16.mxu0 0
    %1035 = vmatpush2.bf16.msra.mxu0 0
    %1036 = vmatprep.subr.bf16.mxu0 0
    %1037 = vmatpush2.bf16.msra.mxu0 0
    %1038 = vmatprep.subr.bf16.mxu0 0
    %1039 = vmatpush2.bf16.msra.mxu0 0
    %1040 = vmatprep.subr.bf16.mxu0 0
    %1041 = vmatpush2.bf16.msra.mxu0 0
    %1042 = vmatprep.subr.bf16.mxu0 0
    %1043 = vmatpush2.bf16.msra.mxu0 0
    %1044 = vmatprep.subr.bf16.mxu0 0
    %1045 = vmatpush2.bf16.msra.mxu0 0
    %1046 = vmatprep.subr.bf16.mxu0 0
    %1047 = vmatpush2.bf16.msra.mxu0 0
    %1048 = vmatprep.mubr.bf16.mxu0 0
    %1049 = vmatmul.mubr.bf16.gmra.mxu0 %v1011
    %v1050 = vpop.f32.mrf.mxu0
    %v1051 = vadd.f32 0.0, %v1050
    %v1052 = vpop.f32.mrf.mxu0
    %v1053 = vpop.f32.mrf.mxu0
    %v1054 = vpop.f32.mrf.mxu0
    %1055 = vdwg.mxu0
    %1058 = vrot.lane.b32.xlu0 %v763, 8
    %v1059 = vpop.permute.xlu0 %1058
    %1060 = vrot.lane.b32.xlu0 %v955, 8
    %v1061 = vpop.permute.xlu0 %1060
    %1066 = vrot.lane.b32.xlu0 %v811, 16
    %v1067 = vpop.permute.xlu0 %1066
    %1068 = vrot.lane.b32.xlu0 %v1003, 16
    %v1069 = vpop.permute.xlu0 %1068
    %1074 = vrot.lane.b32.xlu0 %v859, 24
    %v1075 = vpop.permute.xlu0 %1074
    %1076 = vrot.lane.b32.xlu0 %v1051, 24
    %v1077 = vpop.permute.xlu0 %1076
    %v1080 = vsel %vm176, %v715, %v1059
    %v1081 = vsel %vm176, %v907, %v1061
    %vm1082 = vcmask 130048
    %v1083 = vsel %vm1082, %v1080, %v1067
    %v1084 = vsel %vm1082, %v1081, %v1069
    %vm1085 = vcmask 195584
    %v1086 = vsel %vm1085, %v1083, %v1075
    %v1087 = vsel %vm1085, %v1084, %v1077
    %v1088 = vpack.c.bf16 %v1087, %v1086
    %v1089 = vld [vmem:[%s3] sm:$0xf]
    %v1090 = vld [vmem:[%s3 + $0x4] sm:$0xf]
    %v1091 = vld [vmem:[%s3 + $0x8] sm:$0xf]
    %v1092 = vld [vmem:[%s3 + $0xc] sm:$0xf]
    %v1093 = vlaneseq
    %v1094 = vshrl.u32 %v1093, 7
    %v1095 = vsub.s32 1, %v1094
    %v1096 = vrot.slane %v78, %v1095
    %v1101 = vunpack.c.l.b16 %v1089
    %v1102 = vunpack.c.l.b16 %v1090
    %v1103 = vunpack.c.l.b16 %v1091
    %v1104 = vunpack.c.l.b16 %v1092
    %v1105 = vpack.c.b16 %v1102, %v1101
    %v1106 = vpack.c.b16 %v1104, %v1103
    %v1110 = vsel %vm100, %v1088, 0
    %1112 = vmatprep.subr.bf16.mxu0 0
    %1113 = vmatpush1.bf16.msra.mxu0 0
    %1114 = vmatprep.subr.bf16.mxu0 0
    %1115 = vmatpush1.bf16.msra.mxu0 0
    %1116 = vmatprep.subr.bf16.mxu0 0
    %1117 = vmatpush1.bf16.msra.mxu0 0
    %1118 = vmatprep.subr.bf16.mxu0 0
    %1119 = vmatpush1.bf16.msra.mxu0 0
    %1120 = vmatprep.subr.bf16.mxu0 0
    %1121 = vmatpush1.bf16.msra.mxu0 0
    %1122 = vmatprep.subr.bf16.mxu0 0
    %1123 = vmatpush1.bf16.msra.mxu0 0
    %1124 = vmatprep.subr.bf16.mxu0 0
    %1125 = vmatpush1.bf16.msra.mxu0 %v1106
    %1126 = vmatprep.subr.bf16.mxu0 0
    %1127 = vmatpush1.bf16.msra.mxu0 %v1105
    %1128 = vmatprep.subr.bf16.mxu0 0
    %1129 = vmatpush2.bf16.msra.mxu0 0
    %1130 = vmatprep.subr.bf16.mxu0 0
    %1131 = vmatpush2.bf16.msra.mxu0 0
    %1132 = vmatprep.subr.bf16.mxu0 0
    %1133 = vmatpush2.bf16.msra.mxu0 0
    %1134 = vmatprep.subr.bf16.mxu0 0
    %1135 = vmatpush2.bf16.msra.mxu0 0
    %1136 = vmatprep.subr.bf16.mxu0 0
    %1137 = vmatpush2.bf16.msra.mxu0 0
    %1138 = vmatprep.subr.bf16.mxu0 0
    %1139 = vmatpush2.bf16.msra.mxu0 0
    %1140 = vmatprep.subr.bf16.mxu0 0
    %1141 = vmatpush2.bf16.msra.mxu0 0
    %1142 = vmatprep.subr.bf16.mxu0 0
    %1143 = vmatpush2.bf16.msra.mxu0 0
    %1144 = vmatprep.mubr.bf16.mxu0 0
    %1145 = vmatmul.mubr.bf16.gmra.mxu0 %v1110
    %v1146 = vpop.f32.mrf.mxu0
    %v1147 = vadd.f32 %v1096, %v1146
    %v1148 = vpop.f32.mrf.mxu0
    %v1149 = vpop.f32.mrf.mxu0
    %v1150 = vadd.f32 %v1096, %v1149
    %v1151 = vpop.f32.mrf.mxu0
    %1152 = vdwg.mxu0
    %v1153 = vadd.f32 %v1147, %v76
    %v1154 = vadd.f32 %v1150, %v77
    %v1155 = vsel %vm100, %v1153, 0.0
    %1156 = vadd.xlane.f32.xlu0 %v1155
    %v1157 = vpop.xlane.xlu0 %1156
    %v1158 = vsel %vm100, %v1154, 0.0
    %1159 = vadd.xlane.f32.xlu0 %v1158
    %v1160 = vpop.xlane.xlu0 %1159
    %v1161 = vrcp.pop 32.0
    %v1162 = vmul.f32 %v1157, %v1161
    %v1163 = vmul.f32 %v1160, %v1161
    %v1164 = vsub.f32 %v1153, %v1162
    %v1165 = vsub.f32 %v1154, %v1163
    %v1166 = vmul.f32 %v1164, %v1164
    %v1167 = vmul.f32 %v1165, %v1165
    %v1168 = vsel %vm100, %v1166, 0.0
    %1169 = vadd.xlane.f32.xlu0 %v1168
    %v1170 = vpop.xlane.xlu0 %1169
    %v1171 = vsel %vm100, %v1167, 0.0
    %1172 = vadd.xlane.f32.xlu0 %v1171
    %v1173 = vpop.xlane.xlu0 %1172
    %v1174 = vmul.f32 %v1170, %v1161
    %v1175 = vmul.f32 %v1173, %v1161
    %v1176 = vadd.f32 %v1174, 1e-05
    %v1177 = vadd.f32 %v1175, 1e-05
    %v1178 = vrsqrt.pop %v1176
    %v1179 = vrsqrt.pop %v1177
    %v1180 = vmul.f32 %v1164, %v1178
    %v1181 = vmul.f32 %v1165, %v1179
    %v1182 = vlaneseq
    %v1183 = vshrl.u32 %v1182, 7
    %v1184 = vsub.s32 2, %v1183
    %v1185 = vrot.slane %v78, %v1184
    %v1186 = vmul.f32 %v1180, %v1185
    %v1187 = vmul.f32 %v1181, %v1185
    %v1188 = vlaneseq
    %v1189 = vshrl.u32 %v1188, 7
    %v1190 = vsub.s32 3, %v1189
    %v1191 = vrot.slane %v78, %v1190
    %v1192 = vadd.f32 %v1186, %v1191
    %v1193 = vadd.f32 %v1187, %v1191
    %v1194 = vpack.c.bf16 %v1193, %v1192
    %v1195 = vld [vmem:[%s4] sm:$0xf]
    %v1196 = vld [vmem:[%s4 + $0x4] sm:$0xf]
    %v1197 = vld [vmem:[%s4 + $0x8] sm:$0xf]
    %v1198 = vld [vmem:[%s4 + $0xc] sm:$0xf]
    %v1199 = vlaneseq
    %v1200 = vshrl.u32 %v1199, 7
    %v1201 = vsub.s32 4, %v1200
    %v1202 = vrot.slane %v78, %v1201
    %v1207 = vunpack.c.l.b16 %v1195
    %v1208 = vunpack.c.l.b16 %v1196
    %v1209 = vunpack.c.l.b16 %v1197
    %v1210 = vunpack.c.l.b16 %v1198
    %v1211 = vpack.c.b16 %v1208, %v1207
    %v1212 = vpack.c.b16 %v1210, %v1209
    %v1216 = vsel %vm100, %v1194, 0
    %1218 = vmatprep.subr.bf16.mxu0 0
    %1219 = vmatpush1.bf16.msra.mxu0 0
    %1220 = vmatprep.subr.bf16.mxu0 0
    %1221 = vmatpush1.bf16.msra.mxu0 0
    %1222 = vmatprep.subr.bf16.mxu0 0
    %1223 = vmatpush1.bf16.msra.mxu0 0
    %1224 = vmatprep.subr.bf16.mxu0 0
    %1225 = vmatpush1.bf16.msra.mxu0 0
    %1226 = vmatprep.subr.bf16.mxu0 0
    %1227 = vmatpush1.bf16.msra.mxu0 0
    %1228 = vmatprep.subr.bf16.mxu0 0
    %1229 = vmatpush1.bf16.msra.mxu0 0
    %1230 = vmatprep.subr.bf16.mxu0 0
    %1231 = vmatpush1.bf16.msra.mxu0 %v1212
    %1232 = vmatprep.subr.bf16.mxu0 0
    %1233 = vmatpush1.bf16.msra.mxu0 %v1211
    %1234 = vmatprep.subr.bf16.mxu0 0
    %1235 = vmatpush2.bf16.msra.mxu0 0
    %1236 = vmatprep.subr.bf16.mxu0 0
    %1237 = vmatpush2.bf16.msra.mxu0 0
    %1238 = vmatprep.subr.bf16.mxu0 0
    %1239 = vmatpush2.bf16.msra.mxu0 0
    %1240 = vmatprep.subr.bf16.mxu0 0
    %1241 = vmatpush2.bf16.msra.mxu0 0
    %1242 = vmatprep.subr.bf16.mxu0 0
    %1243 = vmatpush2.bf16.msra.mxu0 0
    %1244 = vmatprep.subr.bf16.mxu0 0
    %1245 = vmatpush2.bf16.msra.mxu0 0
    %1246 = vmatprep.subr.bf16.mxu0 0
    %1247 = vmatpush2.bf16.msra.mxu0 0
    %1248 = vmatprep.subr.bf16.mxu0 0
    %1249 = vmatpush2.bf16.msra.mxu0 0
    %1250 = vmatprep.mubr.bf16.mxu0 0
    %1251 = vmatmul.mubr.bf16.gmra.mxu0 %v1216
    %v1252 = vpop.f32.mrf.mxu0
    %v1253 = vadd.f32 %v1202, %v1252
    %v1254 = vpop.f32.mrf.mxu0
    %v1255 = vpop.f32.mrf.mxu0
    %v1256 = vadd.f32 %v1202, %v1255
    %v1257 = vpop.f32.mrf.mxu0
    %1258 = vdwg.mxu0
    %v1259 = vmax.f32 %v1253, 0.0
    %v1260 = vmax.f32 %v1256, 0.0
    %v1261 = vpack.c.bf16 %v1260, %v1259
    %v1262 = vld [vmem:[%s5] sm:$0xf]
    %v1263 = vld [vmem:[%s5 + $0x4] sm:$0xf]
    %v1264 = vld [vmem:[%s5 + $0x8] sm:$0xf]
    %v1265 = vld [vmem:[%s5 + $0xc] sm:$0xf]
    %v1266 = vld [vmem:[%s5 + $0x10] sm:$0xf]
    %v1267 = vld [vmem:[%s5 + $0x14] sm:$0xf]
    %v1268 = vld [vmem:[%s5 + $0x18] sm:$0xf]
    %v1269 = vld [vmem:[%s5 + $0x1c] sm:$0xf]
    %v1270 = vlaneseq
    %v1271 = vshrl.u32 %v1270, 7
    %v1272 = vsub.s32 5, %v1271
    %v1273 = vrot.slane %v78, %v1272
    %v1282 = vunpack.c.l.b16 %v1262
    %v1283 = vunpack.c.l.b16 %v1263
    %v1284 = vunpack.c.l.b16 %v1264
    %v1285 = vunpack.c.l.b16 %v1265
    %v1286 = vunpack.c.l.b16 %v1266
    %v1287 = vunpack.c.l.b16 %v1267
    %v1288 = vunpack.c.l.b16 %v1268
    %v1289 = vunpack.c.l.b16 %v1269
    %v1290 = vpack.c.b16 %v1283, %v1282
    %v1291 = vpack.c.b16 %v1285, %v1284
    %v1292 = vpack.c.b16 %v1287, %v1286
    %v1293 = vpack.c.b16 %v1289, %v1288
    %vm1298 = vcmask 523264
    %v1300 = vsel %vm1298, %v1261, 0
    %1302 = vmatprep.subr.bf16.mxu0 0
    %1303 = vmatpush1.bf16.msra.mxu0 0
    %1304 = vmatprep.subr.bf16.mxu0 0
    %1305 = vmatpush1.bf16.msra.mxu0 0
    %1306 = vmatprep.subr.bf16.mxu0 0
    %1307 = vmatpush1.bf16.msra.mxu0 0
    %1308 = vmatprep.subr.bf16.mxu0 0
    %1309 = vmatpush1.bf16.msra.mxu0 0
    %1310 = vmatprep.subr.bf16.mxu0 0
    %1311 = vmatpush1.bf16.msra.mxu0 %v1293
    %1312 = vmatprep.subr.bf16.mxu0 0
    %1313 = vmatpush1.bf16.msra.mxu0 %v1292
    %1314 = vmatprep.subr.bf16.mxu0 0
    %1315 = vmatpush1.bf16.msra.mxu0 %v1291
    %1316 = vmatprep.subr.bf16.mxu0 0
    %1317 = vmatpush1.bf16.msra.mxu0 %v1290
    %1318 = vmatprep.subr.bf16.mxu0 0
    %1319 = vmatpush2.bf16.msra.mxu0 0
    %1320 = vmatprep.subr.bf16.mxu0 0
    %1321 = vmatpush2.bf16.msra.mxu0 0
    %1322 = vmatprep.subr.bf16.mxu0 0
    %1323 = vmatpush2.bf16.msra.mxu0 0
    %1324 = vmatprep.subr.bf16.mxu0 0
    %1325 = vmatpush2.bf16.msra.mxu0 0
    %1326 = vmatprep.subr.bf16.mxu0 0
    %1327 = vmatpush2.bf16.msra.mxu0 0
    %1328 = vmatprep.subr.bf16.mxu0 0
    %1329 = vmatpush2.bf16.msra.mxu0 0
    %1330 = vmatprep.subr.bf16.mxu0 0
    %1331 = vmatpush2.bf16.msra.mxu0 0
    %1332 = vmatprep.subr.bf16.mxu0 0
    %1333 = vmatpush2.bf16.msra.mxu0 0
    %1334 = vmatprep.mubr.bf16.mxu0 0
    %1335 = vmatmul.mubr.bf16.gmra.mxu0 %v1300
    %v1336 = vpop.f32.mrf.mxu0
    %v1337 = vadd.f32 %v1273, %v1336
    %v1338 = vpop.f32.mrf.mxu0
    %v1339 = vpop.f32.mrf.mxu0
    %v1340 = vadd.f32 %v1273, %v1339
    %v1341 = vpop.f32.mrf.mxu0
    %1342 = vdwg.mxu0
    %v1343 = vadd.f32 %v1337, %v1192
    %v1344 = vadd.f32 %v1340, %v1193
    %v1345 = vsel %vm100, %v1343, 0.0
    %1346 = vadd.xlane.f32.xlu0 %v1345
    %v1347 = vpop.xlane.xlu0 %1346
    %v1348 = vsel %vm100, %v1344, 0.0
    %1349 = vadd.xlane.f32.xlu0 %v1348
    %v1350 = vpop.xlane.xlu0 %1349
    %v1351 = vmul.f32 %v1347, %v1161
    %v1352 = vmul.f32 %v1350, %v1161
    %v1353 = vsub.f32 %v1343, %v1351
    %v1354 = vsub.f32 %v1344, %v1352
    %v1355 = vmul.f32 %v1353, %v1353
    %v1356 = vmul.f32 %v1354, %v1354
    %v1357 = vsel %vm100, %v1355, 0.0
    %1358 = vadd.xlane.f32.xlu0 %v1357
    %v1359 = vpop.xlane.xlu0 %1358
    %v1360 = vsel %vm100, %v1356, 0.0
    %1361 = vadd.xlane.f32.xlu0 %v1360
    %v1362 = vpop.xlane.xlu0 %1361
    %v1363 = vmul.f32 %v1359, %v1161
    %v1364 = vmul.f32 %v1362, %v1161
    %v1365 = vadd.f32 %v1363, 1e-05
    %v1366 = vadd.f32 %v1364, 1e-05
    %v1367 = vrsqrt.pop %v1365
    %v1368 = vrsqrt.pop %v1366
    %v1369 = vmul.f32 %v1353, %v1367
    %v1370 = vmul.f32 %v1354, %v1368
    %v1371 = vlaneseq
    %v1372 = vshrl.u32 %v1371, 7
    %v1373 = vsub.s32 6, %v1372
    %v1374 = vrot.slane %v78, %v1373
    %v1375 = vmul.f32 %v1369, %v1374
    %v1376 = vmul.f32 %v1370, %v1374
    %v1377 = vlaneseq
    %v1378 = vshrl.u32 %v1377, 7
    %v1379 = vsub.s32 7, %v1378
    %v1380 = vrot.slane %v78, %v1379
    %v1381 = vadd.f32 %v1375, %v1380
    %v1382 = vadd.f32 %v1376, %v1380
    %s1383 = scalar_lea.vmem [#allocation7], 8
    %v1384 = vld [vmem:[%s1383] sm:$0xff]
    %v1385 = vpack.c.bf16 %v1382, %v1381
    %s1386 = scalar_lea.vmem %s2, 16
    %v1387 = vld [vmem:[%s1386] sm:$0xf]
    %v1388 = vld [vmem:[%s1386 + $0x4] sm:$0xf]
    %v1389 = vld [vmem:[%s1386 + $0x8] sm:$0xf]
    %v1390 = vld [vmem:[%s1386 + $0xc] sm:$0xf]
    %v1391 = vlaneseq
    %v1392 = vshrl.u32 %v1391, 7
    %v1393 = vsub.s32 0, %v1392
    %v1394 = vrot.slane %v1384, %v1393
    %v1399 = vunpack.c.l.b16 %v1387
    %v1400 = vunpack.c.l.b16 %v1388
    %v1401 = vunpack.c.l.b16 %v1389
    %v1402 = vunpack.c.l.b16 %v1390
    %v1403 = vpack.c.b16 %v1400, %v1399
    %v1404 = vpack.c.b16 %v1402, %v1401
    %v1408 = vsel %vm100, %v1385, 0
    %1410 = vmatprep.subr.bf16.mxu0 0
    %1411 = vmatpush1.bf16.msra.mxu0 0
    %1412 = vmatprep.subr.bf16.mxu0 0
    %1413 = vmatpush1.bf16.msra.mxu0 0
    %1414 = vmatprep.subr.bf16.mxu0 0
    %1415 = vmatpush1.bf16.msra.mxu0 0
    %1416 = vmatprep.subr.bf16.mxu0 0
    %1417 = vmatpush1.bf16.msra.mxu0 0
    %1418 = vmatprep.subr.bf16.mxu0 0
    %1419 = vmatpush1.bf16.msra.mxu0 0
    %1420 = vmatprep.subr.bf16.mxu0 0
    %1421 = vmatpush1.bf16.msra.mxu0 0
    %1422 = vmatprep.subr.bf16.mxu0 0
    %1423 = vmatpush1.bf16.msra.mxu0 %v1404
    %1424 = vmatprep.subr.bf16.mxu0 0
    %1425 = vmatpush1.bf16.msra.mxu0 %v1403
    %1426 = vmatprep.subr.bf16.mxu0 0
    %1427 = vmatpush2.bf16.msra.mxu0 0
    %1428 = vmatprep.subr.bf16.mxu0 0
    %1429 = vmatpush2.bf16.msra.mxu0 0
    %1430 = vmatprep.subr.bf16.mxu0 0
    %1431 = vmatpush2.bf16.msra.mxu0 0
    %1432 = vmatprep.subr.bf16.mxu0 0
    %1433 = vmatpush2.bf16.msra.mxu0 0
    %1434 = vmatprep.subr.bf16.mxu0 0
    %1435 = vmatpush2.bf16.msra.mxu0 0
    %1436 = vmatprep.subr.bf16.mxu0 0
    %1437 = vmatpush2.bf16.msra.mxu0 0
    %1438 = vmatprep.subr.bf16.mxu0 0
    %1439 = vmatpush2.bf16.msra.mxu0 0
    %1440 = vmatprep.subr.bf16.mxu0 0
    %1441 = vmatpush2.bf16.msra.mxu0 0
    %1442 = vmatprep.mubr.bf16.mxu0 0
    %1443 = vmatmul.mubr.bf16.gmra.mxu0 %v1408
    %v1444 = vpop.f32.mrf.mxu0
    %v1445 = vadd.f32 %v1394, %v1444
    %v1446 = vpop.f32.mrf.mxu0
    %v1447 = vpop.f32.mrf.mxu0
    %v1448 = vadd.f32 %v1394, %v1447
    %v1449 = vpop.f32.mrf.mxu0
    %1450 = vdwg.mxu0
    %1453 = vrot.lane.b32.xlu0 %v1445, 120
    %v1454 = vpop.permute.xlu0 %1453
    %1455 = vrot.lane.b32.xlu0 %v1448, 120
    %v1456 = vpop.permute.xlu0 %1455
    %1459 = vrot.lane.b32.xlu0 %v1445, 112
    %v1460 = vpop.permute.xlu0 %1459
    %1461 = vrot.lane.b32.xlu0 %v1448, 112
    %v1462 = vpop.permute.xlu0 %1461
    %1465 = vrot.lane.b32.xlu0 %v1445, 104
    %v1466 = vpop.permute.xlu0 %1465
    %1467 = vrot.lane.b32.xlu0 %v1448, 104
    %v1468 = vpop.permute.xlu0 %1467
    %v1471 = vpack.c.bf16 %v1445, %v1445
    %v1472 = vpack.c.bf16 %v1454, %v1454
    %v1473 = vpack.c.bf16 %v1460, %v1460
    %v1474 = vpack.c.bf16 %v1466, %v1466
    %v1475 = vpack.c.bf16 %v1448, %v1448
    %v1476 = vpack.c.bf16 %v1456, %v1456
    %v1477 = vpack.c.bf16 %v1462, %v1462
    %v1478 = vpack.c.bf16 %v1468, %v1468
    %1480 = vrot.lane.b32.xlu0 %v1471, 96
    %v1481 = vpop.permute.xlu0 %1480
    %v1483 = vsel %vm176, %v1471, 0
    %v1486 = vsel %vm176, %v1481, 0
    %1488 = vmatprep.subr.bf16.mxu0 0
    %1489 = vmatpush1.bf16.xpose.msra.mxu0 0
    %1490 = vmatprep.subr.bf16.mxu0 0
    %1491 = vmatpush1.bf16.xpose.msra.mxu0 0
    %1492 = vmatprep.subr.bf16.mxu0 0
    %1493 = vmatpush1.bf16.xpose.msra.mxu0 0
    %1494 = vmatprep.subr.bf16.mxu0 0
    %1495 = vmatpush1.bf16.xpose.msra.mxu0 0
    %1496 = vmatprep.subr.bf16.mxu0 0
    %1497 = vmatpush1.bf16.xpose.msra.mxu0 0
    %1498 = vmatprep.subr.bf16.mxu0 0
    %1499 = vmatpush1.bf16.xpose.msra.mxu0 0
    %1500 = vmatprep.subr.bf16.mxu0 0
    %1501 = vmatpush1.bf16.xpose.msra.mxu0 0
    %1502 = vmatprep.subr.bf16.mxu0 0
    %1503 = vmatpush1.bf16.xpose.msra.mxu0 %v1486
    %1504 = vmatprep.subr.bf16.mxu0 0
    %1505 = vmatpush2.bf16.xpose.msra.mxu0 0
    %1506 = vmatprep.subr.bf16.mxu0 0
    %1507 = vmatpush2.bf16.xpose.msra.mxu0 0
    %1508 = vmatprep.subr.bf16.mxu0 0
    %1509 = vmatpush2.bf16.xpose.msra.mxu0 0
    %1510 = vmatprep.subr.bf16.mxu0 0
    %1511 = vmatpush2.bf16.xpose.msra.mxu0 0
    %1512 = vmatprep.subr.bf16.mxu0 0
    %1513 = vmatpush2.bf16.xpose.msra.mxu0 0
    %1514 = vmatprep.subr.bf16.mxu0 0
    %1515 = vmatpush2.bf16.xpose.msra.mxu0 0
    %1516 = vmatprep.subr.bf16.mxu0 0
    %1517 = vmatpush2.bf16.xpose.msra.mxu0 0
    %1518 = vmatprep.subr.bf16.mxu0 0
    %1519 = vmatpush2.bf16.xpose.msra.mxu0 0
    %1520 = vmatprep.mubr.bf16.mxu0 0
    %1521 = vmatmul.mubr.bf16.gmra.mxu0 %v1483
    %v1522 = vpop.f32.mrf.mxu0
    %v1523 = vadd.f32 0.0, %v1522
    %v1524 = vpop.f32.mrf.mxu0
    %v1525 = vpop.f32.mrf.mxu0
    %v1526 = vpop.f32.mrf.mxu0
    %1527 = vdwg.mxu0
    %1529 = vrot.lane.b32.xlu0 %v1472, 96
    %v1530 = vpop.permute.xlu0 %1529
    %v1532 = vsel %vm176, %v1472, 0
    %v1535 = vsel %vm176, %v1530, 0
    %1537 = vmatprep.subr.bf16.mxu0 0
    %1538 = vmatpush1.bf16.xpose.msra.mxu0 0
    %1539 = vmatprep.subr.bf16.mxu0 0
    %1540 = vmatpush1.bf16.xpose.msra.mxu0 0
    %1541 = vmatprep.subr.bf16.mxu0 0
    %1542 = vmatpush1.bf16.xpose.msra.mxu0 0
    %1543 = vmatprep.subr.bf16.mxu0 0
    %1544 = vmatpush1.bf16.xpose.msra.mxu0 0
    %1545 = vmatprep.subr.bf16.mxu0 0
    %1546 = vmatpush1.bf16.xpose.msra.mxu0 0
    %1547 = vmatprep.subr.bf16.mxu0 0
    %1548 = vmatpush1.bf16.xpose.msra.mxu0 0
    %1549 = vmatprep.subr.bf16.mxu0 0
    %1550 = vmatpush1.bf16.xpose.msra.mxu0 0
    %1551 = vmatprep.subr.bf16.mxu0 0
    %1552 = vmatpush1.bf16.xpose.msra.mxu0 %v1535
    %1553 = vmatprep.subr.bf16.mxu0 0
    %1554 = vmatpush2.bf16.xpose.msra.mxu0 0
    %1555 = vmatprep.subr.bf16.mxu0 0
    %1556 = vmatpush2.bf16.xpose.msra.mxu0 0
    %1557 = vmatprep.subr.bf16.mxu0 0
    %1558 = vmatpush2.bf16.xpose.msra.mxu0 0
    %1559 = vmatprep.subr.bf16.mxu0 0
    %1560 = vmatpush2.bf16.xpose.msra.mxu0 0
    %1561 = vmatprep.subr.bf16.mxu0 0
    %1562 = vmatpush2.bf16.xpose.msra.mxu0 0
    %1563 = vmatprep.subr.bf16.mxu0 0
    %1564 = vmatpush2.bf16.xpose.msra.mxu0 0
    %1565 = vmatprep.subr.bf16.mxu0 0
    %1566 = vmatpush2.bf16.xpose.msra.mxu0 0
    %1567 = vmatprep.subr.bf16.mxu0 0
    %1568 = vmatpush2.bf16.xpose.msra.mxu0 0
    %1569 = vmatprep.mubr.bf16.mxu0 0
    %1570 = vmatmul.mubr.bf16.gmra.mxu0 %v1532
    %v1571 = vpop.f32.mrf.mxu0
    %v1572 = vadd.f32 0.0, %v1571
    %v1573 = vpop.f32.mrf.mxu0
    %v1574 = vpop.f32.mrf.mxu0
    %v1575 = vpop.f32.mrf.mxu0
    %1576 = vdwg.mxu0
    %1578 = vrot.lane.b32.xlu0 %v1473, 96
    %v1579 = vpop.permute.xlu0 %1578
    %v1581 = vsel %vm176, %v1473, 0
    %v1584 = vsel %vm176, %v1579, 0
    %1586 = vmatprep.subr.bf16.mxu0 0
    %1587 = vmatpush1.bf16.xpose.msra.mxu0 0
    %1588 = vmatprep.subr.bf16.mxu0 0
    %1589 = vmatpush1.bf16.xpose.msra.mxu0 0
    %1590 = vmatprep.subr.bf16.mxu0 0
    %1591 = vmatpush1.bf16.xpose.msra.mxu0 0
    %1592 = vmatprep.subr.bf16.mxu0 0
    %1593 = vmatpush1.bf16.xpose.msra.mxu0 0
    %1594 = vmatprep.subr.bf16.mxu0 0
    %1595 = vmatpush1.bf16.xpose.msra.mxu0 0
    %1596 = vmatprep.subr.bf16.mxu0 0
    %1597 = vmatpush1.bf16.xpose.msra.mxu0 0
    %1598 = vmatprep.subr.bf16.mxu0 0
    %1599 = vmatpush1.bf16.xpose.msra.mxu0 0
    %1600 = vmatprep.subr.bf16.mxu0 0
    %1601 = vmatpush1.bf16.xpose.msra.mxu0 %v1584
    %1602 = vmatprep.subr.bf16.mxu0 0
    %1603 = vmatpush2.bf16.xpose.msra.mxu0 0
    %1604 = vmatprep.subr.bf16.mxu0 0
    %1605 = vmatpush2.bf16.xpose.msra.mxu0 0
    %1606 = vmatprep.subr.bf16.mxu0 0
    %1607 = vmatpush2.bf16.xpose.msra.mxu0 0
    %1608 = vmatprep.subr.bf16.mxu0 0
    %1609 = vmatpush2.bf16.xpose.msra.mxu0 0
    %1610 = vmatprep.subr.bf16.mxu0 0
    %1611 = vmatpush2.bf16.xpose.msra.mxu0 0
    %1612 = vmatprep.subr.bf16.mxu0 0
    %1613 = vmatpush2.bf16.xpose.msra.mxu0 0
    %1614 = vmatprep.subr.bf16.mxu0 0
    %1615 = vmatpush2.bf16.xpose.msra.mxu0 0
    %1616 = vmatprep.subr.bf16.mxu0 0
    %1617 = vmatpush2.bf16.xpose.msra.mxu0 0
    %1618 = vmatprep.mubr.bf16.mxu0 0
    %1619 = vmatmul.mubr.bf16.gmra.mxu0 %v1581
    %v1620 = vpop.f32.mrf.mxu0
    %v1621 = vadd.f32 0.0, %v1620
    %v1622 = vpop.f32.mrf.mxu0
    %v1623 = vpop.f32.mrf.mxu0
    %v1624 = vpop.f32.mrf.mxu0
    %1625 = vdwg.mxu0
    %1627 = vrot.lane.b32.xlu0 %v1474, 96
    %v1628 = vpop.permute.xlu0 %1627
    %v1630 = vsel %vm176, %v1474, 0
    %v1633 = vsel %vm176, %v1628, 0
    %1635 = vmatprep.subr.bf16.mxu0 0
    %1636 = vmatpush1.bf16.xpose.msra.mxu0 0
    %1637 = vmatprep.subr.bf16.mxu0 0
    %1638 = vmatpush1.bf16.xpose.msra.mxu0 0
    %1639 = vmatprep.subr.bf16.mxu0 0
    %1640 = vmatpush1.bf16.xpose.msra.mxu0 0
    %1641 = vmatprep.subr.bf16.mxu0 0
    %1642 = vmatpush1.bf16.xpose.msra.mxu0 0
    %1643 = vmatprep.subr.bf16.mxu0 0
    %1644 = vmatpush1.bf16.xpose.msra.mxu0 0
    %1645 = vmatprep.subr.bf16.mxu0 0
    %1646 = vmatpush1.bf16.xpose.msra.mxu0 0
    %1647 = vmatprep.subr.bf16.mxu0 0
    %1648 = vmatpush1.bf16.xpose.msra.mxu0 0
    %1649 = vmatprep.subr.bf16.mxu0 0
    %1650 = vmatpush1.bf16.xpose.msra.mxu0 %v1633
    %1651 = vmatprep.subr.bf16.mxu0 0
    %1652 = vmatpush2.bf16.xpose.msra.mxu0 0
    %1653 = vmatprep.subr.bf16.mxu0 0
    %1654 = vmatpush2.bf16.xpose.msra.mxu0 0
    %1655 = vmatprep.subr.bf16.mxu0 0
    %1656 = vmatpush2.bf16.xpose.msra.mxu0 0
    %1657 = vmatprep.subr.bf16.mxu0 0
    %1658 = vmatpush2.bf16.xpose.msra.mxu0 0
    %1659 = vmatprep.subr.bf16.mxu0 0
    %1660 = vmatpush2.bf16.xpose.msra.mxu0 0
    %1661 = vmatprep.subr.bf16.mxu0 0
    %1662 = vmatpush2.bf16.xpose.msra.mxu0 0
    %1663 = vmatprep.subr.bf16.mxu0 0
    %1664 = vmatpush2.bf16.xpose.msra.mxu0 0
    %1665 = vmatprep.subr.bf16.mxu0 0
    %1666 = vmatpush2.bf16.xpose.msra.mxu0 0
    %1667 = vmatprep.mubr.bf16.mxu0 0
    %1668 = vmatmul.mubr.bf16.gmra.mxu0 %v1630
    %v1669 = vpop.f32.mrf.mxu0
    %v1670 = vadd.f32 0.0, %v1669
    %v1671 = vpop.f32.mrf.mxu0
    %v1672 = vpop.f32.mrf.mxu0
    %v1673 = vpop.f32.mrf.mxu0
    %1674 = vdwg.mxu0
    %1676 = vrot.lane.b32.xlu0 %v1475, 96
    %v1677 = vpop.permute.xlu0 %1676
    %v1679 = vsel %vm176, %v1475, 0
    %v1682 = vsel %vm176, %v1677, 0
    %1684 = vmatprep.subr.bf16.mxu0 0
    %1685 = vmatpush1.bf16.xpose.msra.mxu0 0
    %1686 = vmatprep.subr.bf16.mxu0 0
    %1687 = vmatpush1.bf16.xpose.msra.mxu0 0
    %1688 = vmatprep.subr.bf16.mxu0 0
    %1689 = vmatpush1.bf16.xpose.msra.mxu0 0
    %1690 = vmatprep.subr.bf16.mxu0 0
    %1691 = vmatpush1.bf16.xpose.msra.mxu0 0
    %1692 = vmatprep.subr.bf16.mxu0 0
    %1693 = vmatpush1.bf16.xpose.msra.mxu0 0
    %1694 = vmatprep.subr.bf16.mxu0 0
    %1695 = vmatpush1.bf16.xpose.msra.mxu0 0
    %1696 = vmatprep.subr.bf16.mxu0 0
    %1697 = vmatpush1.bf16.xpose.msra.mxu0 0
    %1698 = vmatprep.subr.bf16.mxu0 0
    %1699 = vmatpush1.bf16.xpose.msra.mxu0 %v1682
    %1700 = vmatprep.subr.bf16.mxu0 0
    %1701 = vmatpush2.bf16.xpose.msra.mxu0 0
    %1702 = vmatprep.subr.bf16.mxu0 0
    %1703 = vmatpush2.bf16.xpose.msra.mxu0 0
    %1704 = vmatprep.subr.bf16.mxu0 0
    %1705 = vmatpush2.bf16.xpose.msra.mxu0 0
    %1706 = vmatprep.subr.bf16.mxu0 0
    %1707 = vmatpush2.bf16.xpose.msra.mxu0 0
    %1708 = vmatprep.subr.bf16.mxu0 0
    %1709 = vmatpush2.bf16.xpose.msra.mxu0 0
    %1710 = vmatprep.subr.bf16.mxu0 0
    %1711 = vmatpush2.bf16.xpose.msra.mxu0 0
    %1712 = vmatprep.subr.bf16.mxu0 0
    %1713 = vmatpush2.bf16.xpose.msra.mxu0 0
    %1714 = vmatprep.subr.bf16.mxu0 0
    %1715 = vmatpush2.bf16.xpose.msra.mxu0 0
    %1716 = vmatprep.mubr.bf16.mxu0 0
    %1717 = vmatmul.mubr.bf16.gmra.mxu0 %v1679
    %v1718 = vpop.f32.mrf.mxu0
    %v1719 = vadd.f32 0.0, %v1718
    %v1720 = vpop.f32.mrf.mxu0
    %v1721 = vpop.f32.mrf.mxu0
    %v1722 = vpop.f32.mrf.mxu0
    %1723 = vdwg.mxu0
    %1725 = vrot.lane.b32.xlu0 %v1476, 96
    %v1726 = vpop.permute.xlu0 %1725
    %v1728 = vsel %vm176, %v1476, 0
    %v1731 = vsel %vm176, %v1726, 0
    %1733 = vmatprep.subr.bf16.mxu0 0
    %1734 = vmatpush1.bf16.xpose.msra.mxu0 0
    %1735 = vmatprep.subr.bf16.mxu0 0
    %1736 = vmatpush1.bf16.xpose.msra.mxu0 0
    %1737 = vmatprep.subr.bf16.mxu0 0
    %1738 = vmatpush1.bf16.xpose.msra.mxu0 0
    %1739 = vmatprep.subr.bf16.mxu0 0
    %1740 = vmatpush1.bf16.xpose.msra.mxu0 0
    %1741 = vmatprep.subr.bf16.mxu0 0
    %1742 = vmatpush1.bf16.xpose.msra.mxu0 0
    %1743 = vmatprep.subr.bf16.mxu0 0
    %1744 = vmatpush1.bf16.xpose.msra.mxu0 0
    %1745 = vmatprep.subr.bf16.mxu0 0
    %1746 = vmatpush1.bf16.xpose.msra.mxu0 0
    %1747 = vmatprep.subr.bf16.mxu0 0
    %1748 = vmatpush1.bf16.xpose.msra.mxu0 %v1731
    %1749 = vmatprep.subr.bf16.mxu0 0
    %1750 = vmatpush2.bf16.xpose.msra.mxu0 0
    %1751 = vmatprep.subr.bf16.mxu0 0
    %1752 = vmatpush2.bf16.xpose.msra.mxu0 0
    %1753 = vmatprep.subr.bf16.mxu0 0
    %1754 = vmatpush2.bf16.xpose.msra.mxu0 0
    %1755 = vmatprep.subr.bf16.mxu0 0
    %1756 = vmatpush2.bf16.xpose.msra.mxu0 0
    %1757 = vmatprep.subr.bf16.mxu0 0
    %1758 = vmatpush2.bf16.xpose.msra.mxu0 0
    %1759 = vmatprep.subr.bf16.mxu0 0
    %1760 = vmatpush2.bf16.xpose.msra.mxu0 0
    %1761 = vmatprep.subr.bf16.mxu0 0
    %1762 = vmatpush2.bf16.xpose.msra.mxu0 0
    %1763 = vmatprep.subr.bf16.mxu0 0
    %1764 = vmatpush2.bf16.xpose.msra.mxu0 0
    %1765 = vmatprep.mubr.bf16.mxu0 0
    %1766 = vmatmul.mubr.bf16.gmra.mxu0 %v1728
    %v1767 = vpop.f32.mrf.mxu0
    %v1768 = vadd.f32 0.0, %v1767
    %v1769 = vpop.f32.mrf.mxu0
    %v1770 = vpop.f32.mrf.mxu0
    %v1771 = vpop.f32.mrf.mxu0
    %1772 = vdwg.mxu0
    %1774 = vrot.lane.b32.xlu0 %v1477, 96
    %v1775 = vpop.permute.xlu0 %1774
    %v1777 = vsel %vm176, %v1477, 0
    %v1780 = vsel %vm176, %v1775, 0
    %1782 = vmatprep.subr.bf16.mxu0 0
    %1783 = vmatpush1.bf16.xpose.msra.mxu0 0
    %1784 = vmatprep.subr.bf16.mxu0 0
    %1785 = vmatpush1.bf16.xpose.msra.mxu0 0
    %1786 = vmatprep.subr.bf16.mxu0 0
    %1787 = vmatpush1.bf16.xpose.msra.mxu0 0
    %1788 = vmatprep.subr.bf16.mxu0 0
    %1789 = vmatpush1.bf16.xpose.msra.mxu0 0
    %1790 = vmatprep.subr.bf16.mxu0 0
    %1791 = vmatpush1.bf16.xpose.msra.mxu0 0
    %1792 = vmatprep.subr.bf16.mxu0 0
    %1793 = vmatpush1.bf16.xpose.msra.mxu0 0
    %1794 = vmatprep.subr.bf16.mxu0 0
    %1795 = vmatpush1.bf16.xpose.msra.mxu0 0
    %1796 = vmatprep.subr.bf16.mxu0 0
    %1797 = vmatpush1.bf16.xpose.msra.mxu0 %v1780
    %1798 = vmatprep.subr.bf16.mxu0 0
    %1799 = vmatpush2.bf16.xpose.msra.mxu0 0
    %1800 = vmatprep.subr.bf16.mxu0 0
    %1801 = vmatpush2.bf16.xpose.msra.mxu0 0
    %1802 = vmatprep.subr.bf16.mxu0 0
    %1803 = vmatpush2.bf16.xpose.msra.mxu0 0
    %1804 = vmatprep.subr.bf16.mxu0 0
    %1805 = vmatpush2.bf16.xpose.msra.mxu0 0
    %1806 = vmatprep.subr.bf16.mxu0 0
    %1807 = vmatpush2.bf16.xpose.msra.mxu0 0
    %1808 = vmatprep.subr.bf16.mxu0 0
    %1809 = vmatpush2.bf16.xpose.msra.mxu0 0
    %1810 = vmatprep.subr.bf16.mxu0 0
    %1811 = vmatpush2.bf16.xpose.msra.mxu0 0
    %1812 = vmatprep.subr.bf16.mxu0 0
    %1813 = vmatpush2.bf16.xpose.msra.mxu0 0
    %1814 = vmatprep.mubr.bf16.mxu0 0
    %1815 = vmatmul.mubr.bf16.gmra.mxu0 %v1777
    %v1816 = vpop.f32.mrf.mxu0
    %v1817 = vadd.f32 0.0, %v1816
    %v1818 = vpop.f32.mrf.mxu0
    %v1819 = vpop.f32.mrf.mxu0
    %v1820 = vpop.f32.mrf.mxu0
    %1821 = vdwg.mxu0
    %1823 = vrot.lane.b32.xlu0 %v1478, 96
    %v1824 = vpop.permute.xlu0 %1823
    %v1826 = vsel %vm176, %v1478, 0
    %v1829 = vsel %vm176, %v1824, 0
    %1831 = vmatprep.subr.bf16.mxu0 0
    %1832 = vmatpush1.bf16.xpose.msra.mxu0 0
    %1833 = vmatprep.subr.bf16.mxu0 0
    %1834 = vmatpush1.bf16.xpose.msra.mxu0 0
    %1835 = vmatprep.subr.bf16.mxu0 0
    %1836 = vmatpush1.bf16.xpose.msra.mxu0 0
    %1837 = vmatprep.subr.bf16.mxu0 0
    %1838 = vmatpush1.bf16.xpose.msra.mxu0 0
    %1839 = vmatprep.subr.bf16.mxu0 0
    %1840 = vmatpush1.bf16.xpose.msra.mxu0 0
    %1841 = vmatprep.subr.bf16.mxu0 0
    %1842 = vmatpush1.bf16.xpose.msra.mxu0 0
    %1843 = vmatprep.subr.bf16.mxu0 0
    %1844 = vmatpush1.bf16.xpose.msra.mxu0 0
    %1845 = vmatprep.subr.bf16.mxu0 0
    %1846 = vmatpush1.bf16.xpose.msra.mxu0 %v1829
    %1847 = vmatprep.subr.bf16.mxu0 0
    %1848 = vmatpush2.bf16.xpose.msra.mxu0 0
    %1849 = vmatprep.subr.bf16.mxu0 0
    %1850 = vmatpush2.bf16.xpose.msra.mxu0 0
    %1851 = vmatprep.subr.bf16.mxu0 0
    %1852 = vmatpush2.bf16.xpose.msra.mxu0 0
    %1853 = vmatprep.subr.bf16.mxu0 0
    %1854 = vmatpush2.bf16.xpose.msra.mxu0 0
    %1855 = vmatprep.subr.bf16.mxu0 0
    %1856 = vmatpush2.bf16.xpose.msra.mxu0 0
    %1857 = vmatprep.subr.bf16.mxu0 0
    %1858 = vmatpush2.bf16.xpose.msra.mxu0 0
    %1859 = vmatprep.subr.bf16.mxu0 0
    %1860 = vmatpush2.bf16.xpose.msra.mxu0 0
    %1861 = vmatprep.subr.bf16.mxu0 0
    %1862 = vmatpush2.bf16.xpose.msra.mxu0 0
    %1863 = vmatprep.mubr.bf16.mxu0 0
    %1864 = vmatmul.mubr.bf16.gmra.mxu0 %v1826
    %v1865 = vpop.f32.mrf.mxu0
    %v1866 = vadd.f32 0.0, %v1865
    %v1867 = vpop.f32.mrf.mxu0
    %v1868 = vpop.f32.mrf.mxu0
    %v1869 = vpop.f32.mrf.mxu0
    %1870 = vdwg.mxu0
    %v1871 = vsel %vm176, %v1523, -inf
    %1872 = vmax.xlane.f32.xlu0 %v1871
    %v1873 = vpop.xlane.xlu0 %1872
    %v1874 = vsel %vm176, %v1572, -inf
    %1875 = vmax.xlane.f32.xlu0 %v1874
    %v1876 = vpop.xlane.xlu0 %1875
    %v1877 = vsel %vm176, %v1621, -inf
    %1878 = vmax.xlane.f32.xlu0 %v1877
    %v1879 = vpop.xlane.xlu0 %1878
    %v1880 = vsel %vm176, %v1670, -inf
    %1881 = vmax.xlane.f32.xlu0 %v1880
    %v1882 = vpop.xlane.xlu0 %1881
    %v1883 = vsel %vm176, %v1719, -inf
    %1884 = vmax.xlane.f32.xlu0 %v1883
    %v1885 = vpop.xlane.xlu0 %1884
    %v1886 = vsel %vm176, %v1768, -inf
    %1887 = vmax.xlane.f32.xlu0 %v1886
    %v1888 = vpop.xlane.xlu0 %1887
    %v1889 = vsel %vm176, %v1817, -inf
    %1890 = vmax.xlane.f32.xlu0 %v1889
    %v1891 = vpop.xlane.xlu0 %1890
    %v1892 = vsel %vm176, %v1866, -inf
    %1893 = vmax.xlane.f32.xlu0 %v1892
    %v1894 = vpop.xlane.xlu0 %1893
    %v1895 = vsub.f32 %v1523, %v1873
    %v1896 = vsub.f32 %v1572, %v1876
    %v1897 = vsub.f32 %v1621, %v1879
    %v1898 = vsub.f32 %v1670, %v1882
    %v1899 = vsub.f32 %v1719, %v1885
    %v1900 = vsub.f32 %v1768, %v1888
    %v1901 = vsub.f32 %v1817, %v1891
    %v1902 = vsub.f32 %v1866, %v1894
    %v1903 = vmul.f32 %v1895, 1.442695
    %v1904 = vpow.pop %v1903
    %v1905 = vmul.f32 %v1896, 1.442695
    %v1906 = vpow.pop %v1905
    %v1907 = vmul.f32 %v1897, 1.442695
    %v1908 = vpow.pop %v1907
    %v1909 = vmul.f32 %v1898, 1.442695
    %v1910 = vpow.pop %v1909
    %v1911 = vmul.f32 %v1899, 1.442695
    %v1912 = vpow.pop %v1911
    %v1913 = vmul.f32 %v1900, 1.442695
    %v1914 = vpow.pop %v1913
    %v1915 = vmul.f32 %v1901, 1.442695
    %v1916 = vpow.pop %v1915
    %v1917 = vmul.f32 %v1902, 1.442695
    %v1918 = vpow.pop %v1917
    %v1919 = vsel %vm176, %v1904, 0.0
    %1920 = vadd.xlane.f32.xlu0 %v1919
    %v1921 = vpop.xlane.xlu0 %1920
    %v1922 = vsel %vm176, %v1906, 0.0
    %1923 = vadd.xlane.f32.xlu0 %v1922
    %v1924 = vpop.xlane.xlu0 %1923
    %v1925 = vsel %vm176, %v1908, 0.0
    %1926 = vadd.xlane.f32.xlu0 %v1925
    %v1927 = vpop.xlane.xlu0 %1926
    %v1928 = vsel %vm176, %v1910, 0.0
    %1929 = vadd.xlane.f32.xlu0 %v1928
    %v1930 = vpop.xlane.xlu0 %1929
    %v1931 = vsel %vm176, %v1912, 0.0
    %1932 = vadd.xlane.f32.xlu0 %v1931
    %v1933 = vpop.xlane.xlu0 %1932
    %v1934 = vsel %vm176, %v1914, 0.0
    %1935 = vadd.xlane.f32.xlu0 %v1934
    %v1936 = vpop.xlane.xlu0 %1935
    %v1937 = vsel %vm176, %v1916, 0.0
    %1938 = vadd.xlane.f32.xlu0 %v1937
    %v1939 = vpop.xlane.xlu0 %1938
    %v1940 = vsel %vm176, %v1918, 0.0
    %1941 = vadd.xlane.f32.xlu0 %v1940
    %v1942 = vpop.xlane.xlu0 %1941
    %v1943 = vrcp.pop %v1921
    %v1944 = vmul.f32 %v1904, %v1943
    %v1945 = vrcp.pop %v1924
    %v1946 = vmul.f32 %v1906, %v1945
    %v1947 = vrcp.pop %v1927
    %v1948 = vmul.f32 %v1908, %v1947
    %v1949 = vrcp.pop %v1930
    %v1950 = vmul.f32 %v1910, %v1949
    %v1951 = vrcp.pop %v1933
    %v1952 = vmul.f32 %v1912, %v1951
    %v1953 = vrcp.pop %v1936
    %v1954 = vmul.f32 %v1914, %v1953
    %v1955 = vrcp.pop %v1939
    %v1956 = vmul.f32 %v1916, %v1955
    %v1957 = vrcp.pop %v1942
    %v1958 = vmul.f32 %v1918, %v1957
    %v1959 = vpack.c.bf16 %v1944, %v1944
    %v1960 = vpack.c.bf16 %v1946, %v1946
    %v1961 = vpack.c.bf16 %v1948, %v1948
    %v1962 = vpack.c.bf16 %v1950, %v1950
    %v1963 = vpack.c.bf16 %v1952, %v1952
    %v1964 = vpack.c.bf16 %v1954, %v1954
    %v1965 = vpack.c.bf16 %v1956, %v1956
    %v1966 = vpack.c.bf16 %v1958, %v1958
    %s1967 = scalar_lea.vmem [#allocation9], 16
    %1968 = vst.msk [vmem:[%s1967] sm:$0xf] %vm662, %v1959
    %1969 = vst.msk [vmem:[%s1967 + $0x4] sm:$0xf] %vm662, %v1960
    %1970 = vst.msk [vmem:[%s1967 + $0x8] sm:$0xf] %vm662, %v1961
    %1971 = vst.msk [vmem:[%s1967 + $0xc] sm:$0xf] %vm662, %v1962
    %1972 = vst.msk [vmem:[%s1967 + $0x20] sm:$0xf] %vm662, %v1963
    %1973 = vst.msk [vmem:[%s1967 + $0x24] sm:$0xf] %vm662, %v1964
    %1974 = vst.msk [vmem:[%s1967 + $0x28] sm:$0xf] %vm662, %v1965
    %1975 = vst.msk [vmem:[%s1967 + $0x2c] sm:$0xf] %vm662, %v1966
    %1976 = vrot.lane.b32.xlu0 %v1471, 64
    %v1977 = vpop.permute.xlu0 %1976
    %v1979 = vsel %vm176, %v1959, 0
    %v1982 = vsel %vm676, %v1977, 0
    %1984 = vmatprep.subr.bf16.mxu0 0
    %1985 = vmatpush1.bf16.msra.mxu0 0
    %1986 = vmatprep.subr.bf16.mxu0 0
    %1987 = vmatpush1.bf16.msra.mxu0 0
    %1988 = vmatprep.subr.bf16.mxu0 0
    %1989 = vmatpush1.bf16.msra.mxu0 0
    %1990 = vmatprep.subr.bf16.mxu0 0
    %1991 = vmatpush1.bf16.msra.mxu0 0
    %1992 = vmatprep.subr.bf16.mxu0 0
    %1993 = vmatpush1.bf16.msra.mxu0 0
    %1994 = vmatprep.subr.bf16.mxu0 0
    %1995 = vmatpush1.bf16.msra.mxu0 0
    %1996 = vmatprep.subr.bf16.mxu0 0
    %1997 = vmatpush1.bf16.msra.mxu0 0
    %1998 = vmatprep.subr.bf16.mxu0 0
    %1999 = vmatpush1.bf16.msra.mxu0 %v1982
    %2000 = vmatprep.subr.bf16.mxu0 0
    %2001 = vmatpush2.bf16.msra.mxu0 0
    %2002 = vmatprep.subr.bf16.mxu0 0
    %2003 = vmatpush2.bf16.msra.mxu0 0
    %2004 = vmatprep.subr.bf16.mxu0 0
    %2005 = vmatpush2.bf16.msra.mxu0 0
    %2006 = vmatprep.subr.bf16.mxu0 0
    %2007 = vmatpush2.bf16.msra.mxu0 0
    %2008 = vmatprep.subr.bf16.mxu0 0
    %2009 = vmatpush2.bf16.msra.mxu0 0
    %2010 = vmatprep.subr.bf16.mxu0 0
    %2011 = vmatpush2.bf16.msra.mxu0 0
    %2012 = vmatprep.subr.bf16.mxu0 0
    %2013 = vmatpush2.bf16.msra.mxu0 0
    %2014 = vmatprep.subr.bf16.mxu0 0
    %2015 = vmatpush2.bf16.msra.mxu0 0
    %2016 = vmatprep.mubr.bf16.mxu0 0
    %2017 = vmatmul.mubr.bf16.gmra.mxu0 %v1979
    %v2018 = vpop.f32.mrf.mxu0
    %v2019 = vadd.f32 0.0, %v2018
    %v2020 = vpop.f32.mrf.mxu0
    %v2021 = vpop.f32.mrf.mxu0
    %v2022 = vpop.f32.mrf.mxu0
    %2023 = vdwg.mxu0
    %2024 = vrot.lane.b32.xlu0 %v1472, 64
    %v2025 = vpop.permute.xlu0 %2024
    %v2027 = vsel %vm176, %v1960, 0
    %v2030 = vsel %vm676, %v2025, 0
    %2032 = vmatprep.subr.bf16.mxu0 0
    %2033 = vmatpush1.bf16.msra.mxu0 0
    %2034 = vmatprep.subr.bf16.mxu0 0
    %2035 = vmatpush1.bf16.msra.mxu0 0
    %2036 = vmatprep.subr.bf16.mxu0 0
    %2037 = vmatpush1.bf16.msra.mxu0 0
    %2038 = vmatprep.subr.bf16.mxu0 0
    %2039 = vmatpush1.bf16.msra.mxu0 0
    %2040 = vmatprep.subr.bf16.mxu0 0
    %2041 = vmatpush1.bf16.msra.mxu0 0
    %2042 = vmatprep.subr.bf16.mxu0 0
    %2043 = vmatpush1.bf16.msra.mxu0 0
    %2044 = vmatprep.subr.bf16.mxu0 0
    %2045 = vmatpush1.bf16.msra.mxu0 0
    %2046 = vmatprep.subr.bf16.mxu0 0
    %2047 = vmatpush1.bf16.msra.mxu0 %v2030
    %2048 = vmatprep.subr.bf16.mxu0 0
    %2049 = vmatpush2.bf16.msra.mxu0 0
    %2050 = vmatprep.subr.bf16.mxu0 0
    %2051 = vmatpush2.bf16.msra.mxu0 0
    %2052 = vmatprep.subr.bf16.mxu0 0
    %2053 = vmatpush2.bf16.msra.mxu0 0
    %2054 = vmatprep.subr.bf16.mxu0 0
    %2055 = vmatpush2.bf16.msra.mxu0 0
    %2056 = vmatprep.subr.bf16.mxu0 0
    %2057 = vmatpush2.bf16.msra.mxu0 0
    %2058 = vmatprep.subr.bf16.mxu0 0
    %2059 = vmatpush2.bf16.msra.mxu0 0
    %2060 = vmatprep.subr.bf16.mxu0 0
    %2061 = vmatpush2.bf16.msra.mxu0 0
    %2062 = vmatprep.subr.bf16.mxu0 0
    %2063 = vmatpush2.bf16.msra.mxu0 0
    %2064 = vmatprep.mubr.bf16.mxu0 0
    %2065 = vmatmul.mubr.bf16.gmra.mxu0 %v2027
    %v2066 = vpop.f32.mrf.mxu0
    %v2067 = vadd.f32 0.0, %v2066
    %v2068 = vpop.f32.mrf.mxu0
    %v2069 = vpop.f32.mrf.mxu0
    %v2070 = vpop.f32.mrf.mxu0
    %2071 = vdwg.mxu0
    %2072 = vrot.lane.b32.xlu0 %v1473, 64
    %v2073 = vpop.permute.xlu0 %2072
    %v2075 = vsel %vm176, %v1961, 0
    %v2078 = vsel %vm676, %v2073, 0
    %2080 = vmatprep.subr.bf16.mxu0 0
    %2081 = vmatpush1.bf16.msra.mxu0 0
    %2082 = vmatprep.subr.bf16.mxu0 0
    %2083 = vmatpush1.bf16.msra.mxu0 0
    %2084 = vmatprep.subr.bf16.mxu0 0
    %2085 = vmatpush1.bf16.msra.mxu0 0
    %2086 = vmatprep.subr.bf16.mxu0 0
    %2087 = vmatpush1.bf16.msra.mxu0 0
    %2088 = vmatprep.subr.bf16.mxu0 0
    %2089 = vmatpush1.bf16.msra.mxu0 0
    %2090 = vmatprep.subr.bf16.mxu0 0
    %2091 = vmatpush1.bf16.msra.mxu0 0
    %2092 = vmatprep.subr.bf16.mxu0 0
    %2093 = vmatpush1.bf16.msra.mxu0 0
    %2094 = vmatprep.subr.bf16.mxu0 0
    %2095 = vmatpush1.bf16.msra.mxu0 %v2078
    %2096 = vmatprep.subr.bf16.mxu0 0
    %2097 = vmatpush2.bf16.msra.mxu0 0
    %2098 = vmatprep.subr.bf16.mxu0 0
    %2099 = vmatpush2.bf16.msra.mxu0 0
    %2100 = vmatprep.subr.bf16.mxu0 0
    %2101 = vmatpush2.bf16.msra.mxu0 0
    %2102 = vmatprep.subr.bf16.mxu0 0
    %2103 = vmatpush2.bf16.msra.mxu0 0
    %2104 = vmatprep.subr.bf16.mxu0 0
    %2105 = vmatpush2.bf16.msra.mxu0 0
    %2106 = vmatprep.subr.bf16.mxu0 0
    %2107 = vmatpush2.bf16.msra.mxu0 0
    %2108 = vmatprep.subr.bf16.mxu0 0
    %2109 = vmatpush2.bf16.msra.mxu0 0
    %2110 = vmatprep.subr.bf16.mxu0 0
    %2111 = vmatpush2.bf16.msra.mxu0 0
    %2112 = vmatprep.mubr.bf16.mxu0 0
    %2113 = vmatmul.mubr.bf16.gmra.mxu0 %v2075
    %v2114 = vpop.f32.mrf.mxu0
    %v2115 = vadd.f32 0.0, %v2114
    %v2116 = vpop.f32.mrf.mxu0
    %v2117 = vpop.f32.mrf.mxu0
    %v2118 = vpop.f32.mrf.mxu0
    %2119 = vdwg.mxu0
    %2120 = vrot.lane.b32.xlu0 %v1474, 64
    %v2121 = vpop.permute.xlu0 %2120
    %v2123 = vsel %vm176, %v1962, 0
    %v2126 = vsel %vm676, %v2121, 0
    %2128 = vmatprep.subr.bf16.mxu0 0
    %2129 = vmatpush1.bf16.msra.mxu0 0
    %2130 = vmatprep.subr.bf16.mxu0 0
    %2131 = vmatpush1.bf16.msra.mxu0 0
    %2132 = vmatprep.subr.bf16.mxu0 0
    %2133 = vmatpush1.bf16.msra.mxu0 0
    %2134 = vmatprep.subr.bf16.mxu0 0
    %2135 = vmatpush1.bf16.msra.mxu0 0
    %2136 = vmatprep.subr.bf16.mxu0 0
    %2137 = vmatpush1.bf16.msra.mxu0 0
    %2138 = vmatprep.subr.bf16.mxu0 0
    %2139 = vmatpush1.bf16.msra.mxu0 0
    %2140 = vmatprep.subr.bf16.mxu0 0
    %2141 = vmatpush1.bf16.msra.mxu0 0
    %2142 = vmatprep.subr.bf16.mxu0 0
    %2143 = vmatpush1.bf16.msra.mxu0 %v2126
    %2144 = vmatprep.subr.bf16.mxu0 0
    %2145 = vmatpush2.bf16.msra.mxu0 0
    %2146 = vmatprep.subr.bf16.mxu0 0
    %2147 = vmatpush2.bf16.msra.mxu0 0
    %2148 = vmatprep.subr.bf16.mxu0 0
    %2149 = vmatpush2.bf16.msra.mxu0 0
    %2150 = vmatprep.subr.bf16.mxu0 0
    %2151 = vmatpush2.bf16.msra.mxu0 0
    %2152 = vmatprep.subr.bf16.mxu0 0
    %2153 = vmatpush2.bf16.msra.mxu0 0
    %2154 = vmatprep.subr.bf16.mxu0 0
    %2155 = vmatpush2.bf16.msra.mxu0 0
    %2156 = vmatprep.subr.bf16.mxu0 0
    %2157 = vmatpush2.bf16.msra.mxu0 0
    %2158 = vmatprep.subr.bf16.mxu0 0
    %2159 = vmatpush2.bf16.msra.mxu0 0
    %2160 = vmatprep.mubr.bf16.mxu0 0
    %2161 = vmatmul.mubr.bf16.gmra.mxu0 %v2123
    %v2162 = vpop.f32.mrf.mxu0
    %v2163 = vadd.f32 0.0, %v2162
    %v2164 = vpop.f32.mrf.mxu0
    %v2165 = vpop.f32.mrf.mxu0
    %v2166 = vpop.f32.mrf.mxu0
    %2167 = vdwg.mxu0
    %2168 = vrot.lane.b32.xlu0 %v1475, 64
    %v2169 = vpop.permute.xlu0 %2168
    %v2171 = vsel %vm176, %v1963, 0
    %v2174 = vsel %vm676, %v2169, 0
    %2176 = vmatprep.subr.bf16.mxu0 0
    %2177 = vmatpush1.bf16.msra.mxu0 0
    %2178 = vmatprep.subr.bf16.mxu0 0
    %2179 = vmatpush1.bf16.msra.mxu0 0
    %2180 = vmatprep.subr.bf16.mxu0 0
    %2181 = vmatpush1.bf16.msra.mxu0 0
    %2182 = vmatprep.subr.bf16.mxu0 0
    %2183 = vmatpush1.bf16.msra.mxu0 0
    %2184 = vmatprep.subr.bf16.mxu0 0
    %2185 = vmatpush1.bf16.msra.mxu0 0
    %2186 = vmatprep.subr.bf16.mxu0 0
    %2187 = vmatpush1.bf16.msra.mxu0 0
    %2188 = vmatprep.subr.bf16.mxu0 0
    %2189 = vmatpush1.bf16.msra.mxu0 0
    %2190 = vmatprep.subr.bf16.mxu0 0
    %2191 = vmatpush1.bf16.msra.mxu0 %v2174
    %2192 = vmatprep.subr.bf16.mxu0 0
    %2193 = vmatpush2.bf16.msra.mxu0 0
    %2194 = vmatprep.subr.bf16.mxu0 0
    %2195 = vmatpush2.bf16.msra.mxu0 0
    %2196 = vmatprep.subr.bf16.mxu0 0
    %2197 = vmatpush2.bf16.msra.mxu0 0
    %2198 = vmatprep.subr.bf16.mxu0 0
    %2199 = vmatpush2.bf16.msra.mxu0 0
    %2200 = vmatprep.subr.bf16.mxu0 0
    %2201 = vmatpush2.bf16.msra.mxu0 0
    %2202 = vmatprep.subr.bf16.mxu0 0
    %2203 = vmatpush2.bf16.msra.mxu0 0
    %2204 = vmatprep.subr.bf16.mxu0 0
    %2205 = vmatpush2.bf16.msra.mxu0 0
    %2206 = vmatprep.subr.bf16.mxu0 0
    %2207 = vmatpush2.bf16.msra.mxu0 0
    %2208 = vmatprep.mubr.bf16.mxu0 0
    %2209 = vmatmul.mubr.bf16.gmra.mxu0 %v2171
    %v2210 = vpop.f32.mrf.mxu0
    %v2211 = vadd.f32 0.0, %v2210
    %v2212 = vpop.f32.mrf.mxu0
    %v2213 = vpop.f32.mrf.mxu0
    %v2214 = vpop.f32.mrf.mxu0
    %2215 = vdwg.mxu0
    %2216 = vrot.lane.b32.xlu0 %v1476, 64
    %v2217 = vpop.permute.xlu0 %2216
    %v2219 = vsel %vm176, %v1964, 0
    %v2222 = vsel %vm676, %v2217, 0
    %2224 = vmatprep.subr.bf16.mxu0 0
    %2225 = vmatpush1.bf16.msra.mxu0 0
    %2226 = vmatprep.subr.bf16.mxu0 0
    %2227 = vmatpush1.bf16.msra.mxu0 0
    %2228 = vmatprep.subr.bf16.mxu0 0
    %2229 = vmatpush1.bf16.msra.mxu0 0
    %2230 = vmatprep.subr.bf16.mxu0 0
    %2231 = vmatpush1.bf16.msra.mxu0 0
    %2232 = vmatprep.subr.bf16.mxu0 0
    %2233 = vmatpush1.bf16.msra.mxu0 0
    %2234 = vmatprep.subr.bf16.mxu0 0
    %2235 = vmatpush1.bf16.msra.mxu0 0
    %2236 = vmatprep.subr.bf16.mxu0 0
    %2237 = vmatpush1.bf16.msra.mxu0 0
    %2238 = vmatprep.subr.bf16.mxu0 0
    %2239 = vmatpush1.bf16.msra.mxu0 %v2222
    %2240 = vmatprep.subr.bf16.mxu0 0
    %2241 = vmatpush2.bf16.msra.mxu0 0
    %2242 = vmatprep.subr.bf16.mxu0 0
    %2243 = vmatpush2.bf16.msra.mxu0 0
    %2244 = vmatprep.subr.bf16.mxu0 0
    %2245 = vmatpush2.bf16.msra.mxu0 0
    %2246 = vmatprep.subr.bf16.mxu0 0
    %2247 = vmatpush2.bf16.msra.mxu0 0
    %2248 = vmatprep.subr.bf16.mxu0 0
    %2249 = vmatpush2.bf16.msra.mxu0 0
    %2250 = vmatprep.subr.bf16.mxu0 0
    %2251 = vmatpush2.bf16.msra.mxu0 0
    %2252 = vmatprep.subr.bf16.mxu0 0
    %2253 = vmatpush2.bf16.msra.mxu0 0
    %2254 = vmatprep.subr.bf16.mxu0 0
    %2255 = vmatpush2.bf16.msra.mxu0 0
    %2256 = vmatprep.mubr.bf16.mxu0 0
    %2257 = vmatmul.mubr.bf16.gmra.mxu0 %v2219
    %v2258 = vpop.f32.mrf.mxu0
    %v2259 = vadd.f32 0.0, %v2258
    %v2260 = vpop.f32.mrf.mxu0
    %v2261 = vpop.f32.mrf.mxu0
    %v2262 = vpop.f32.mrf.mxu0
    %2263 = vdwg.mxu0
    %2264 = vrot.lane.b32.xlu0 %v1477, 64
    %v2265 = vpop.permute.xlu0 %2264
    %v2267 = vsel %vm176, %v1965, 0
    %v2270 = vsel %vm676, %v2265, 0
    %2272 = vmatprep.subr.bf16.mxu0 0
    %2273 = vmatpush1.bf16.msra.mxu0 0
    %2274 = vmatprep.subr.bf16.mxu0 0
    %2275 = vmatpush1.bf16.msra.mxu0 0
    %2276 = vmatprep.subr.bf16.mxu0 0
    %2277 = vmatpush1.bf16.msra.mxu0 0
    %2278 = vmatprep.subr.bf16.mxu0 0
    %2279 = vmatpush1.bf16.msra.mxu0 0
    %2280 = vmatprep.subr.bf16.mxu0 0
    %2281 = vmatpush1.bf16.msra.mxu0 0
    %2282 = vmatprep.subr.bf16.mxu0 0
    %2283 = vmatpush1.bf16.msra.mxu0 0
    %2284 = vmatprep.subr.bf16.mxu0 0
    %2285 = vmatpush1.bf16.msra.mxu0 0
    %2286 = vmatprep.subr.bf16.mxu0 0
    %2287 = vmatpush1.bf16.msra.mxu0 %v2270
    %2288 = vmatprep.subr.bf16.mxu0 0
    %2289 = vmatpush2.bf16.msra.mxu0 0
    %2290 = vmatprep.subr.bf16.mxu0 0
    %2291 = vmatpush2.bf16.msra.mxu0 0
    %2292 = vmatprep.subr.bf16.mxu0 0
    %2293 = vmatpush2.bf16.msra.mxu0 0
    %2294 = vmatprep.subr.bf16.mxu0 0
    %2295 = vmatpush2.bf16.msra.mxu0 0
    %2296 = vmatprep.subr.bf16.mxu0 0
    %2297 = vmatpush2.bf16.msra.mxu0 0
    %2298 = vmatprep.subr.bf16.mxu0 0
    %2299 = vmatpush2.bf16.msra.mxu0 0
    %2300 = vmatprep.subr.bf16.mxu0 0
    %2301 = vmatpush2.bf16.msra.mxu0 0
    %2302 = vmatprep.subr.bf16.mxu0 0
    %2303 = vmatpush2.bf16.msra.mxu0 0
    %2304 = vmatprep.mubr.bf16.mxu0 0
    %2305 = vmatmul.mubr.bf16.gmra.mxu0 %v2267
    %v2306 = vpop.f32.mrf.mxu0
    %v2307 = vadd.f32 0.0, %v2306
    %v2308 = vpop.f32.mrf.mxu0
    %v2309 = vpop.f32.mrf.mxu0
    %v2310 = vpop.f32.mrf.mxu0
    %2311 = vdwg.mxu0
    %2312 = vrot.lane.b32.xlu0 %v1478, 64
    %v2313 = vpop.permute.xlu0 %2312
    %v2315 = vsel %vm176, %v1966, 0
    %v2318 = vsel %vm676, %v2313, 0
    %2320 = vmatprep.subr.bf16.mxu0 0
    %2321 = vmatpush1.bf16.msra.mxu0 0
    %2322 = vmatprep.subr.bf16.mxu0 0
    %2323 = vmatpush1.bf16.msra.mxu0 0
    %2324 = vmatprep.subr.bf16.mxu0 0
    %2325 = vmatpush1.bf16.msra.mxu0 0
    %2326 = vmatprep.subr.bf16.mxu0 0
    %2327 = vmatpush1.bf16.msra.mxu0 0
    %2328 = vmatprep.subr.bf16.mxu0 0
    %2329 = vmatpush1.bf16.msra.mxu0 0
    %2330 = vmatprep.subr.bf16.mxu0 0
    %2331 = vmatpush1.bf16.msra.mxu0 0
    %2332 = vmatprep.subr.bf16.mxu0 0
    %2333 = vmatpush1.bf16.msra.mxu0 0
    %2334 = vmatprep.subr.bf16.mxu0 0
    %2335 = vmatpush1.bf16.msra.mxu0 %v2318
    %2336 = vmatprep.subr.bf16.mxu0 0
    %2337 = vmatpush2.bf16.msra.mxu0 0
    %2338 = vmatprep.subr.bf16.mxu0 0
    %2339 = vmatpush2.bf16.msra.mxu0 0
    %2340 = vmatprep.subr.bf16.mxu0 0
    %2341 = vmatpush2.bf16.msra.mxu0 0
    %2342 = vmatprep.subr.bf16.mxu0 0
    %2343 = vmatpush2.bf16.msra.mxu0 0
    %2344 = vmatprep.subr.bf16.mxu0 0
    %2345 = vmatpush2.bf16.msra.mxu0 0
    %2346 = vmatprep.subr.bf16.mxu0 0
    %2347 = vmatpush2.bf16.msra.mxu0 0
    %2348 = vmatprep.subr.bf16.mxu0 0
    %2349 = vmatpush2.bf16.msra.mxu0 0
    %2350 = vmatprep.subr.bf16.mxu0 0
    %2351 = vmatpush2.bf16.msra.mxu0 0
    %2352 = vmatprep.mubr.bf16.mxu0 0
    %2353 = vmatmul.mubr.bf16.gmra.mxu0 %v2315
    %v2354 = vpop.f32.mrf.mxu0
    %v2355 = vadd.f32 0.0, %v2354
    %v2356 = vpop.f32.mrf.mxu0
    %v2357 = vpop.f32.mrf.mxu0
    %v2358 = vpop.f32.mrf.mxu0
    %2359 = vdwg.mxu0
    %2362 = vrot.lane.b32.xlu0 %v2067, 8
    %v2363 = vpop.permute.xlu0 %2362
    %2364 = vrot.lane.b32.xlu0 %v2259, 8
    %v2365 = vpop.permute.xlu0 %2364
    %2370 = vrot.lane.b32.xlu0 %v2115, 16
    %v2371 = vpop.permute.xlu0 %2370
    %2372 = vrot.lane.b32.xlu0 %v2307, 16
    %v2373 = vpop.permute.xlu0 %2372
    %2378 = vrot.lane.b32.xlu0 %v2163, 24
    %v2379 = vpop.permute.xlu0 %2378
    %2380 = vrot.lane.b32.xlu0 %v2355, 24
    %v2381 = vpop.permute.xlu0 %2380
    %v2384 = vsel %vm176, %v2019, %v2363
    %v2385 = vsel %vm176, %v2211, %v2365
    %v2386 = vsel %vm1082, %v2384, %v2371
    %v2387 = vsel %vm1082, %v2385, %v2373
    %v2388 = vsel %vm1085, %v2386, %v2379
    %v2389 = vsel %vm1085, %v2387, %v2381
    %v2390 = vpack.c.bf16 %v2389, %v2388
    %s2391 = scalar_lea.vmem %s3, 16
    %v2392 = vld [vmem:[%s2391] sm:$0xf]
    %v2393 = vld [vmem:[%s2391 + $0x4] sm:$0xf]
    %v2394 = vld [vmem:[%s2391 + $0x8] sm:$0xf]
    %v2395 = vld [vmem:[%s2391 + $0xc] sm:$0xf]
    %v2396 = vlaneseq
    %v2397 = vshrl.u32 %v2396, 7
    %v2398 = vsub.s32 1, %v2397
    %v2399 = vrot.slane %v1384, %v2398
    %v2404 = vunpack.c.l.b16 %v2392
    %v2405 = vunpack.c.l.b16 %v2393
    %v2406 = vunpack.c.l.b16 %v2394
    %v2407 = vunpack.c.l.b16 %v2395
    %v2408 = vpack.c.b16 %v2405, %v2404
    %v2409 = vpack.c.b16 %v2407, %v2406
    %v2413 = vsel %vm100, %v2390, 0
    %2415 = vmatprep.subr.bf16.mxu0 0
    %2416 = vmatpush1.bf16.msra.mxu0 0
    %2417 = vmatprep.subr.bf16.mxu0 0
    %2418 = vmatpush1.bf16.msra.mxu0 0
    %2419 = vmatprep.subr.bf16.mxu0 0
    %2420 = vmatpush1.bf16.msra.mxu0 0
    %2421 = vmatprep.subr.bf16.mxu0 0
    %2422 = vmatpush1.bf16.msra.mxu0 0
    %2423 = vmatprep.subr.bf16.mxu0 0
    %2424 = vmatpush1.bf16.msra.mxu0 0
    %2425 = vmatprep.subr.bf16.mxu0 0
    %2426 = vmatpush1.bf16.msra.mxu0 0
    %2427 = vmatprep.subr.bf16.mxu0 0
    %2428 = vmatpush1.bf16.msra.mxu0 %v2409
    %2429 = vmatprep.subr.bf16.mxu0 0
    %2430 = vmatpush1.bf16.msra.mxu0 %v2408
    %2431 = vmatprep.subr.bf16.mxu0 0
    %2432 = vmatpush2.bf16.msra.mxu0 0
    %2433 = vmatprep.subr.bf16.mxu0 0
    %2434 = vmatpush2.bf16.msra.mxu0 0
    %2435 = vmatprep.subr.bf16.mxu0 0
    %2436 = vmatpush2.bf16.msra.mxu0 0
    %2437 = vmatprep.subr.bf16.mxu0 0
    %2438 = vmatpush2.bf16.msra.mxu0 0
    %2439 = vmatprep.subr.bf16.mxu0 0
    %2440 = vmatpush2.bf16.msra.mxu0 0
    %2441 = vmatprep.subr.bf16.mxu0 0
    %2442 = vmatpush2.bf16.msra.mxu0 0
    %2443 = vmatprep.subr.bf16.mxu0 0
    %2444 = vmatpush2.bf16.msra.mxu0 0
    %2445 = vmatprep.subr.bf16.mxu0 0
    %2446 = vmatpush2.bf16.msra.mxu0 0
    %2447 = vmatprep.mubr.bf16.mxu0 0
    %2448 = vmatmul.mubr.bf16.gmra.mxu0 %v2413
    %v2449 = vpop.f32.mrf.mxu0
    %v2450 = vadd.f32 %v2399, %v2449
    %v2451 = vpop.f32.mrf.mxu0
    %v2452 = vpop.f32.mrf.mxu0
    %v2453 = vadd.f32 %v2399, %v2452
    %v2454 = vpop.f32.mrf.mxu0
    %2455 = vdwg.mxu0
    %v2456 = vadd.f32 %v2450, %v1381
    %v2457 = vadd.f32 %v2453, %v1382
    %v2458 = vsel %vm100, %v2456, 0.0
    %2459 = vadd.xlane.f32.xlu0 %v2458
    %v2460 = vpop.xlane.xlu0 %2459
    %v2461 = vsel %vm100, %v2457, 0.0
    %2462 = vadd.xlane.f32.xlu0 %v2461
    %v2463 = vpop.xlane.xlu0 %2462
    %v2464 = vmul.f32 %v2460, %v1161
    %v2465 = vmul.f32 %v2463, %v1161
    %v2466 = vsub.f32 %v2456, %v2464
    %v2467 = vsub.f32 %v2457, %v2465
    %v2468 = vmul.f32 %v2466, %v2466
    %v2469 = vmul.f32 %v2467, %v2467
    %v2470 = vsel %vm100, %v2468, 0.0
    %2471 = vadd.xlane.f32.xlu0 %v2470
    %v2472 = vpop.xlane.xlu0 %2471
    %v2473 = vsel %vm100, %v2469, 0.0
    %2474 = vadd.xlane.f32.xlu0 %v2473
    %v2475 = vpop.xlane.xlu0 %2474
    %v2476 = vmul.f32 %v2472, %v1161
    %v2477 = vmul.f32 %v2475, %v1161
    %v2478 = vadd.f32 %v2476, 1e-05
    %v2479 = vadd.f32 %v2477, 1e-05
    %v2480 = vrsqrt.pop %v2478
    %v2481 = vrsqrt.pop %v2479
    %v2482 = vmul.f32 %v2466, %v2480
    %v2483 = vmul.f32 %v2467, %v2481
    %v2484 = vlaneseq
    %v2485 = vshrl.u32 %v2484, 7
    %v2486 = vsub.s32 2, %v2485
    %v2487 = vrot.slane %v1384, %v2486
    %v2488 = vmul.f32 %v2482, %v2487
    %v2489 = vmul.f32 %v2483, %v2487
    %v2490 = vlaneseq
    %v2491 = vshrl.u32 %v2490, 7
    %v2492 = vsub.s32 3, %v2491
    %v2493 = vrot.slane %v1384, %v2492
    %v2494 = vadd.f32 %v2488, %v2493
    %v2495 = vadd.f32 %v2489, %v2493
    %v2496 = vpack.c.bf16 %v2495, %v2494
    %s2497 = scalar_lea.vmem %s4, 16
    %v2498 = vld [vmem:[%s2497] sm:$0xf]
    %v2499 = vld [vmem:[%s2497 + $0x4] sm:$0xf]
    %v2500 = vld [vmem:[%s2497 + $0x8] sm:$0xf]
    %v2501 = vld [vmem:[%s2497 + $0xc] sm:$0xf]
    %v2502 = vlaneseq
    %v2503 = vshrl.u32 %v2502, 7
    %v2504 = vsub.s32 4, %v2503
    %v2505 = vrot.slane %v1384, %v2504
    %v2510 = vunpack.c.l.b16 %v2498
    %v2511 = vunpack.c.l.b16 %v2499
    %v2512 = vunpack.c.l.b16 %v2500
    %v2513 = vunpack.c.l.b16 %v2501
    %v2514 = vpack.c.b16 %v2511, %v2510
    %v2515 = vpack.c.b16 %v2513, %v2512
    %v2519 = vsel %vm100, %v2496, 0
    %2521 = vmatprep.subr.bf16.mxu0 0
    %2522 = vmatpush1.bf16.msra.mxu0 0
    %2523 = vmatprep.subr.bf16.mxu0 0
    %2524 = vmatpush1.bf16.msra.mxu0 0
    %2525 = vmatprep.subr.bf16.mxu0 0
    %2526 = vmatpush1.bf16.msra.mxu0 0
    %2527 = vmatprep.subr.bf16.mxu0 0
    %2528 = vmatpush1.bf16.msra.mxu0 0
    %2529 = vmatprep.subr.bf16.mxu0 0
    %2530 = vmatpush1.bf16.msra.mxu0 0
    %2531 = vmatprep.subr.bf16.mxu0 0
    %2532 = vmatpush1.bf16.msra.mxu0 0
    %2533 = vmatprep.subr.bf16.mxu0 0
    %2534 = vmatpush1.bf16.msra.mxu0 %v2515
    %2535 = vmatprep.subr.bf16.mxu0 0
    %2536 = vmatpush1.bf16.msra.mxu0 %v2514
    %2537 = vmatprep.subr.bf16.mxu0 0
    %2538 = vmatpush2.bf16.msra.mxu0 0
    %2539 = vmatprep.subr.bf16.mxu0 0
    %2540 = vmatpush2.bf16.msra.mxu0 0
    %2541 = vmatprep.subr.bf16.mxu0 0
    %2542 = vmatpush2.bf16.msra.mxu0 0
    %2543 = vmatprep.subr.bf16.mxu0 0
    %2544 = vmatpush2.bf16.msra.mxu0 0
    %2545 = vmatprep.subr.bf16.mxu0 0
    %2546 = vmatpush2.bf16.msra.mxu0 0
    %2547 = vmatprep.subr.bf16.mxu0 0
    %2548 = vmatpush2.bf16.msra.mxu0 0
    %2549 = vmatprep.subr.bf16.mxu0 0
    %2550 = vmatpush2.bf16.msra.mxu0 0
    %2551 = vmatprep.subr.bf16.mxu0 0
    %2552 = vmatpush2.bf16.msra.mxu0 0
    %2553 = vmatprep.mubr.bf16.mxu0 0
    %2554 = vmatmul.mubr.bf16.gmra.mxu0 %v2519
    %v2555 = vpop.f32.mrf.mxu0
    %v2556 = vadd.f32 %v2505, %v2555
    %v2557 = vpop.f32.mrf.mxu0
    %v2558 = vpop.f32.mrf.mxu0
    %v2559 = vadd.f32 %v2505, %v2558
    %v2560 = vpop.f32.mrf.mxu0
    %2561 = vdwg.mxu0
    %v2562 = vmax.f32 %v2556, 0.0
    %v2563 = vmax.f32 %v2559, 0.0
    %v2564 = vpack.c.bf16 %v2563, %v2562
    %s2565 = scalar_lea.vmem %s5, 32
    %v2566 = vld [vmem:[%s2565] sm:$0xf]
    %v2567 = vld [vmem:[%s2565 + $0x4] sm:$0xf]
    %v2568 = vld [vmem:[%s2565 + $0x8] sm:$0xf]
    %v2569 = vld [vmem:[%s2565 + $0xc] sm:$0xf]
    %v2570 = vld [vmem:[%s2565 + $0x10] sm:$0xf]
    %v2571 = vld [vmem:[%s2565 + $0x14] sm:$0xf]
    %v2572 = vld [vmem:[%s2565 + $0x18] sm:$0xf]
    %v2573 = vld [vmem:[%s2565 + $0x1c] sm:$0xf]
    %v2574 = vlaneseq
    %v2575 = vshrl.u32 %v2574, 7
    %v2576 = vsub.s32 5, %v2575
    %v2577 = vrot.slane %v1384, %v2576
    %v2586 = vunpack.c.l.b16 %v2566
    %v2587 = vunpack.c.l.b16 %v2567
    %v2588 = vunpack.c.l.b16 %v2568
    %v2589 = vunpack.c.l.b16 %v2569
    %v2590 = vunpack.c.l.b16 %v2570
    %v2591 = vunpack.c.l.b16 %v2571
    %v2592 = vunpack.c.l.b16 %v2572
    %v2593 = vunpack.c.l.b16 %v2573
    %v2594 = vpack.c.b16 %v2587, %v2586
    %v2595 = vpack.c.b16 %v2589, %v2588
    %v2596 = vpack.c.b16 %v2591, %v2590
    %v2597 = vpack.c.b16 %v2593, %v2592
    %v2603 = vsel %vm1298, %v2564, 0
    %2605 = vmatprep.subr.bf16.mxu0 0
    %2606 = vmatpush1.bf16.msra.mxu0 0
    %2607 = vmatprep.subr.bf16.mxu0 0
    %2608 = vmatpush1.bf16.msra.mxu0 0
    %2609 = vmatprep.subr.bf16.mxu0 0
    %2610 = vmatpush1.bf16.msra.mxu0 0
    %2611 = vmatprep.subr.bf16.mxu0 0
    %2612 = vmatpush1.bf16.msra.mxu0 0
    %2613 = vmatprep.subr.bf16.mxu0 0
    %2614 = vmatpush1.bf16.msra.mxu0 %v2597
    %2615 = vmatprep.subr.bf16.mxu0 0
    %2616 = vmatpush1.bf16.msra.mxu0 %v2596
    %2617 = vmatprep.subr.bf16.mxu0 0
    %2618 = vmatpush1.bf16.msra.mxu0 %v2595
    %2619 = vmatprep.subr.bf16.mxu0 0
    %2620 = vmatpush1.bf16.msra.mxu0 %v2594
    %2621 = vmatprep.subr.bf16.mxu0 0
    %2622 = vmatpush2.bf16.msra.mxu0 0
    %2623 = vmatprep.subr.bf16.mxu0 0
    %2624 = vmatpush2.bf16.msra.mxu0 0
    %2625 = vmatprep.subr.bf16.mxu0 0
    %2626 = vmatpush2.bf16.msra.mxu0 0
    %2627 = vmatprep.subr.bf16.mxu0 0
    %2628 = vmatpush2.bf16.msra.mxu0 0
    %2629 = vmatprep.subr.bf16.mxu0 0
    %2630 = vmatpush2.bf16.msra.mxu0 0
    %2631 = vmatprep.subr.bf16.mxu0 0
    %2632 = vmatpush2.bf16.msra.mxu0 0
    %2633 = vmatprep.subr.bf16.mxu0 0
    %2634 = vmatpush2.bf16.msra.mxu0 0
    %2635 = vmatprep.subr.bf16.mxu0 0
    %2636 = vmatpush2.bf16.msra.mxu0 0
    %2637 = vmatprep.mubr.bf16.mxu0 0
    %2638 = vmatmul.mubr.bf16.gmra.mxu0 %v2603
    %v2639 = vpop.f32.mrf.mxu0
    %v2640 = vadd.f32 %v2577, %v2639
    %v2641 = vpop.f32.mrf.mxu0
    %v2642 = vpop.f32.mrf.mxu0
    %v2643 = vadd.f32 %v2577, %v2642
    %v2644 = vpop.f32.mrf.mxu0
    %2645 = vdwg.mxu0
    %v2646 = vadd.f32 %v2640, %v2494
    %v2647 = vadd.f32 %v2643, %v2495
    %v2648 = vsel %vm100, %v2646, 0.0
    %2649 = vadd.xlane.f32.xlu0 %v2648
    %v2650 = vpop.xlane.xlu0 %2649
    %v2651 = vsel %vm100, %v2647, 0.0
    %2652 = vadd.xlane.f32.xlu0 %v2651
    %v2653 = vpop.xlane.xlu0 %2652
    %v2654 = vmul.f32 %v2650, %v1161
    %v2655 = vmul.f32 %v2653, %v1161
    %v2656 = vsub.f32 %v2646, %v2654
    %v2657 = vsub.f32 %v2647, %v2655
    %v2658 = vmul.f32 %v2656, %v2656
    %v2659 = vmul.f32 %v2657, %v2657
    %v2660 = vsel %vm100, %v2658, 0.0
    %2661 = vadd.xlane.f32.xlu0 %v2660
    %v2662 = vpop.xlane.xlu0 %2661
    %v2663 = vsel %vm100, %v2659, 0.0
    %2664 = vadd.xlane.f32.xlu0 %v2663
    %v2665 = vpop.xlane.xlu0 %2664
    %v2666 = vmul.f32 %v2662, %v1161
    %v2667 = vmul.f32 %v2665, %v1161
    %v2668 = vadd.f32 %v2666, 1e-05
    %v2669 = vadd.f32 %v2667, 1e-05
    %v2670 = vrsqrt.pop %v2668
    %v2671 = vrsqrt.pop %v2669
    %v2672 = vmul.f32 %v2656, %v2670
    %v2673 = vmul.f32 %v2657, %v2671
    %v2674 = vlaneseq
    %v2675 = vshrl.u32 %v2674, 7
    %v2676 = vsub.s32 6, %v2675
    %v2677 = vrot.slane %v1384, %v2676
    %v2678 = vmul.f32 %v2672, %v2677
    %v2679 = vmul.f32 %v2673, %v2677
    %v2680 = vlaneseq
    %v2681 = vshrl.u32 %v2680, 7
    %v2682 = vsub.s32 7, %v2681
    %v2683 = vrot.slane %v1384, %v2682
    %v2684 = vadd.f32 %v2678, %v2683
    %v2685 = vadd.f32 %v2679, %v2683
    %2686 = vst.msk [vmem:[#allocation8] sm:$0xff] %vm100, %v2684
    %2687 = vst.msk [vmem:[#allocation8 + $0x8] sm:$0xff] %vm100, %v2685
    // Predicated region
    $region42: #{tpu_custom_call.1} parent=1 // pred_check
      _
    $region43: #{tpu_custom_call.1} parent=1 // pred_check_branch
      %2689 = sbr.rel (0) target = $region45
    $region44: #{tpu_custom_call.1} parent=1 // pred_region
      %s2691 = ssub.s32 256, 256
      %2692 = vsyncadd [#allocation4], %s2691
      %s2693 = sshll.u32 [#allocation8], 4
      %s2694 = int_to_ptr.vmem [resolvable:$true] %s2693
      %2699 = dma.vmem_to_hbm [thread:$0]  %s2694, 256, %s7, [#allocation4], 128, 128, 8
    $region45: #{tpu_custom_call.1} parent=1 // pred_fallthru
      _
    // Predicated region
    $region46: #{tpu_custom_call.1} parent=1 // pred_check
      _
    $region47: #{tpu_custom_call.1} parent=1 // pred_check_branch
      %2701 = sbr.rel (0) target = $region49
    $region48: #{tpu_custom_call.1} parent=1 // pred_region
      %s2703 = ssub.s32 1024, 1024
      %2704 = vsyncadd [#allocation10], %s2703
      %s2705 = sshll.u32 [#allocation9], 4
      %s2706 = int_to_ptr.vmem [resolvable:$true] %s2705
      %2711 = dma.vmem_to_hbm [thread:$0]  %s2706, 1024, %s8, [#allocation10], 64, 64, 4
    $region49: #{tpu_custom_call.1} parent=1 // pred_fallthru
      _
    // Predicated region
    $region50: #{tpu_custom_call.1} parent=1 // pred_check
      _
    $region51: #{tpu_custom_call.1} parent=1 // pred_check_branch
      %2713 = sbr.rel (0) target = $region53
    $region52: #{tpu_custom_call.1} parent=1 // pred_region
      %2714 = dma.done [#allocation4], 256
    $region53: #{tpu_custom_call.1} parent=1 // pred_fallthru
      _
    // Predicated region
    $region54: #{tpu_custom_call.1} parent=1 // pred_check
      _
    $region55: #{tpu_custom_call.1} parent=1 // pred_check_branch
      %2716 = sbr.rel (0) target = $region57
    $region56: #{tpu_custom_call.1} parent=1 // pred_region
      %2717 = dma.done [#allocation10], 1024
    $region57: #{tpu_custom_call.1} parent=1 // pred_fallthru
      _
    %2718 = vsyncpa [#allocation3], 1
    %2719 = vsyncpa [#allocation6], 1
    %2720 = vsyncpa [#allocation4], 1
    %2721 = vsyncpa [#allocation10], 1

</llo_original>
